<compile_context>
chip_gen: v6e
topology: v6e:2x2x1
jax: 0.10.0
libtpu: 0.0.40
codegen_flags: <defaults>
</compile_context>

<pallas_src>
import jax
import jax.numpy as jnp
from jax.experimental import pallas as pl
from jax.experimental.pallas import tpu as pltpu

SUB = 8      # sublane quantum
LANE = 128   # lane quantum


# ------------------------------ in-kernel helpers ------------------------------ #

def _pad_hw1(x):
    """Zero-pad 1 pixel on each side of the (H, W) dims of an (H, W, C) VMEM value."""
    h, w, c = x.shape
    zr = jnp.zeros((1, w, c), x.dtype)
    x = jnp.concatenate([zr, x, zr], axis=0)          # (h+2, w, c)
    zc = jnp.zeros((h + 2, 1, c), x.dtype)
    return jnp.concatenate([zc, x, zc], axis=1)       # (h+2, w+2, c)


def _im2col_3x3(xp, h, w, c):
    """xp: (h+2, w+2, c) zero-padded -> (h*w, 9*c) patch slab (dy-major, dx, c-minor)."""
    cols = []
    for dy in range(3):
        for dx in range(3):
            cols.append(xp[dy:dy + h, dx:dx + w, :].reshape(h * w, c))
    return jnp.concatenate(cols, axis=-1)


# ---------------------------------- kernel ------------------------------------- #

def _fused_forward_kernel(
        x_ref,                                   # (1, H, W, Cin_pad)   bf16
        w_ppm_ref, s_ppm_ref, b_ppm_ref,         # (9*Cin_pad, C) bf16, (1, C) f32 x2
        w_det_ref, s_det_ref, b_det_ref,         # (9*Cin_pad, C) bf16, (1, C) f32 x2
        w_aux_ref, b_aux_ref,                    # (C, NC_pad) bf16,    (1, NC_pad) f32
        s_bn1_ref, b_bn1_ref,                    # (1, C) f32
        w_c1_ref, s_bn2_ref, b_bn2_ref,          # (9*C, Ch) bf16,      (1, Ch) f32 x2
        w_c2_ref, b_c2_ref,                      # (Ch, NC_pad) bf16,   (1, NC_pad) f32
        cls_ref, aux_ref):                       # (1, H, W, NC_pad) f32 outputs
    _, H, W, NCp = cls_ref.shape
    Cin = x_ref.shape[-1]
    C = s_ppm_ref.shape[-1]
    mxu_dt = x_ref.dtype                         # bf16 MXU operand dtype

    # ---- backbone stand-in: two 3x3 conv stems as single im2col MXU matmuls ----
    xp = _pad_hw1(x_ref[0])                                      # halo built in VMEM
    patches = _im2col_3x3(xp, H, W, Cin)                         # (H*W, 9*Cin) bf16
    ppm = jnp.dot(patches, w_ppm_ref[...], preferred_element_type=jnp.float32)
    ppm = jnp.maximum(ppm * s_ppm_ref[...] + b_ppm_ref[...], 0.0)     # (H*W, C) f32
    det = jnp.dot(patches, w_det_ref[...], preferred_element_type=jnp.float32)
    det = jnp.maximum(det * s_det_ref[...] + b_det_ref[...], 0.0)

    # ---- aux seg-head (1x1 conv + bias) emitted as an epilogue of the ppm branch ----
    aux = jnp.dot(ppm.astype(mxu_dt), w_aux_ref[...],
                  preferred_element_type=jnp.float32) + b_aux_ref[...]
    aux_ref[0] = aux.reshape(H, W, NCp).astype(aux_ref.dtype)

    # ---- classifier(ppm + detail5): relu(bn1(.)) -> 3x3 conv+bn2+relu -> 1x1 conv+bias ----
    h1 = jnp.maximum((ppm + det) * s_bn1_ref[...] + b_bn1_ref[...], 0.0)
    h1p = _pad_hw1(h1.reshape(H, W, C).astype(mxu_dt))
    p1 = _im2col_3x3(h1p, H, W, C)                               # (H*W, 9*C) bf16
    h2 = jnp.dot(p1, w_c1_ref[...], preferred_element_type=jnp.float32)
    h2 = jnp.maximum(h2 * s_bn2_ref[...] + b_bn2_ref[...], 0.0)
    cls = jnp.dot(h2.astype(mxu_dt), w_c2_ref[...],
                  preferred_element_type=jnp.float32) + b_c2_ref[...]
    cls_ref[0] = cls.reshape(H, W, NCp).astype(cls_ref.dtype)


# ------------------------------- parameter fold -------------------------------- #

def _round_up(v, m):
    return (v + m - 1) // m * m


def _fuse_params(params, cin):
    """Fold torch-layout weights into the fused kernel's im2col / lane-padded bf16 layout."""
    num_classes = params["b_c2"].shape[-1]
    cin_pad = _round_up(cin, SUB)
    nc_pad = _round_up(num_classes, LANE)

    def im2col_w(w33, cpad):
        k1, k2, ci, _ = w33.shape
        w = jnp.pad(w33, ((0, 0), (0, 0), (0, cpad - ci), (0, 0)))
        return w.reshape(k1 * k2 * cpad, w.shape[-1]).astype(jnp.bfloat16)

    def pad_lanes(a, n, dtype):
        return jnp.pad(a, ((0, 0), (0, n - a.shape[-1]))).astype(dtype)

    fp = {
        "w_ppm": im2col_w(params["w_ppm"], cin_pad),
        "s_ppm": params["s_ppm"], "b_ppm": params["b_ppm"],
        "w_det": im2col_w(params["w_det"], cin_pad),
        "s_det": params["s_det"], "b_det": params["b_det"],
        "w_aux": pad_lanes(params["w_aux"], nc_pad, jnp.bfloat16),
        "b_aux": pad_lanes(params["b_aux"], nc_pad, jnp.float32),
        "s_bn1": params["s_bn1"], "b_bn1": params["b_bn1"],
        "w_c1": im2col_w(params["w_c1"], params["w_c1"].shape[2]),
        "s_bn2": params["s_bn2"], "b_bn2": params["b_bn2"],
        "w_c2": pad_lanes(params["w_c2"], nc_pad, jnp.bfloat16),
        "b_c2": pad_lanes(params["b_c2"], nc_pad, jnp.float32),
    }
    return fp, cin_pad, nc_pad, num_classes


# ---------------------------------- forward ------------------------------------ #

def pixel_classification_forward(x_nchw, params):
    """Mirrors PixelClassificationModel.forward: returns (classifier, aux), NCHW."""
    N, Cin, H, W = x_nchw.shape
    fp, cin_pad, nc_pad, num_classes = _fuse_params(params, Cin)

    # NCHW -> NHWC, pad input channels to a sublane multiple, bf16 MXU operands.
    x = jnp.transpose(x_nchw, (0, 2, 3, 1))
    x = jnp.pad(x, ((0, 0), (0, 0), (0, 0), (0, cin_pad - Cin))).astype(jnp.bfloat16)

    def full(a):
        return pl.BlockSpec(a.shape, lambda n, nd=a.ndim: (0,) * nd)

    def img(c):
        return pl.BlockSpec((1, H, W, c), lambda n: (n, 0, 0, 0))

    cls_pad, aux_pad = pl.pallas_call(
        _fused_forward_kernel,
        out_shape=(jax.ShapeDtypeStruct((N, H, W, nc_pad), jnp.float32),
                   jax.ShapeDtypeStruct((N, H, W, nc_pad), jnp.float32)),
        grid=(N,),
        in_specs=[
            img(cin_pad),
            full(fp["w_ppm"]), full(fp["s_ppm"]), full(fp["b_ppm"]),
            full(fp["w_det"]), full(fp["s_det"]), full(fp["b_det"]),
            full(fp["w_aux"]), full(fp["b_aux"]),
            full(fp["s_bn1"]), full(fp["b_bn1"]),
            full(fp["w_c1"]), full(fp["s_bn2"]), full(fp["b_bn2"]),
            full(fp["w_c2"]), full(fp["b_c2"]),
        ],
        out_specs=(img(nc_pad), img(nc_pad)),
        compiler_params=pltpu.CompilerParams(dimension_semantics=("parallel",)),
    )(x, fp["w_ppm"], fp["s_ppm"], fp["b_ppm"],
      fp["w_det"], fp["s_det"], fp["b_det"],
      fp["w_aux"], fp["b_aux"],
      fp["s_bn1"], fp["b_bn1"],
      fp["w_c1"], fp["s_bn2"], fp["b_bn2"],
      fp["w_c2"], fp["b_c2"])

    classifier = jnp.transpose(cls_pad[..., :num_classes], (0, 3, 1, 2))
    aux = jnp.transpose(aux_pad[..., :num_classes], (0, 3, 1, 2))
    return classifier, aux


# ------------------------------- model setup / main ----------------------------- #

def init_params(key, in_ch, backbone_ch, head_ch, num_classes):
    ks = jax.random.split(key, 5)
    eps = 1e-5
    # BatchNorm after cm.init_weights: gamma=1, beta=0, running_mean=0, running_var=1
    bn_scale = lambda c: jnp.full((1, c), 1.0 / jnp.sqrt(1.0 + eps), jnp.float32)
    bn_bias = lambda c: jnp.zeros((1, c), jnp.float32)
    return {
        # backbone stand-in (stem convs for ppm / detail5 branches, aux head)
        "w_ppm": 0.1 * jax.random.normal(ks[0], (3, 3, in_ch, backbone_ch), jnp.float32),
        "s_ppm": bn_scale(backbone_ch), "b_ppm": bn_bias(backbone_ch),
        "w_det": 0.1 * jax.random.normal(ks[1], (3, 3, in_ch, backbone_ch), jnp.float32),
        "s_det": bn_scale(backbone_ch), "b_det": bn_bias(backbone_ch),
        "w_aux": 0.1 * jax.random.normal(ks[2], (backbone_ch, num_classes), jnp.float32),
        "b_aux": jnp.zeros((1, num_classes), jnp.float32),
        # ClassificationHead: conv2(relu(bn2(conv1(relu(bn1(x))))))
        "s_bn1": bn_scale(backbone_ch), "b_bn1": bn_bias(backbone_ch),
        "w_c1": 0.1 * jax.random.normal(ks[3], (3, 3, backbone_ch, head_ch), jnp.float32),
        "s_bn2": bn_scale(head_ch), "b_bn2": bn_bias(head_ch),
        "w_c2": 0.1 * jax.random.normal(ks[4], (head_ch, num_classes), jnp.float32),
        "b_c2": jnp.zeros((1, num_classes), jnp.float32),
    }


def _ref_forward(x_nchw, p):
    """Pure-JAX f32 reference (same stand-in graph) for a correctness sanity check."""
    x = jnp.transpose(x_nchw, (0, 2, 3, 1)).astype(jnp.float32)
    conv3 = lambda v, w: jax.lax.conv_general_dilated(
        v, w, (1, 1), "SAME", dimension_numbers=("NHWC", "HWIO", "NHWC"))
    ppm = jnp.maximum(conv3(x, p["w_ppm"]) * p["s_ppm"] + p["b_ppm"], 0.0)
    det = jnp.maximum(conv3(x, p["w_det"]) * p["s_det"] + p["b_det"], 0.0)
    aux = ppm @ p["w_aux"] + p["b_aux"]
    h = jnp.maximum((ppm + det) * p["s_bn1"] + p["b_bn1"], 0.0)
    h = jnp.maximum(conv3(h, p["w_c1"]) * p["s_bn2"] + p["b_bn2"], 0.0)
    cls = h @ p["w_c2"] + p["b_c2"]
    return jnp.transpose(cls, (0, 3, 1, 2)), jnp.transpose(aux, (0, 3, 1, 2))


if __name__ == "__main__":
    key = jax.random.PRNGKey(0)
    k_x, k_p = jax.random.split(key)

    # small shapes: batch=2, RGB input, 16x16 spatial
    N, C_in, H, W = 2, 3, 16, 16
    backbone_ch, head_ch, num_classes = 32, 32, 8

    x = jax.random.normal(k_x, (N, C_in, H, W), jnp.float32)
    params = init_params(k_p, C_in, backbone_ch, head_ch, num_classes)

    fwd = jax.jit(pixel_classification_forward)
    classifier, aux = fwd(x, params)
    jax.block_until_ready((classifier, aux))

    assert classifier.shape == (N, num_classes, H, W), classifier.shape
    assert aux.shape == (N, num_classes, H, W), aux.shape
    assert bool(jnp.all(jnp.isfinite(classifier))) and bool(jnp.all(jnp.isfinite(aux)))

    # loose sanity check vs f32 reference (kernel uses bf16 MXU operands)
    cls_ref, aux_ref = _ref_forward(x, params)
    for got, ref in ((classifier, cls_ref), (aux, aux_ref)):
        err = jnp.max(jnp.abs(got - ref)) / (jnp.max(jnp.abs(ref)) + 1e-6)
        assert float(err) < 0.1, float(err)

    print("KERNEL_OK")
</pallas_src>

<mosaic_0001>
module attributes {stable_mosaic.version = 11 : i64} {
  func.func @_fused_forward_kernel(%arg0: i32, %arg1: memref<1x16x16x8xbf16, #tpu.memory_space<vmem>>, %arg2: memref<72x32xbf16, #tpu.memory_space<vmem>>, %arg3: memref<1x32xf32, #tpu.memory_space<vmem>>, %arg4: memref<1x32xf32, #tpu.memory_space<vmem>>, %arg5: memref<72x32xbf16, #tpu.memory_space<vmem>>, %arg6: memref<1x32xf32, #tpu.memory_space<vmem>>, %arg7: memref<1x32xf32, #tpu.memory_space<vmem>>, %arg8: memref<32x128xbf16, #tpu.memory_space<vmem>>, %arg9: memref<1x128xf32, #tpu.memory_space<vmem>>, %arg10: memref<1x32xf32, #tpu.memory_space<vmem>>, %arg11: memref<1x32xf32, #tpu.memory_space<vmem>>, %arg12: memref<288x32xbf16, #tpu.memory_space<vmem>>, %arg13: memref<1x32xf32, #tpu.memory_space<vmem>>, %arg14: memref<1x32xf32, #tpu.memory_space<vmem>>, %arg15: memref<32x128xbf16, #tpu.memory_space<vmem>>, %arg16: memref<1x128xf32, #tpu.memory_space<vmem>>, %arg17: memref<1x16x16x128xf32, #tpu.memory_space<vmem>>, %arg18: memref<1x16x16x128xf32, #tpu.memory_space<vmem>>) attributes {dimension_semantics = [#tpu.dimension_semantics<parallel>], iteration_bounds = array<i64: 2>, scalar_prefetch = 0 : i64, scratch_operands = 0 : i64, tpu.core_type = #tpu.core_type<tc>, window_params = [{transform_indices = @transform_0, window_bounds = array<i64: 1, 16, 16, 8>}, {pipeline_mode = #tpu.pipeline_mode<synchronous>, transform_indices = @transform_1, window_bounds = array<i64: 72, 32>}, {pipeline_mode = #tpu.pipeline_mode<synchronous>, transform_indices = @transform_2, window_bounds = array<i64: 1, 32>}, {pipeline_mode = #tpu.pipeline_mode<synchronous>, transform_indices = @transform_3, window_bounds = array<i64: 1, 32>}, {pipeline_mode = #tpu.pipeline_mode<synchronous>, transform_indices = @transform_4, window_bounds = array<i64: 72, 32>}, {pipeline_mode = #tpu.pipeline_mode<synchronous>, transform_indices = @transform_5, window_bounds = array<i64: 1, 32>}, {pipeline_mode = #tpu.pipeline_mode<synchronous>, transform_indices = @transform_6, window_bounds = array<i64: 1, 32>}, {pipeline_mode = #tpu.pipeline_mode<synchronous>, transform_indices = @transform_7, window_bounds = array<i64: 32, 128>}, {pipeline_mode = #tpu.pipeline_mode<synchronous>, transform_indices = @transform_8, window_bounds = array<i64: 1, 128>}, {pipeline_mode = #tpu.pipeline_mode<synchronous>, transform_indices = @transform_9, window_bounds = array<i64: 1, 32>}, {pipeline_mode = #tpu.pipeline_mode<synchronous>, transform_indices = @transform_10, window_bounds = array<i64: 1, 32>}, {pipeline_mode = #tpu.pipeline_mode<synchronous>, transform_indices = @transform_11, window_bounds = array<i64: 288, 32>}, {pipeline_mode = #tpu.pipeline_mode<synchronous>, transform_indices = @transform_12, window_bounds = array<i64: 1, 32>}, {pipeline_mode = #tpu.pipeline_mode<synchronous>, transform_indices = @transform_13, window_bounds = array<i64: 1, 32>}, {pipeline_mode = #tpu.pipeline_mode<synchronous>, transform_indices = @transform_14, window_bounds = array<i64: 32, 128>}, {pipeline_mode = #tpu.pipeline_mode<synchronous>, transform_indices = @transform_15, window_bounds = array<i64: 1, 128>}, {transform_indices = @transform_16, window_bounds = array<i64: 1, 16, 16, 128>}, {transform_indices = @transform_17, window_bounds = array<i64: 1, 16, 16, 128>}]} {
    %c0 = arith.constant 0 : index
    %c0_0 = arith.constant 0 : index
    %c0_1 = arith.constant 0 : index
    %c0_2 = arith.constant 0 : index
    %0 = vector.load %arg1[%c0, %c0_0, %c0_1, %c0_2] : memref<1x16x16x8xbf16, #tpu.memory_space<vmem>>, vector<1x16x16x8xbf16>
    %1 = vector.shape_cast %0 : vector<1x16x16x8xbf16> to vector<16x16x8xbf16>
    %cst = arith.constant 0.000000e+00 : bf16
    %2 = vector.broadcast %cst : bf16 to vector<1x16x8xbf16>
    %3 = tpu.concatenate %2, %1, %2 in 0 : vector<1x16x8xbf16>, vector<16x16x8xbf16>, vector<1x16x8xbf16> -> vector<18x16x8xbf16>
    %cst_3 = arith.constant 0.000000e+00 : bf16
    %4 = vector.broadcast %cst_3 : bf16 to vector<18x1x8xbf16>
    %5 = tpu.concatenate %4, %3, %4 in 1 : vector<18x1x8xbf16>, vector<18x16x8xbf16>, vector<18x1x8xbf16> -> vector<18x18x8xbf16>
    %6 = vector.extract_strided_slice %5 {offsets = [0, 0, 0], sizes = [16, 16, 8], strides = [1, 1, 1]} : vector<18x18x8xbf16> to vector<16x16x8xbf16>
    %7 = vector.shape_cast %6 : vector<16x16x8xbf16> to vector<256x8xbf16>
    %8 = vector.extract_strided_slice %5 {offsets = [0, 1, 0], sizes = [16, 16, 8], strides = [1, 1, 1]} : vector<18x18x8xbf16> to vector<16x16x8xbf16>
    %9 = vector.shape_cast %8 : vector<16x16x8xbf16> to vector<256x8xbf16>
    %10 = vector.extract_strided_slice %5 {offsets = [0, 2, 0], sizes = [16, 16, 8], strides = [1, 1, 1]} : vector<18x18x8xbf16> to vector<16x16x8xbf16>
    %11 = vector.shape_cast %10 : vector<16x16x8xbf16> to vector<256x8xbf16>
    %12 = vector.extract_strided_slice %5 {offsets = [1, 0, 0], sizes = [16, 16, 8], strides = [1, 1, 1]} : vector<18x18x8xbf16> to vector<16x16x8xbf16>
    %13 = vector.shape_cast %12 : vector<16x16x8xbf16> to vector<256x8xbf16>
    %14 = vector.extract_strided_slice %5 {offsets = [1, 1, 0], sizes = [16, 16, 8], strides = [1, 1, 1]} : vector<18x18x8xbf16> to vector<16x16x8xbf16>
    %15 = vector.shape_cast %14 : vector<16x16x8xbf16> to vector<256x8xbf16>
    %16 = vector.extract_strided_slice %5 {offsets = [1, 2, 0], sizes = [16, 16, 8], strides = [1, 1, 1]} : vector<18x18x8xbf16> to vector<16x16x8xbf16>
    %17 = vector.shape_cast %16 : vector<16x16x8xbf16> to vector<256x8xbf16>
    %18 = vector.extract_strided_slice %5 {offsets = [2, 0, 0], sizes = [16, 16, 8], strides = [1, 1, 1]} : vector<18x18x8xbf16> to vector<16x16x8xbf16>
    %19 = vector.shape_cast %18 : vector<16x16x8xbf16> to vector<256x8xbf16>
    %20 = vector.extract_strided_slice %5 {offsets = [2, 1, 0], sizes = [16, 16, 8], strides = [1, 1, 1]} : vector<18x18x8xbf16> to vector<16x16x8xbf16>
    %21 = vector.shape_cast %20 : vector<16x16x8xbf16> to vector<256x8xbf16>
    %22 = vector.extract_strided_slice %5 {offsets = [2, 2, 0], sizes = [16, 16, 8], strides = [1, 1, 1]} : vector<18x18x8xbf16> to vector<16x16x8xbf16>
    %23 = vector.shape_cast %22 : vector<16x16x8xbf16> to vector<256x8xbf16>
    %24 = tpu.concatenate %7, %9, %11, %13, %15, %17, %19, %21, %23 in 1 : vector<256x8xbf16>, vector<256x8xbf16>, vector<256x8xbf16>, vector<256x8xbf16>, vector<256x8xbf16>, vector<256x8xbf16>, vector<256x8xbf16>, vector<256x8xbf16>, vector<256x8xbf16> -> vector<256x72xbf16>
    %c0_4 = arith.constant 0 : index
    %c0_5 = arith.constant 0 : index
    %25 = vector.load %arg2[%c0_4, %c0_5] : memref<72x32xbf16, #tpu.memory_space<vmem>>, vector<72x32xbf16>
    %cst_6 = arith.constant dense<0.000000e+00> : vector<256x32xf32>
    %26 = tpu.matmul %24, %25, %cst_6 {dimension_numbers = #tpu.dot_dimension_numbers<[1], [0], [0], [1], [0, 0, 1, 1], [], []>} : vector<256x72xbf16>, vector<72x32xbf16>, vector<256x32xf32> -> vector<256x32xf32>
    %c0_7 = arith.constant 0 : index
    %c0_8 = arith.constant 0 : index
    %27 = vector.load %arg3[%c0_7, %c0_8] : memref<1x32xf32, #tpu.memory_space<vmem>>, vector<1x32xf32>
    %28 = vector.broadcast %27 : vector<1x32xf32> to vector<256x32xf32>
    %29 = arith.mulf %26, %28 : vector<256x32xf32>
    %c0_9 = arith.constant 0 : index
    %c0_10 = arith.constant 0 : index
    %30 = vector.load %arg4[%c0_9, %c0_10] : memref<1x32xf32, #tpu.memory_space<vmem>>, vector<1x32xf32>
    %31 = vector.broadcast %30 : vector<1x32xf32> to vector<256x32xf32>
    %32 = arith.addf %29, %31 : vector<256x32xf32>
    %cst_11 = arith.constant 0.000000e+00 : f32
    %33 = vector.broadcast %cst_11 : f32 to vector<256x32xf32>
    %34 = arith.maximumf %32, %33 : vector<256x32xf32>
    %c0_12 = arith.constant 0 : index
    %c0_13 = arith.constant 0 : index
    %35 = vector.load %arg5[%c0_12, %c0_13] : memref<72x32xbf16, #tpu.memory_space<vmem>>, vector<72x32xbf16>
    %cst_14 = arith.constant dense<0.000000e+00> : vector<256x32xf32>
    %36 = tpu.matmul %24, %35, %cst_14 {dimension_numbers = #tpu.dot_dimension_numbers<[1], [0], [0], [1], [0, 0, 1, 1], [], []>} : vector<256x72xbf16>, vector<72x32xbf16>, vector<256x32xf32> -> vector<256x32xf32>
    %c0_15 = arith.constant 0 : index
    %c0_16 = arith.constant 0 : index
    %37 = vector.load %arg6[%c0_15, %c0_16] : memref<1x32xf32, #tpu.memory_space<vmem>>, vector<1x32xf32>
    %38 = vector.broadcast %37 : vector<1x32xf32> to vector<256x32xf32>
    %39 = arith.mulf %36, %38 : vector<256x32xf32>
    %c0_17 = arith.constant 0 : index
    %c0_18 = arith.constant 0 : index
    %40 = vector.load %arg7[%c0_17, %c0_18] : memref<1x32xf32, #tpu.memory_space<vmem>>, vector<1x32xf32>
    %41 = vector.broadcast %40 : vector<1x32xf32> to vector<256x32xf32>
    %42 = arith.addf %39, %41 : vector<256x32xf32>
    %cst_19 = arith.constant 0.000000e+00 : f32
    %43 = vector.broadcast %cst_19 : f32 to vector<256x32xf32>
    %44 = arith.maximumf %42, %43 : vector<256x32xf32>
    %45 = arith.truncf %34 : vector<256x32xf32> to vector<256x32xbf16>
    %c0_20 = arith.constant 0 : index
    %c0_21 = arith.constant 0 : index
    %46 = vector.load %arg8[%c0_20, %c0_21] : memref<32x128xbf16, #tpu.memory_space<vmem>>, vector<32x128xbf16>
    %cst_22 = arith.constant dense<0.000000e+00> : vector<256x128xf32>
    %47 = tpu.matmul %45, %46, %cst_22 {dimension_numbers = #tpu.dot_dimension_numbers<[1], [0], [0], [1], [0, 0, 1, 1], [], []>} : vector<256x32xbf16>, vector<32x128xbf16>, vector<256x128xf32> -> vector<256x128xf32>
    %c0_23 = arith.constant 0 : index
    %c0_24 = arith.constant 0 : index
    %48 = vector.load %arg9[%c0_23, %c0_24] : memref<1x128xf32, #tpu.memory_space<vmem>>, vector<1x128xf32>
    %49 = vector.broadcast %48 : vector<1x128xf32> to vector<256x128xf32>
    %50 = arith.addf %47, %49 : vector<256x128xf32>
    %51 = vector.shape_cast %50 : vector<256x128xf32> to vector<16x16x128xf32>
    %c0_25 = arith.constant 0 : index
    %c0_26 = arith.constant 0 : index
    %c0_27 = arith.constant 0 : index
    %c0_28 = arith.constant 0 : index
    %52 = vector.load %arg18[%c0_25, %c0_26, %c0_27, %c0_28] : memref<1x16x16x128xf32, #tpu.memory_space<vmem>>, vector<1x16x16x128xf32>
    %53 = vector.shape_cast %52 : vector<1x16x16x128xf32> to vector<16x16x128xf32>
    %54 = vector.shape_cast %51 : vector<16x16x128xf32> to vector<1x16x16x128xf32>
    tpu.vector_store %arg18[%c0_25, %c0_26, %c0_27, %c0_28], %54 {strides = array<i32>} : memref<1x16x16x128xf32, #tpu.memory_space<vmem>>, vector<1x16x16x128xf32>,
    %55 = arith.addf %34, %44 : vector<256x32xf32>
    %c0_29 = arith.constant 0 : index
    %c0_30 = arith.constant 0 : index
    %56 = vector.load %arg10[%c0_29, %c0_30] : memref<1x32xf32, #tpu.memory_space<vmem>>, vector<1x32xf32>
    %57 = vector.broadcast %56 : vector<1x32xf32> to vector<256x32xf32>
    %58 = arith.mulf %55, %57 : vector<256x32xf32>
    %c0_31 = arith.constant 0 : index
    %c0_32 = arith.constant 0 : index
    %59 = vector.load %arg11[%c0_31, %c0_32] : memref<1x32xf32, #tpu.memory_space<vmem>>, vector<1x32xf32>
    %60 = vector.broadcast %59 : vector<1x32xf32> to vector<256x32xf32>
    %61 = arith.addf %58, %60 : vector<256x32xf32>
    %cst_33 = arith.constant 0.000000e+00 : f32
    %62 = vector.broadcast %cst_33 : f32 to vector<256x32xf32>
    %63 = arith.maximumf %61, %62 : vector<256x32xf32>
    %64 = vector.shape_cast %63 : vector<256x32xf32> to vector<16x16x32xf32>
    %65 = arith.truncf %64 : vector<16x16x32xf32> to vector<16x16x32xbf16>
    %cst_34 = arith.constant 0.000000e+00 : bf16
    %66 = vector.broadcast %cst_34 : bf16 to vector<1x16x32xbf16>
    %67 = tpu.concatenate %66, %65, %66 in 0 : vector<1x16x32xbf16>, vector<16x16x32xbf16>, vector<1x16x32xbf16> -> vector<18x16x32xbf16>
    %cst_35 = arith.constant 0.000000e+00 : bf16
    %68 = vector.broadcast %cst_35 : bf16 to vector<18x1x32xbf16>
    %69 = tpu.concatenate %68, %67, %68 in 1 : vector<18x1x32xbf16>, vector<18x16x32xbf16>, vector<18x1x32xbf16> -> vector<18x18x32xbf16>
    %70 = vector.extract_strided_slice %69 {offsets = [0, 0, 0], sizes = [16, 16, 32], strides = [1, 1, 1]} : vector<18x18x32xbf16> to vector<16x16x32xbf16>
    %71 = vector.shape_cast %70 : vector<16x16x32xbf16> to vector<256x32xbf16>
    %72 = vector.extract_strided_slice %69 {offsets = [0, 1, 0], sizes = [16, 16, 32], strides = [1, 1, 1]} : vector<18x18x32xbf16> to vector<16x16x32xbf16>
    %73 = vector.shape_cast %72 : vector<16x16x32xbf16> to vector<256x32xbf16>
    %74 = vector.extract_strided_slice %69 {offsets = [0, 2, 0], sizes = [16, 16, 32], strides = [1, 1, 1]} : vector<18x18x32xbf16> to vector<16x16x32xbf16>
    %75 = vector.shape_cast %74 : vector<16x16x32xbf16> to vector<256x32xbf16>
    %76 = vector.extract_strided_slice %69 {offsets = [1, 0, 0], sizes = [16, 16, 32], strides = [1, 1, 1]} : vector<18x18x32xbf16> to vector<16x16x32xbf16>
    %77 = vector.shape_cast %76 : vector<16x16x32xbf16> to vector<256x32xbf16>
    %78 = vector.extract_strided_slice %69 {offsets = [1, 1, 0], sizes = [16, 16, 32], strides = [1, 1, 1]} : vector<18x18x32xbf16> to vector<16x16x32xbf16>
    %79 = vector.shape_cast %78 : vector<16x16x32xbf16> to vector<256x32xbf16>
    %80 = vector.extract_strided_slice %69 {offsets = [1, 2, 0], sizes = [16, 16, 32], strides = [1, 1, 1]} : vector<18x18x32xbf16> to vector<16x16x32xbf16>
    %81 = vector.shape_cast %80 : vector<16x16x32xbf16> to vector<256x32xbf16>
    %82 = vector.extract_strided_slice %69 {offsets = [2, 0, 0], sizes = [16, 16, 32], strides = [1, 1, 1]} : vector<18x18x32xbf16> to vector<16x16x32xbf16>
    %83 = vector.shape_cast %82 : vector<16x16x32xbf16> to vector<256x32xbf16>
    %84 = vector.extract_strided_slice %69 {offsets = [2, 1, 0], sizes = [16, 16, 32], strides = [1, 1, 1]} : vector<18x18x32xbf16> to vector<16x16x32xbf16>
    %85 = vector.shape_cast %84 : vector<16x16x32xbf16> to vector<256x32xbf16>
    %86 = vector.extract_strided_slice %69 {offsets = [2, 2, 0], sizes = [16, 16, 32], strides = [1, 1, 1]} : vector<18x18x32xbf16> to vector<16x16x32xbf16>
    %87 = vector.shape_cast %86 : vector<16x16x32xbf16> to vector<256x32xbf16>
    %88 = tpu.concatenate %71, %73, %75, %77, %79, %81, %83, %85, %87 in 1 : vector<256x32xbf16>, vector<256x32xbf16>, vector<256x32xbf16>, vector<256x32xbf16>, vector<256x32xbf16>, vector<256x32xbf16>, vector<256x32xbf16>, vector<256x32xbf16>, vector<256x32xbf16> -> vector<256x288xbf16>
    %c0_36 = arith.constant 0 : index
    %c0_37 = arith.constant 0 : index
    %89 = vector.load %arg12[%c0_36, %c0_37] : memref<288x32xbf16, #tpu.memory_space<vmem>>, vector<288x32xbf16>
    %cst_38 = arith.constant dense<0.000000e+00> : vector<256x32xf32>
    %90 = tpu.matmul %88, %89, %cst_38 {dimension_numbers = #tpu.dot_dimension_numbers<[1], [0], [0], [1], [0, 0, 1, 1], [], []>} : vector<256x288xbf16>, vector<288x32xbf16>, vector<256x32xf32> -> vector<256x32xf32>
    %c0_39 = arith.constant 0 : index
    %c0_40 = arith.constant 0 : index
    %91 = vector.load %arg13[%c0_39, %c0_40] : memref<1x32xf32, #tpu.memory_space<vmem>>, vector<1x32xf32>
    %92 = vector.broadcast %91 : vector<1x32xf32> to vector<256x32xf32>
    %93 = arith.mulf %90, %92 : vector<256x32xf32>
    %c0_41 = arith.constant 0 : index
    %c0_42 = arith.constant 0 : index
    %94 = vector.load %arg14[%c0_41, %c0_42] : memref<1x32xf32, #tpu.memory_space<vmem>>, vector<1x32xf32>
    %95 = vector.broadcast %94 : vector<1x32xf32> to vector<256x32xf32>
    %96 = arith.addf %93, %95 : vector<256x32xf32>
    %cst_43 = arith.constant 0.000000e+00 : f32
    %97 = vector.broadcast %cst_43 : f32 to vector<256x32xf32>
    %98 = arith.maximumf %96, %97 : vector<256x32xf32>
    %99 = arith.truncf %98 : vector<256x32xf32> to vector<256x32xbf16>
    %c0_44 = arith.constant 0 : index
    %c0_45 = arith.constant 0 : index
    %100 = vector.load %arg15[%c0_44, %c0_45] : memref<32x128xbf16, #tpu.memory_space<vmem>>, vector<32x128xbf16>
    %cst_46 = arith.constant dense<0.000000e+00> : vector<256x128xf32>
    %101 = tpu.matmul %99, %100, %cst_46 {dimension_numbers = #tpu.dot_dimension_numbers<[1], [0], [0], [1], [0, 0, 1, 1], [], []>} : vector<256x32xbf16>, vector<32x128xbf16>, vector<256x128xf32> -> vector<256x128xf32>
    %c0_47 = arith.constant 0 : index
    %c0_48 = arith.constant 0 : index
    %102 = vector.load %arg16[%c0_47, %c0_48] : memref<1x128xf32, #tpu.memory_space<vmem>>, vector<1x128xf32>
    %103 = vector.broadcast %102 : vector<1x128xf32> to vector<256x128xf32>
    %104 = arith.addf %101, %103 : vector<256x128xf32>
    %105 = vector.shape_cast %104 : vector<256x128xf32> to vector<16x16x128xf32>
    %c0_49 = arith.constant 0 : index
    %c0_50 = arith.constant 0 : index
    %c0_51 = arith.constant 0 : index
    %c0_52 = arith.constant 0 : index
    %106 = vector.load %arg17[%c0_49, %c0_50, %c0_51, %c0_52] : memref<1x16x16x128xf32, #tpu.memory_space<vmem>>, vector<1x16x16x128xf32>
    %107 = vector.shape_cast %106 : vector<1x16x16x128xf32> to vector<16x16x128xf32>
    %108 = vector.shape_cast %105 : vector<16x16x128xf32> to vector<1x16x16x128xf32>
    tpu.vector_store %arg17[%c0_49, %c0_50, %c0_51, %c0_52], %108 {strides = array<i32>} : memref<1x16x16x128xf32, #tpu.memory_space<vmem>>, vector<1x16x16x128xf32>,
    return
  }
  func.func @transform_0(%arg0: i32) -> (i32, i32, i32, i32) {
    %c0_i32 = arith.constant 0 : i32
    %c0_i32_0 = arith.constant 0 : i32
    %c0_i32_1 = arith.constant 0 : i32
    %c0_i32_2 = arith.constant 0 : i32
    return %arg0, %c0_i32, %c0_i32_0, %c0_i32_1 : i32, i32, i32, i32
  }
  func.func @transform_1(%arg0: i32) -> (i32, i32) {
    %c0_i32 = arith.constant 0 : i32
    %c0_i32_0 = arith.constant 0 : i32
    %c0_i32_1 = arith.constant 0 : i32
    return %c0_i32, %c0_i32_0 : i32, i32
  }
  func.func @transform_2(%arg0: i32) -> (i32, i32) {
    %c0_i32 = arith.constant 0 : i32
    %c0_i32_0 = arith.constant 0 : i32
    %c0_i32_1 = arith.constant 0 : i32
    return %c0_i32, %c0_i32_0 : i32, i32
  }
  func.func @transform_3(%arg0: i32) -> (i32, i32) {
    %c0_i32 = arith.constant 0 : i32
    %c0_i32_0 = arith.constant 0 : i32
    %c0_i32_1 = arith.constant 0 : i32
    return %c0_i32, %c0_i32_0 : i32, i32
  }
  func.func @transform_4(%arg0: i32) -> (i32, i32) {
    %c0_i32 = arith.constant 0 : i32
    %c0_i32_0 = arith.constant 0 : i32
    %c0_i32_1 = arith.constant 0 : i32
    return %c0_i32, %c0_i32_0 : i32, i32
  }
  func.func @transform_5(%arg0: i32) -> (i32, i32) {
    %c0_i32 = arith.constant 0 : i32
    %c0_i32_0 = arith.constant 0 : i32
    %c0_i32_1 = arith.constant 0 : i32
    return %c0_i32, %c0_i32_0 : i32, i32
  }
  func.func @transform_6(%arg0: i32) -> (i32, i32) {
    %c0_i32 = arith.constant 0 : i32
    %c0_i32_0 = arith.constant 0 : i32
    %c0_i32_1 = arith.constant 0 : i32
    return %c0_i32, %c0_i32_0 : i32, i32
  }
  func.func @transform_7(%arg0: i32) -> (i32, i32) {
    %c0_i32 = arith.constant 0 : i32
    %c0_i32_0 = arith.constant 0 : i32
    %c0_i32_1 = arith.constant 0 : i32
    return %c0_i32, %c0_i32_0 : i32, i32
  }
  func.func @transform_8(%arg0: i32) -> (i32, i32) {
    %c0_i32 = arith.constant 0 : i32
    %c0_i32_0 = arith.constant 0 : i32
    %c0_i32_1 = arith.constant 0 : i32
    return %c0_i32, %c0_i32_0 : i32, i32
  }
  func.func @transform_9(%arg0: i32) -> (i32, i32) {
    %c0_i32 = arith.constant 0 : i32
    %c0_i32_0 = arith.constant 0 : i32
    %c0_i32_1 = arith.constant 0 : i32
    return %c0_i32, %c0_i32_0 : i32, i32
  }
  func.func @transform_10(%arg0: i32) -> (i32, i32) {
    %c0_i32 = arith.constant 0 : i32
    %c0_i32_0 = arith.constant 0 : i32
    %c0_i32_1 = arith.constant 0 : i32
    return %c0_i32, %c0_i32_0 : i32, i32
  }
  func.func @transform_11(%arg0: i32) -> (i32, i32) {
    %c0_i32 = arith.constant 0 : i32
    %c0_i32_0 = arith.constant 0 : i32
    %c0_i32_1 = arith.constant 0 : i32
    return %c0_i32, %c0_i32_0 : i32, i32
  }
  func.func @transform_12(%arg0: i32) -> (i32, i32) {
    %c0_i32 = arith.constant 0 : i32
    %c0_i32_0 = arith.constant 0 : i32
    %c0_i32_1 = arith.constant 0 : i32
    return %c0_i32, %c0_i32_0 : i32, i32
  }
  func.func @transform_13(%arg0: i32) -> (i32, i32) {
    %c0_i32 = arith.constant 0 : i32
    %c0_i32_0 = arith.constant 0 : i32
    %c0_i32_1 = arith.constant 0 : i32
    return %c0_i32, %c0_i32_0 : i32, i32
  }
  func.func @transform_14(%arg0: i32) -> (i32, i32) {
    %c0_i32 = arith.constant 0 : i32
    %c0_i32_0 = arith.constant 0 : i32
    %c0_i32_1 = arith.constant 0 : i32
    return %c0_i32, %c0_i32_0 : i32, i32
  }
  func.func @transform_15(%arg0: i32) -> (i32, i32) {
    %c0_i32 = arith.constant 0 : i32
    %c0_i32_0 = arith.constant 0 : i32
    %c0_i32_1 = arith.constant 0 : i32
    return %c0_i32, %c0_i32_0 : i32, i32
  }
  func.func @transform_16(%arg0: i32) -> (i32, i32, i32, i32) {
    %c0_i32 = arith.constant 0 : i32
    %c0_i32_0 = arith.constant 0 : i32
    %c0_i32_1 = arith.constant 0 : i32
    %c0_i32_2 = arith.constant 0 : i32
    return %arg0, %c0_i32, %c0_i32_0, %c0_i32_1 : i32, i32, i32, i32
  }
  func.func @transform_17(%arg0: i32) -> (i32, i32, i32, i32) {
    %c0_i32 = arith.constant 0 : i32
    %c0_i32_0 = arith.constant 0 : i32
    %c0_i32_1 = arith.constant 0 : i32
    %c0_i32_2 = arith.constant 0 : i32
    return %arg0, %c0_i32, %c0_i32_0, %c0_i32_1 : i32, i32, i32, i32
  }
}

</mosaic_0001>

<llo_original>
// kernel: pixel_classification_forward.1
$region0: #{pixel_classification_forward.1}
  #allocation0 [shape = 'u32[]', space=smem, size = 0x4, offset = 0x4, fixed_abs, tag = 'smem constant byte address 0x4 - core index']
  #allocation1 [shape = 'u32[144,128]{1,0:T(1,128)}', space=vmem, size = 0x12000, scoped, tag = 'internal scratch']
  %s0 = inlined_call_operand.vmem [shape: bf16[2,16,16,8], index: 0, kind: input, shape index: {}]
  %s1 = inlined_call_operand.vmem [shape: bf16[72,32], index: 1, kind: input, shape index: {}]
  %s2 = inlined_call_operand.vmem [shape: f32[1,32], index: 2, kind: input, shape index: {}]
  %s3 = inlined_call_operand.vmem [shape: f32[1,32], index: 3, kind: input, shape index: {}]
  %s4 = inlined_call_operand.vmem [shape: bf16[72,32], index: 4, kind: input, shape index: {}]
  %s5 = inlined_call_operand.vmem [shape: f32[1,32], index: 5, kind: input, shape index: {}]
  %s6 = inlined_call_operand.vmem [shape: f32[1,32], index: 6, kind: input, shape index: {}]
  %s7 = inlined_call_operand.vmem [shape: bf16[32,128], index: 7, kind: input, shape index: {}]
  %s8 = inlined_call_operand.vmem [shape: f32[1,128], index: 8, kind: input, shape index: {}]
  %s9 = inlined_call_operand.vmem [shape: f32[1,32], index: 9, kind: input, shape index: {}]
  %s10 = inlined_call_operand.vmem [shape: f32[1,32], index: 10, kind: input, shape index: {}]
  %s11 = inlined_call_operand.vmem [shape: bf16[288,32], index: 11, kind: input, shape index: {}]
  %s12 = inlined_call_operand.vmem [shape: f32[1,32], index: 12, kind: input, shape index: {}]
  %s13 = inlined_call_operand.vmem [shape: f32[1,32], index: 13, kind: input, shape index: {}]
  %s14 = inlined_call_operand.vmem [shape: bf16[32,128], index: 14, kind: input, shape index: {}]
  %s15 = inlined_call_operand.vmem [shape: f32[1,128], index: 15, kind: input, shape index: {}]
  %s16 = inlined_call_operand.vmem [shape: f32[2,16,16,128], index: 16, kind: output, shape index: {0}]
  %s17 = inlined_call_operand.vmem [shape: f32[2,16,16,128], index: 17, kind: output, shape index: {1}]
  %18 = xla_tuple %s16, %s17
  %s19 = sld [smem:[#allocation0]]
  $region105: #{pixel_classification_forward.1} parent=0
    _
  %s21 = ssub.s32 1, %s19
  %s22 = scalar_select 0, %s21, %s19
  loop: start=0, step=1, limit=4
  $region2: #{pixel_classification_forward.1} parent=0 // loop_pre_header
    _
  $region3: #{pixel_classification_forward.1} parent=0 // loop_header
    %s24 = sphi 0, %s28
    %p25 = scmp.ge.s32.totalorder %s24, 4
    %s34 = sphi 0, %s36
    %s37 = sphi 0, %s34
    %s38 = sphi 0, %s37
    %s54 = sphi 0, %s38
    %s58 = sphi 0, %s58
    %s60 = sphi 0, %s58
    %s61 = sphi 0, %s60
    %s75 = sphi 0, %s61
    %s79 = sphi 0, %s79
    %s81 = sphi 0, %s79
    %s82 = sphi 0, %s81
    %s96 = sphi 0, %s82
    %s100 = sphi 0, %s100
    %s102 = sphi 0, %s100
    %s103 = sphi 0, %s102
    %s117 = sphi 0, %s103
    %s121 = sphi 0, %s121
    %s123 = sphi 0, %s121
    %s124 = sphi 0, %s123
    %s138 = sphi 0, %s124
    %s142 = sphi 0, %s142
    %s144 = sphi 0, %s142
    %s145 = sphi 0, %s144
    %s159 = sphi 0, %s145
    %s163 = sphi 0, %s163
    %s165 = sphi 0, %s163
    %s166 = sphi 0, %s165
    %s180 = sphi 0, %s166
    %s184 = sphi 0, %s184
    %s186 = sphi 0, %s184
    %s187 = sphi 0, %s186
    %s201 = sphi 0, %s187
    %s205 = sphi 0, %s205
    %s207 = sphi 0, %s205
    %s208 = sphi 0, %s207
    %s222 = sphi 0, %s208
    %s226 = sphi 0, %s226
    %s228 = sphi 0, %s226
    %s229 = sphi 0, %s228
    %s243 = sphi 0, %s229
    %s247 = sphi 0, %s247
    %s249 = sphi 0, %s247
    %s250 = sphi 0, %s249
    %s264 = sphi 0, %s250
    %s268 = sphi 0, %s268
    %s270 = sphi 0, %s268
    %s271 = sphi 0, %s270
    %s285 = sphi 0, %s271
    %s289 = sphi 0, %s289
    %s291 = sphi 0, %s289
    %s292 = sphi 0, %s291
    %s306 = sphi 0, %s292
    %s310 = sphi 0, %s310
    %s312 = sphi 0, %s310
    %s313 = sphi 0, %s312
    %s327 = sphi 0, %s313
    %s331 = sphi 0, %s331
    %s333 = sphi 0, %s331
    %s334 = sphi 0, %s333
    %s348 = sphi 0, %s334
    %s352 = sphi 0, %s352
    %s354 = sphi 0, %s352
    %s355 = sphi 0, %s354
    %s369 = sphi 0, %s355
    %s375 = sphi 0, %s377
    %s378 = sphi 0, %s375
    %s379 = sphi 0, %s378
    %s395 = sphi 0, %s379
    %s401 = sphi 0, %s403
    %s404 = sphi 0, %s401
    %s405 = sphi 0, %s404
    %s421 = sphi 0, %s405
  $region4: #{pixel_classification_forward.1} parent=0 // loop_header_branch
    %27 = sbr.rel (%p25) target = $region8
  $region5: #{pixel_classification_forward.1} parent=0 // loop_body
    %s29 = ssub.s32 %s24, 1
    %s30 = ssub.s32 %s24, 2
    %s31 = sadd.s32 %s24, 1
    %s32 = ssub.s32 %s24, %s31
    %p33 = scmp.eq.s32.totalorder %s32, 0
    %s35 = sadd.s32 %s34, 1
    %s36 = scalar_select %p33, %s34, %s35
    %p39 = pneg %p33
    %p40 = scmp.eq.s32.totalorder %s24, 1
    %p41 = por %p39, %p40
    %p42 = scmp.ne.s32.totalorder %s34, %s37
    %p43 = scmp.eq.s32.totalorder %s24, 0
    %p44 = por %p42, %p43
    %p45 = scmp.ne.s32.totalorder %s34, %s37
    %p46 = scmp.eq.s32.totalorder %s29, 1
    %p47 = por %p45, %p46
    %p48 = scmp.ne.s32.totalorder %s37, %s38
    %p49 = scmp.eq.s32.totalorder %s29, 0
    %p50 = por %p48, %p49
    %p51 = scmp.ne.s32.totalorder %s37, %s38
    %p52 = scmp.eq.s32.totalorder %s30, 1
    %p53 = por %p51, %p52
    %p55 = scmp.ne.s32.totalorder %s38, %s54
    %p56 = scmp.eq.s32.totalorder %s30, 0
    %p57 = por %p55, %p56
    %s59 = sadd.s32 %s58, 1
    %p62 = scmp.eq.s32.totalorder %s24, 1
    %p63 = scmp.ne.s32.totalorder %s58, %s60
    %p64 = scmp.eq.s32.totalorder %s24, 0
    %p65 = por %p63, %p64
    %p66 = scmp.ne.s32.totalorder %s58, %s60
    %p67 = scmp.eq.s32.totalorder %s29, 1
    %p68 = por %p66, %p67
    %p69 = scmp.ne.s32.totalorder %s60, %s61
    %p70 = scmp.eq.s32.totalorder %s29, 0
    %p71 = por %p69, %p70
    %p72 = scmp.ne.s32.totalorder %s60, %s61
    %p73 = scmp.eq.s32.totalorder %s30, 1
    %p74 = por %p72, %p73
    %p76 = scmp.ne.s32.totalorder %s61, %s75
    %p77 = scmp.eq.s32.totalorder %s30, 0
    %p78 = por %p76, %p77
    %s80 = sadd.s32 %s79, 1
    %p83 = scmp.eq.s32.totalorder %s24, 1
    %p84 = scmp.ne.s32.totalorder %s79, %s81
    %p85 = scmp.eq.s32.totalorder %s24, 0
    %p86 = por %p84, %p85
    %p87 = scmp.ne.s32.totalorder %s79, %s81
    %p88 = scmp.eq.s32.totalorder %s29, 1
    %p89 = por %p87, %p88
    %p90 = scmp.ne.s32.totalorder %s81, %s82
    %p91 = scmp.eq.s32.totalorder %s29, 0
    %p92 = por %p90, %p91
    %p93 = scmp.ne.s32.totalorder %s81, %s82
    %p94 = scmp.eq.s32.totalorder %s30, 1
    %p95 = por %p93, %p94
    %p97 = scmp.ne.s32.totalorder %s82, %s96
    %p98 = scmp.eq.s32.totalorder %s30, 0
    %p99 = por %p97, %p98
    %s101 = sadd.s32 %s100, 1
    %p104 = scmp.eq.s32.totalorder %s24, 1
    %p105 = scmp.ne.s32.totalorder %s100, %s102
    %p106 = scmp.eq.s32.totalorder %s24, 0
    %p107 = por %p105, %p106
    %p108 = scmp.ne.s32.totalorder %s100, %s102
    %p109 = scmp.eq.s32.totalorder %s29, 1
    %p110 = por %p108, %p109
    %p111 = scmp.ne.s32.totalorder %s102, %s103
    %p112 = scmp.eq.s32.totalorder %s29, 0
    %p113 = por %p111, %p112
    %p114 = scmp.ne.s32.totalorder %s102, %s103
    %p115 = scmp.eq.s32.totalorder %s30, 1
    %p116 = por %p114, %p115
    %p118 = scmp.ne.s32.totalorder %s103, %s117
    %p119 = scmp.eq.s32.totalorder %s30, 0
    %p120 = por %p118, %p119
    %s122 = sadd.s32 %s121, 1
    %p125 = scmp.eq.s32.totalorder %s24, 1
    %p126 = scmp.ne.s32.totalorder %s121, %s123
    %p127 = scmp.eq.s32.totalorder %s24, 0
    %p128 = por %p126, %p127
    %p129 = scmp.ne.s32.totalorder %s121, %s123
    %p130 = scmp.eq.s32.totalorder %s29, 1
    %p131 = por %p129, %p130
    %p132 = scmp.ne.s32.totalorder %s123, %s124
    %p133 = scmp.eq.s32.totalorder %s29, 0
    %p134 = por %p132, %p133
    %p135 = scmp.ne.s32.totalorder %s123, %s124
    %p136 = scmp.eq.s32.totalorder %s30, 1
    %p137 = por %p135, %p136
    %p139 = scmp.ne.s32.totalorder %s124, %s138
    %p140 = scmp.eq.s32.totalorder %s30, 0
    %p141 = por %p139, %p140
    %s143 = sadd.s32 %s142, 1
    %p146 = scmp.eq.s32.totalorder %s24, 1
    %p147 = scmp.ne.s32.totalorder %s142, %s144
    %p148 = scmp.eq.s32.totalorder %s24, 0
    %p149 = por %p147, %p148
    %p150 = scmp.ne.s32.totalorder %s142, %s144
    %p151 = scmp.eq.s32.totalorder %s29, 1
    %p152 = por %p150, %p151
    %p153 = scmp.ne.s32.totalorder %s144, %s145
    %p154 = scmp.eq.s32.totalorder %s29, 0
    %p155 = por %p153, %p154
    %p156 = scmp.ne.s32.totalorder %s144, %s145
    %p157 = scmp.eq.s32.totalorder %s30, 1
    %p158 = por %p156, %p157
    %p160 = scmp.ne.s32.totalorder %s145, %s159
    %p161 = scmp.eq.s32.totalorder %s30, 0
    %p162 = por %p160, %p161
    %s164 = sadd.s32 %s163, 1
    %p167 = scmp.eq.s32.totalorder %s24, 1
    %p168 = scmp.ne.s32.totalorder %s163, %s165
    %p169 = scmp.eq.s32.totalorder %s24, 0
    %p170 = por %p168, %p169
    %p171 = scmp.ne.s32.totalorder %s163, %s165
    %p172 = scmp.eq.s32.totalorder %s29, 1
    %p173 = por %p171, %p172
    %p174 = scmp.ne.s32.totalorder %s165, %s166
    %p175 = scmp.eq.s32.totalorder %s29, 0
    %p176 = por %p174, %p175
    %p177 = scmp.ne.s32.totalorder %s165, %s166
    %p178 = scmp.eq.s32.totalorder %s30, 1
    %p179 = por %p177, %p178
    %p181 = scmp.ne.s32.totalorder %s166, %s180
    %p182 = scmp.eq.s32.totalorder %s30, 0
    %p183 = por %p181, %p182
    %s185 = sadd.s32 %s184, 1
    %p188 = scmp.eq.s32.totalorder %s24, 1
    %p189 = scmp.ne.s32.totalorder %s184, %s186
    %p190 = scmp.eq.s32.totalorder %s24, 0
    %p191 = por %p189, %p190
    %p192 = scmp.ne.s32.totalorder %s184, %s186
    %p193 = scmp.eq.s32.totalorder %s29, 1
    %p194 = por %p192, %p193
    %p195 = scmp.ne.s32.totalorder %s186, %s187
    %p196 = scmp.eq.s32.totalorder %s29, 0
    %p197 = por %p195, %p196
    %p198 = scmp.ne.s32.totalorder %s186, %s187
    %p199 = scmp.eq.s32.totalorder %s30, 1
    %p200 = por %p198, %p199
    %p202 = scmp.ne.s32.totalorder %s187, %s201
    %p203 = scmp.eq.s32.totalorder %s30, 0
    %p204 = por %p202, %p203
    %s206 = sadd.s32 %s205, 1
    %p209 = scmp.eq.s32.totalorder %s24, 1
    %p210 = scmp.ne.s32.totalorder %s205, %s207
    %p211 = scmp.eq.s32.totalorder %s24, 0
    %p212 = por %p210, %p211
    %p213 = scmp.ne.s32.totalorder %s205, %s207
    %p214 = scmp.eq.s32.totalorder %s29, 1
    %p215 = por %p213, %p214
    %p216 = scmp.ne.s32.totalorder %s207, %s208
    %p217 = scmp.eq.s32.totalorder %s29, 0
    %p218 = por %p216, %p217
    %p219 = scmp.ne.s32.totalorder %s207, %s208
    %p220 = scmp.eq.s32.totalorder %s30, 1
    %p221 = por %p219, %p220
    %p223 = scmp.ne.s32.totalorder %s208, %s222
    %p224 = scmp.eq.s32.totalorder %s30, 0
    %p225 = por %p223, %p224
    %s227 = sadd.s32 %s226, 1
    %p230 = scmp.eq.s32.totalorder %s24, 1
    %p231 = scmp.ne.s32.totalorder %s226, %s228
    %p232 = scmp.eq.s32.totalorder %s24, 0
    %p233 = por %p231, %p232
    %p234 = scmp.ne.s32.totalorder %s226, %s228
    %p235 = scmp.eq.s32.totalorder %s29, 1
    %p236 = por %p234, %p235
    %p237 = scmp.ne.s32.totalorder %s228, %s229
    %p238 = scmp.eq.s32.totalorder %s29, 0
    %p239 = por %p237, %p238
    %p240 = scmp.ne.s32.totalorder %s228, %s229
    %p241 = scmp.eq.s32.totalorder %s30, 1
    %p242 = por %p240, %p241
    %p244 = scmp.ne.s32.totalorder %s229, %s243
    %p245 = scmp.eq.s32.totalorder %s30, 0
    %p246 = por %p244, %p245
    %s248 = sadd.s32 %s247, 1
    %p251 = scmp.eq.s32.totalorder %s24, 1
    %p252 = scmp.ne.s32.totalorder %s247, %s249
    %p253 = scmp.eq.s32.totalorder %s24, 0
    %p254 = por %p252, %p253
    %p255 = scmp.ne.s32.totalorder %s247, %s249
    %p256 = scmp.eq.s32.totalorder %s29, 1
    %p257 = por %p255, %p256
    %p258 = scmp.ne.s32.totalorder %s249, %s250
    %p259 = scmp.eq.s32.totalorder %s29, 0
    %p260 = por %p258, %p259
    %p261 = scmp.ne.s32.totalorder %s249, %s250
    %p262 = scmp.eq.s32.totalorder %s30, 1
    %p263 = por %p261, %p262
    %p265 = scmp.ne.s32.totalorder %s250, %s264
    %p266 = scmp.eq.s32.totalorder %s30, 0
    %p267 = por %p265, %p266
    %s269 = sadd.s32 %s268, 1
    %p272 = scmp.eq.s32.totalorder %s24, 1
    %p273 = scmp.ne.s32.totalorder %s268, %s270
    %p274 = scmp.eq.s32.totalorder %s24, 0
    %p275 = por %p273, %p274
    %p276 = scmp.ne.s32.totalorder %s268, %s270
    %p277 = scmp.eq.s32.totalorder %s29, 1
    %p278 = por %p276, %p277
    %p279 = scmp.ne.s32.totalorder %s270, %s271
    %p280 = scmp.eq.s32.totalorder %s29, 0
    %p281 = por %p279, %p280
    %p282 = scmp.ne.s32.totalorder %s270, %s271
    %p283 = scmp.eq.s32.totalorder %s30, 1
    %p284 = por %p282, %p283
    %p286 = scmp.ne.s32.totalorder %s271, %s285
    %p287 = scmp.eq.s32.totalorder %s30, 0
    %p288 = por %p286, %p287
    %s290 = sadd.s32 %s289, 1
    %p293 = scmp.eq.s32.totalorder %s24, 1
    %p294 = scmp.ne.s32.totalorder %s289, %s291
    %p295 = scmp.eq.s32.totalorder %s24, 0
    %p296 = por %p294, %p295
    %p297 = scmp.ne.s32.totalorder %s289, %s291
    %p298 = scmp.eq.s32.totalorder %s29, 1
    %p299 = por %p297, %p298
    %p300 = scmp.ne.s32.totalorder %s291, %s292
    %p301 = scmp.eq.s32.totalorder %s29, 0
    %p302 = por %p300, %p301
    %p303 = scmp.ne.s32.totalorder %s291, %s292
    %p304 = scmp.eq.s32.totalorder %s30, 1
    %p305 = por %p303, %p304
    %p307 = scmp.ne.s32.totalorder %s292, %s306
    %p308 = scmp.eq.s32.totalorder %s30, 0
    %p309 = por %p307, %p308
    %s311 = sadd.s32 %s310, 1
    %p314 = scmp.eq.s32.totalorder %s24, 1
    %p315 = scmp.ne.s32.totalorder %s310, %s312
    %p316 = scmp.eq.s32.totalorder %s24, 0
    %p317 = por %p315, %p316
    %p318 = scmp.ne.s32.totalorder %s310, %s312
    %p319 = scmp.eq.s32.totalorder %s29, 1
    %p320 = por %p318, %p319
    %p321 = scmp.ne.s32.totalorder %s312, %s313
    %p322 = scmp.eq.s32.totalorder %s29, 0
    %p323 = por %p321, %p322
    %p324 = scmp.ne.s32.totalorder %s312, %s313
    %p325 = scmp.eq.s32.totalorder %s30, 1
    %p326 = por %p324, %p325
    %p328 = scmp.ne.s32.totalorder %s313, %s327
    %p329 = scmp.eq.s32.totalorder %s30, 0
    %p330 = por %p328, %p329
    %s332 = sadd.s32 %s331, 1
    %p335 = scmp.eq.s32.totalorder %s24, 1
    %p336 = scmp.ne.s32.totalorder %s331, %s333
    %p337 = scmp.eq.s32.totalorder %s24, 0
    %p338 = por %p336, %p337
    %p339 = scmp.ne.s32.totalorder %s331, %s333
    %p340 = scmp.eq.s32.totalorder %s29, 1
    %p341 = por %p339, %p340
    %p342 = scmp.ne.s32.totalorder %s333, %s334
    %p343 = scmp.eq.s32.totalorder %s29, 0
    %p344 = por %p342, %p343
    %p345 = scmp.ne.s32.totalorder %s333, %s334
    %p346 = scmp.eq.s32.totalorder %s30, 1
    %p347 = por %p345, %p346
    %p349 = scmp.ne.s32.totalorder %s334, %s348
    %p350 = scmp.eq.s32.totalorder %s30, 0
    %p351 = por %p349, %p350
    %s353 = sadd.s32 %s352, 1
    %p356 = scmp.eq.s32.totalorder %s24, 1
    %p357 = scmp.ne.s32.totalorder %s352, %s354
    %p358 = scmp.eq.s32.totalorder %s24, 0
    %p359 = por %p357, %p358
    %p360 = scmp.ne.s32.totalorder %s352, %s354
    %p361 = scmp.eq.s32.totalorder %s29, 1
    %p362 = por %p360, %p361
    %p363 = scmp.ne.s32.totalorder %s354, %s355
    %p364 = scmp.eq.s32.totalorder %s29, 0
    %p365 = por %p363, %p364
    %p366 = scmp.ne.s32.totalorder %s354, %s355
    %p367 = scmp.eq.s32.totalorder %s30, 1
    %p368 = por %p366, %p367
    %p370 = scmp.ne.s32.totalorder %s355, %s369
    %p371 = scmp.eq.s32.totalorder %s30, 0
    %p372 = por %p370, %p371
    %s373 = ssub.s32 %s24, %s31
    %p374 = scmp.eq.s32.totalorder %s373, 0
    %s376 = sadd.s32 %s375, 1
    %s377 = scalar_select %p374, %s375, %s376
    %p380 = pneg %p374
    %p381 = scmp.eq.s32.totalorder %s24, 1
    %p382 = por %p380, %p381
    %p383 = scmp.ne.s32.totalorder %s375, %s378
    %p384 = scmp.eq.s32.totalorder %s24, 0
    %p385 = por %p383, %p384
    %p386 = scmp.ne.s32.totalorder %s375, %s378
    %p387 = scmp.eq.s32.totalorder %s29, 1
    %p388 = por %p386, %p387
    %p389 = scmp.ne.s32.totalorder %s378, %s379
    %p390 = scmp.eq.s32.totalorder %s29, 0
    %p391 = por %p389, %p390
    %p392 = scmp.ne.s32.totalorder %s378, %s379
    %p393 = scmp.eq.s32.totalorder %s30, 1
    %p394 = por %p392, %p393
    %p396 = scmp.ne.s32.totalorder %s379, %s395
    %p397 = scmp.eq.s32.totalorder %s30, 0
    %p398 = por %p396, %p397
    %s399 = ssub.s32 %s24, %s31
    %p400 = scmp.eq.s32.totalorder %s399, 0
    %s402 = sadd.s32 %s401, 1
    %s403 = scalar_select %p400, %s401, %s402
    %p406 = pneg %p400
    %p407 = scmp.eq.s32.totalorder %s24, 1
    %p408 = por %p406, %p407
    %p409 = scmp.ne.s32.totalorder %s401, %s404
    %p410 = scmp.eq.s32.totalorder %s24, 0
    %p411 = por %p409, %p410
    %p412 = scmp.ne.s32.totalorder %s401, %s404
    %p413 = scmp.eq.s32.totalorder %s29, 1
    %p414 = por %p412, %p413
    %p415 = scmp.ne.s32.totalorder %s404, %s405
    %p416 = scmp.eq.s32.totalorder %s29, 0
    %p417 = por %p415, %p416
    %p418 = scmp.ne.s32.totalorder %s404, %s405
    %p419 = scmp.eq.s32.totalorder %s30, 1
    %p420 = por %p418, %p419
    %p422 = scmp.ne.s32.totalorder %s405, %s421
    %p423 = scmp.eq.s32.totalorder %s30, 0
    %p424 = por %p422, %p423
    %p425 = scmp.le.s32.totalorder 1, %s24
    %p426 = scmp.lt.s32.totalorder %s24, 3
    %p427 = pnand %p425, %p426
    %p428 = pneg %p427
    // Predicated region
    $region9: #{pixel_classification_forward.1} parent=5 // pred_check
      _
    $region10: #{pixel_classification_forward.1} parent=5 // pred_check_branch
      %430 = sbr.rel (%p427) target = $region12
    $region11: #{pixel_classification_forward.1} parent=5 // pred_region
      %s431 = ssub.s32 %s24, 1
      // Predicated region
      $region13: #{pixel_classification_forward.1} parent=11 // pred_check
        %p432 = pneg %p71
      $region14: #{pixel_classification_forward.1} parent=11 // pred_check_branch
        %434 = sbr.rel (%p432) target = $region16
      $region15: #{pixel_classification_forward.1} parent=11 // pred_region
        _
      $region16: #{pixel_classification_forward.1} parent=11 // pred_fallthru
        _
      // Predicated region
      $region17: #{pixel_classification_forward.1} parent=11 // pred_check
        %p435 = pneg %p92
      $region18: #{pixel_classification_forward.1} parent=11 // pred_check_branch
        %437 = sbr.rel (%p435) target = $region20
      $region19: #{pixel_classification_forward.1} parent=11 // pred_region
        _
      $region20: #{pixel_classification_forward.1} parent=11 // pred_fallthru
        _
      // Predicated region
      $region21: #{pixel_classification_forward.1} parent=11 // pred_check
        %p438 = pneg %p113
      $region22: #{pixel_classification_forward.1} parent=11 // pred_check_branch
        %440 = sbr.rel (%p438) target = $region24
      $region23: #{pixel_classification_forward.1} parent=11 // pred_region
        _
      $region24: #{pixel_classification_forward.1} parent=11 // pred_fallthru
        _
      // Predicated region
      $region25: #{pixel_classification_forward.1} parent=11 // pred_check
        %p441 = pneg %p134
      $region26: #{pixel_classification_forward.1} parent=11 // pred_check_branch
        %443 = sbr.rel (%p441) target = $region28
      $region27: #{pixel_classification_forward.1} parent=11 // pred_region
        _
      $region28: #{pixel_classification_forward.1} parent=11 // pred_fallthru
        _
      // Predicated region
      $region29: #{pixel_classification_forward.1} parent=11 // pred_check
        %p444 = pneg %p155
      $region30: #{pixel_classification_forward.1} parent=11 // pred_check_branch
        %446 = sbr.rel (%p444) target = $region32
      $region31: #{pixel_classification_forward.1} parent=11 // pred_region
        _
      $region32: #{pixel_classification_forward.1} parent=11 // pred_fallthru
        _
      // Predicated region
      $region33: #{pixel_classification_forward.1} parent=11 // pred_check
        %p447 = pneg %p176
      $region34: #{pixel_classification_forward.1} parent=11 // pred_check_branch
        %449 = sbr.rel (%p447) target = $region36
      $region35: #{pixel_classification_forward.1} parent=11 // pred_region
        _
      $region36: #{pixel_classification_forward.1} parent=11 // pred_fallthru
        _
      // Predicated region
      $region37: #{pixel_classification_forward.1} parent=11 // pred_check
        %p450 = pneg %p197
      $region38: #{pixel_classification_forward.1} parent=11 // pred_check_branch
        %452 = sbr.rel (%p450) target = $region40
      $region39: #{pixel_classification_forward.1} parent=11 // pred_region
        _
      $region40: #{pixel_classification_forward.1} parent=11 // pred_fallthru
        _
      // Predicated region
      $region41: #{pixel_classification_forward.1} parent=11 // pred_check
        %p453 = pneg %p218
      $region42: #{pixel_classification_forward.1} parent=11 // pred_check_branch
        %455 = sbr.rel (%p453) target = $region44
      $region43: #{pixel_classification_forward.1} parent=11 // pred_region
        _
      $region44: #{pixel_classification_forward.1} parent=11 // pred_fallthru
        _
      // Predicated region
      $region45: #{pixel_classification_forward.1} parent=11 // pred_check
        %p456 = pneg %p239
      $region46: #{pixel_classification_forward.1} parent=11 // pred_check_branch
        %458 = sbr.rel (%p456) target = $region48
      $region47: #{pixel_classification_forward.1} parent=11 // pred_region
        _
      $region48: #{pixel_classification_forward.1} parent=11 // pred_fallthru
        _
      // Predicated region
      $region49: #{pixel_classification_forward.1} parent=11 // pred_check
        %p459 = pneg %p260
      $region50: #{pixel_classification_forward.1} parent=11 // pred_check_branch
        %461 = sbr.rel (%p459) target = $region52
      $region51: #{pixel_classification_forward.1} parent=11 // pred_region
        _
      $region52: #{pixel_classification_forward.1} parent=11 // pred_fallthru
        _
      // Predicated region
      $region53: #{pixel_classification_forward.1} parent=11 // pred_check
        %p462 = pneg %p281
      $region54: #{pixel_classification_forward.1} parent=11 // pred_check_branch
        %464 = sbr.rel (%p462) target = $region56
      $region55: #{pixel_classification_forward.1} parent=11 // pred_region
        _
      $region56: #{pixel_classification_forward.1} parent=11 // pred_fallthru
        _
      // Predicated region
      $region57: #{pixel_classification_forward.1} parent=11 // pred_check
        %p465 = pneg %p302
      $region58: #{pixel_classification_forward.1} parent=11 // pred_check_branch
        %467 = sbr.rel (%p465) target = $region60
      $region59: #{pixel_classification_forward.1} parent=11 // pred_region
        _
      $region60: #{pixel_classification_forward.1} parent=11 // pred_fallthru
        _
      // Predicated region
      $region61: #{pixel_classification_forward.1} parent=11 // pred_check
        %p468 = pneg %p323
      $region62: #{pixel_classification_forward.1} parent=11 // pred_check_branch
        %470 = sbr.rel (%p468) target = $region64
      $region63: #{pixel_classification_forward.1} parent=11 // pred_region
        _
      $region64: #{pixel_classification_forward.1} parent=11 // pred_fallthru
        _
      // Predicated region
      $region65: #{pixel_classification_forward.1} parent=11 // pred_check
        %p471 = pneg %p344
      $region66: #{pixel_classification_forward.1} parent=11 // pred_check_branch
        %473 = sbr.rel (%p471) target = $region68
      $region67: #{pixel_classification_forward.1} parent=11 // pred_region
        _
      $region68: #{pixel_classification_forward.1} parent=11 // pred_fallthru
        _
      // Predicated region
      $region69: #{pixel_classification_forward.1} parent=11 // pred_check
        %p474 = pneg %p365
      $region70: #{pixel_classification_forward.1} parent=11 // pred_check_branch
        %476 = sbr.rel (%p474) target = $region72
      $region71: #{pixel_classification_forward.1} parent=11 // pred_region
        _
      $region72: #{pixel_classification_forward.1} parent=11 // pred_fallthru
        _
    $region12: #{pixel_classification_forward.1} parent=5 // pred_fallthru
      _
    %p477 = scmp.lt.s32.totalorder %s24, 2
    // Predicated region
    $region73: #{pixel_classification_forward.1} parent=5 // pred_check
      %p478 = pneg %p477
    $region74: #{pixel_classification_forward.1} parent=5 // pred_check_branch
      %480 = sbr.rel (%p478) target = $region76
    $region75: #{pixel_classification_forward.1} parent=5 // pred_region
      // Predicated region
      $region77: #{pixel_classification_forward.1} parent=75 // pred_check
        %p481 = pneg %p44
      $region78: #{pixel_classification_forward.1} parent=75 // pred_check_branch
        %483 = sbr.rel (%p481) target = $region80
      $region79: #{pixel_classification_forward.1} parent=75 // pred_region
        %p484 = scmp.lt.s32.totalorder %s24, 1
        %s485 = scalar_select %p484, %s24, 1
        %s486 = smul.addr %s485, 32
        %s487 = smul.addr %s486, 4
        %s488 = scalar_lea.vmem %s0, %s487
      $region80: #{pixel_classification_forward.1} parent=75 // pred_fallthru
        _
    $region76: #{pixel_classification_forward.1} parent=5 // pred_fallthru
      _
    %p489 = scmp.le.s32.totalorder 1, %s24
    %p490 = scmp.lt.s32.totalorder %s24, 3
    %p491 = pnand %p489, %p490
    %p492 = pneg %p491
    // Predicated region
    $region81: #{pixel_classification_forward.1} parent=5 // pred_check
      _
    $region82: #{pixel_classification_forward.1} parent=5 // pred_check_branch
      %494 = sbr.rel (%p491) target = $region84
    $region83: #{pixel_classification_forward.1} parent=5 // pred_region
      %s495 = ssub.s32 %s24, 1
      %p496 = scmp.lt.s32.totalorder %s29, 1
      %s497 = scalar_select %p496, %s29, 1
      %s498 = smul.addr %s497, 32
      %s499 = smul.addr %s498, 4
      %s500 = scalar_lea.vmem %s0, %s499
      %p501 = pneg %p50
      %p502 = pneg %p47
      %p503 = pneg %p71
      %p504 = pneg %p68
      %p505 = pneg %p92
      %p506 = pneg %p89
      %p507 = pneg %p113
      %p508 = pneg %p110
      %p509 = pneg %p134
      %p510 = pneg %p131
      %p511 = pneg %p155
      %p512 = pneg %p152
      %p513 = pneg %p176
      %p514 = pneg %p173
      %p515 = pneg %p197
      %p516 = pneg %p194
      %p517 = pneg %p218
      %p518 = pneg %p215
      %p519 = pneg %p239
      %p520 = pneg %p236
      %p521 = pneg %p260
      %p522 = pneg %p257
      %p523 = pneg %p281
      %p524 = pneg %p278
      %p525 = pneg %p302
      %p526 = pneg %p299
      %p527 = pneg %p323
      %p528 = pneg %p320
      %p529 = pneg %p344
      %p530 = pneg %p341
      %p531 = pneg %p365
      %p532 = pneg %p362
      %p533 = pneg %p391
      %p534 = pneg %p388
      %p535 = scmp.lt.s32.totalorder %s29, 1
      %s536 = scalar_select %p535, %s29, 1
      %s537 = smul.addr %s536, 32
      %s538 = smul.addr %s537, 8
      %s539 = scalar_lea.vmem %s16, %s538
      %p540 = pneg %p417
      %p541 = pneg %p414
      %p542 = scmp.lt.s32.totalorder %s29, 1
      %s543 = scalar_select %p542, %s29, 1
      %s544 = smul.addr %s543, 32
      %s545 = smul.addr %s544, 8
      %s546 = scalar_lea.vmem %s17, %s545
      %p547 = scmp.lt.s32.totalorder %s29, 1
      %s548 = scalar_select %p547, %s29, 1
      %s549 = smul.addr %s548, 32
      %s550 = smul.addr %s549, 4
      %s551 = scalar_lea.vmem %s0, %s550
      %p552 = scmp.lt.s32.totalorder %s29, 1
      %s553 = scalar_select %p552, %s29, 1
      %s554 = smul.addr %s553, 32
      %s555 = smul.addr %s554, 8
      %s556 = scalar_lea.vmem %s16, %s555
      %p557 = scmp.lt.s32.totalorder %s29, 1
      %s558 = scalar_select %p557, %s29, 1
      %s559 = smul.addr %s558, 32
      %s560 = smul.addr %s559, 8
      %s561 = scalar_lea.vmem %s17, %s560
      %v563 = vld [vmem:[%s551] sm:$0xf]
      %v564 = vld [vmem:[%s551 + $0x4] sm:$0xf]
      %v565 = vld [vmem:[%s551 + $0x8] sm:$0xf]
      %v566 = vld [vmem:[%s551 + $0xc] sm:$0xf]
      %v567 = vld [vmem:[%s551 + $0x10] sm:$0xf]
      %v568 = vld [vmem:[%s551 + $0x14] sm:$0xf]
      %v569 = vld [vmem:[%s551 + $0x18] sm:$0xf]
      %v570 = vld [vmem:[%s551 + $0x1c] sm:$0xf]
      %v571 = vld [vmem:[%s551 + $0x20] sm:$0xf]
      %v572 = vld [vmem:[%s551 + $0x24] sm:$0xf]
      %v573 = vld [vmem:[%s551 + $0x28] sm:$0xf]
      %v574 = vld [vmem:[%s551 + $0x2c] sm:$0xf]
      %v575 = vld [vmem:[%s551 + $0x30] sm:$0xf]
      %v576 = vld [vmem:[%s551 + $0x34] sm:$0xf]
      %v577 = vld [vmem:[%s551 + $0x38] sm:$0xf]
      %v578 = vld [vmem:[%s551 + $0x3c] sm:$0xf]
      %v579 = vld [vmem:[%s551 + $0x40] sm:$0xf]
      %v580 = vld [vmem:[%s551 + $0x44] sm:$0xf]
      %v581 = vld [vmem:[%s551 + $0x48] sm:$0xf]
      %v582 = vld [vmem:[%s551 + $0x4c] sm:$0xf]
      %v583 = vld [vmem:[%s551 + $0x50] sm:$0xf]
      %v584 = vld [vmem:[%s551 + $0x54] sm:$0xf]
      %v585 = vld [vmem:[%s551 + $0x58] sm:$0xf]
      %v586 = vld [vmem:[%s551 + $0x5c] sm:$0xf]
      %v587 = vld [vmem:[%s551 + $0x60] sm:$0xf]
      %v588 = vld [vmem:[%s551 + $0x64] sm:$0xf]
      %v589 = vld [vmem:[%s551 + $0x68] sm:$0xf]
      %v590 = vld [vmem:[%s551 + $0x6c] sm:$0xf]
      %v591 = vld [vmem:[%s551 + $0x70] sm:$0xf]
      %v592 = vld [vmem:[%s551 + $0x74] sm:$0xf]
      %v593 = vld [vmem:[%s551 + $0x78] sm:$0xf]
      %v594 = vld [vmem:[%s551 + $0x7c] sm:$0xf]
      %v627 = vunpack.c.l.b16 %v563
      %v628 = vunpack.c.l.b16 %v564
      %v629 = vunpack.c.l.b16 %v565
      %v630 = vunpack.c.l.b16 %v566
      %v631 = vunpack.c.l.b16 %v567
      %v632 = vunpack.c.l.b16 %v568
      %v633 = vunpack.c.l.b16 %v569
      %v634 = vunpack.c.l.b16 %v570
      %v635 = vunpack.c.l.b16 %v571
      %v636 = vunpack.c.l.b16 %v572
      %v637 = vunpack.c.l.b16 %v573
      %v638 = vunpack.c.l.b16 %v574
      %v639 = vunpack.c.l.b16 %v575
      %v640 = vunpack.c.l.b16 %v576
      %v641 = vunpack.c.l.b16 %v577
      %v642 = vunpack.c.l.b16 %v578
      %v643 = vunpack.c.l.b16 %v579
      %v644 = vunpack.c.l.b16 %v580
      %v645 = vunpack.c.l.b16 %v581
      %v646 = vunpack.c.l.b16 %v582
      %v647 = vunpack.c.l.b16 %v583
      %v648 = vunpack.c.l.b16 %v584
      %v649 = vunpack.c.l.b16 %v585
      %v650 = vunpack.c.l.b16 %v586
      %v651 = vunpack.c.l.b16 %v587
      %v652 = vunpack.c.l.b16 %v588
      %v653 = vunpack.c.l.b16 %v589
      %v654 = vunpack.c.l.b16 %v590
      %v655 = vunpack.c.l.b16 %v591
      %v656 = vunpack.c.l.b16 %v592
      %v657 = vunpack.c.l.b16 %v593
      %v658 = vunpack.c.l.b16 %v594
      %v659 = vpack.c.b16 %v628, %v627
      %v660 = vpack.c.b16 %v630, %v629
      %v661 = vpack.c.b16 %v632, %v631
      %v662 = vpack.c.b16 %v634, %v633
      %v663 = vpack.c.b16 %v636, %v635
      %v664 = vpack.c.b16 %v638, %v637
      %v665 = vpack.c.b16 %v640, %v639
      %v666 = vpack.c.b16 %v642, %v641
      %v667 = vpack.c.b16 %v644, %v643
      %v668 = vpack.c.b16 %v646, %v645
      %v669 = vpack.c.b16 %v648, %v647
      %v670 = vpack.c.b16 %v650, %v649
      %v671 = vpack.c.b16 %v652, %v651
      %v672 = vpack.c.b16 %v654, %v653
      %v673 = vpack.c.b16 %v656, %v655
      %v674 = vpack.c.b16 %v658, %v657
      %v676 = vshrl.u32 0, 16
      %v678 = vrot.slane %v676, 7
      %v679 = vshll.u32 0, 16
      %v681 = vor.u32 %v678, %v679
      %v683 = vshrl.u32 %v659, 16
      %v685 = vrot.slane %v683, 7
      %v686 = vshll.u32 %v659, 16
      %v688 = vor.u32 %v685, %v686
      %v690 = vshrl.u32 %v660, 16
      %v692 = vrot.slane %v690, 7
      %v693 = vshll.u32 %v660, 16
      %v695 = vor.u32 %v692, %v693
      %v697 = vshrl.u32 %v661, 16
      %v699 = vrot.slane %v697, 7
      %v700 = vshll.u32 %v661, 16
      %v702 = vor.u32 %v699, %v700
      %v704 = vshrl.u32 %v662, 16
      %v706 = vrot.slane %v704, 7
      %v707 = vshll.u32 %v662, 16
      %v709 = vor.u32 %v706, %v707
      %v711 = vshrl.u32 %v663, 16
      %v713 = vrot.slane %v711, 7
      %v714 = vshll.u32 %v663, 16
      %v716 = vor.u32 %v713, %v714
      %v718 = vshrl.u32 %v664, 16
      %v720 = vrot.slane %v718, 7
      %v721 = vshll.u32 %v664, 16
      %v723 = vor.u32 %v720, %v721
      %v725 = vshrl.u32 %v665, 16
      %v727 = vrot.slane %v725, 7
      %v728 = vshll.u32 %v665, 16
      %v730 = vor.u32 %v727, %v728
      %v732 = vshrl.u32 %v666, 16
      %v734 = vrot.slane %v732, 7
      %v735 = vshll.u32 %v666, 16
      %v737 = vor.u32 %v734, %v735
      %v739 = vshrl.u32 %v667, 16
      %v741 = vrot.slane %v739, 7
      %v742 = vshll.u32 %v667, 16
      %v744 = vor.u32 %v741, %v742
      %v746 = vshrl.u32 %v668, 16
      %v748 = vrot.slane %v746, 7
      %v749 = vshll.u32 %v668, 16
      %v751 = vor.u32 %v748, %v749
      %v753 = vshrl.u32 %v669, 16
      %v755 = vrot.slane %v753, 7
      %v756 = vshll.u32 %v669, 16
      %v758 = vor.u32 %v755, %v756
      %v760 = vshrl.u32 %v670, 16
      %v762 = vrot.slane %v760, 7
      %v763 = vshll.u32 %v670, 16
      %v765 = vor.u32 %v762, %v763
      %v767 = vshrl.u32 %v671, 16
      %v769 = vrot.slane %v767, 7
      %v770 = vshll.u32 %v671, 16
      %v772 = vor.u32 %v769, %v770
      %v774 = vshrl.u32 %v672, 16
      %v776 = vrot.slane %v774, 7
      %v777 = vshll.u32 %v672, 16
      %v779 = vor.u32 %v776, %v777
      %v781 = vshrl.u32 %v673, 16
      %v783 = vrot.slane %v781, 7
      %v784 = vshll.u32 %v673, 16
      %v786 = vor.u32 %v783, %v784
      %v788 = vshrl.u32 %v674, 16
      %v790 = vrot.slane %v788, 7
      %v791 = vshll.u32 %v674, 16
      %v793 = vor.u32 %v790, %v791
      %vm828 = vcmask 1040384
      %vm829 = vsmask.f32 256
      %vm830 = vmand %vm828, %vm829
      %v831 = vsel %vm830, 0, %v681
      %v832 = vsel %vm830, 0, %v688
      %v833 = vsel %vm830, 0, %v695
      %v834 = vsel %vm830, 0, %v702
      %v835 = vsel %vm830, 0, %v709
      %v836 = vsel %vm830, 0, %v716
      %v837 = vsel %vm830, 0, %v723
      %v838 = vsel %vm830, 0, %v730
      %v839 = vsel %vm830, 0, %v737
      %v840 = vsel %vm830, 0, %v744
      %v841 = vsel %vm830, 0, %v751
      %v842 = vsel %vm830, 0, %v758
      %v843 = vsel %vm830, 0, %v765
      %v844 = vsel %vm830, 0, %v772
      %v845 = vsel %vm830, 0, %v779
      %v846 = vsel %vm830, 0, %v786
      %v847 = vsel %vm830, 0, %v793
      %v848 = vsel %vm830, %v678, 0
      %v849 = vsel %vm830, %v685, 0
      %v850 = vsel %vm830, %v692, 0
      %v851 = vsel %vm830, %v699, 0
      %v852 = vsel %vm830, %v706, 0
      %v853 = vsel %vm830, %v713, 0
      %v854 = vsel %vm830, %v720, 0
      %v855 = vsel %vm830, %v727, 0
      %v856 = vsel %vm830, %v734, 0
      %v857 = vsel %vm830, %v741, 0
      %v858 = vsel %vm830, %v748, 0
      %v859 = vsel %vm830, %v755, 0
      %v860 = vsel %vm830, %v762, 0
      %v861 = vsel %vm830, %v769, 0
      %v862 = vsel %vm830, %v776, 0
      %v863 = vsel %vm830, %v783, 0
      %v864 = vsel %vm830, %v790, 0
      %vm865 = vsmask.f32 7424
      %v867 = vshrl.u32 %v831, 16
      %v869 = vshll.u32 %v831, 16
      %v871 = vrot.slane %v869, 1
      %v872 = vor.u32 %v867, %v871
      %v874 = vshll.u32 %v848, 16
      %v876 = vrot.slane %v874, 1
      %v877 = vsel %vm865, %v872, %v876
      %v879 = vshrl.u32 %v832, 16
      %v881 = vshll.u32 %v832, 16
      %v883 = vrot.slane %v881, 1
      %v884 = vor.u32 %v879, %v883
      %v886 = vshll.u32 %v849, 16
      %v888 = vrot.slane %v886, 1
      %v889 = vsel %vm865, %v884, %v888
      %v891 = vshrl.u32 %v833, 16
      %v893 = vshll.u32 %v833, 16
      %v895 = vrot.slane %v893, 1
      %v896 = vor.u32 %v891, %v895
      %v898 = vshll.u32 %v850, 16
      %v900 = vrot.slane %v898, 1
      %v901 = vsel %vm865, %v896, %v900
      %v903 = vshrl.u32 %v834, 16
      %v905 = vshll.u32 %v834, 16
      %v907 = vrot.slane %v905, 1
      %v908 = vor.u32 %v903, %v907
      %v910 = vshll.u32 %v851, 16
      %v912 = vrot.slane %v910, 1
      %v913 = vsel %vm865, %v908, %v912
      %v915 = vshrl.u32 %v835, 16
      %v917 = vshll.u32 %v835, 16
      %v919 = vrot.slane %v917, 1
      %v920 = vor.u32 %v915, %v919
      %v922 = vshll.u32 %v852, 16
      %v924 = vrot.slane %v922, 1
      %v925 = vsel %vm865, %v920, %v924
      %v927 = vshrl.u32 %v836, 16
      %v929 = vshll.u32 %v836, 16
      %v931 = vrot.slane %v929, 1
      %v932 = vor.u32 %v927, %v931
      %v934 = vshll.u32 %v853, 16
      %v936 = vrot.slane %v934, 1
      %v937 = vsel %vm865, %v932, %v936
      %v939 = vshrl.u32 %v837, 16
      %v941 = vshll.u32 %v837, 16
      %v943 = vrot.slane %v941, 1
      %v944 = vor.u32 %v939, %v943
      %v946 = vshll.u32 %v854, 16
      %v948 = vrot.slane %v946, 1
      %v949 = vsel %vm865, %v944, %v948
      %v951 = vshrl.u32 %v838, 16
      %v953 = vshll.u32 %v838, 16
      %v955 = vrot.slane %v953, 1
      %v956 = vor.u32 %v951, %v955
      %v958 = vshll.u32 %v855, 16
      %v960 = vrot.slane %v958, 1
      %v961 = vsel %vm865, %v956, %v960
      %v963 = vshrl.u32 %v839, 16
      %v965 = vshll.u32 %v839, 16
      %v967 = vrot.slane %v965, 1
      %v968 = vor.u32 %v963, %v967
      %v970 = vshll.u32 %v856, 16
      %v972 = vrot.slane %v970, 1
      %v973 = vsel %vm865, %v968, %v972
      %v975 = vshrl.u32 %v840, 16
      %v977 = vshll.u32 %v840, 16
      %v979 = vrot.slane %v977, 1
      %v980 = vor.u32 %v975, %v979
      %v982 = vshll.u32 %v857, 16
      %v984 = vrot.slane %v982, 1
      %v985 = vsel %vm865, %v980, %v984
      %v987 = vshrl.u32 %v841, 16
      %v989 = vshll.u32 %v841, 16
      %v991 = vrot.slane %v989, 1
      %v992 = vor.u32 %v987, %v991
      %v994 = vshll.u32 %v858, 16
      %v996 = vrot.slane %v994, 1
      %v997 = vsel %vm865, %v992, %v996
      %v999 = vshrl.u32 %v842, 16
      %v1001 = vshll.u32 %v842, 16
      %v1003 = vrot.slane %v1001, 1
      %v1004 = vor.u32 %v999, %v1003
      %v1006 = vshll.u32 %v859, 16
      %v1008 = vrot.slane %v1006, 1
      %v1009 = vsel %vm865, %v1004, %v1008
      %v1011 = vshrl.u32 %v843, 16
      %v1013 = vshll.u32 %v843, 16
      %v1015 = vrot.slane %v1013, 1
      %v1016 = vor.u32 %v1011, %v1015
      %v1018 = vshll.u32 %v860, 16
      %v1020 = vrot.slane %v1018, 1
      %v1021 = vsel %vm865, %v1016, %v1020
      %v1023 = vshrl.u32 %v844, 16
      %v1025 = vshll.u32 %v844, 16
      %v1027 = vrot.slane %v1025, 1
      %v1028 = vor.u32 %v1023, %v1027
      %v1030 = vshll.u32 %v861, 16
      %v1032 = vrot.slane %v1030, 1
      %v1033 = vsel %vm865, %v1028, %v1032
      %v1035 = vshrl.u32 %v845, 16
      %v1037 = vshll.u32 %v845, 16
      %v1039 = vrot.slane %v1037, 1
      %v1040 = vor.u32 %v1035, %v1039
      %v1042 = vshll.u32 %v862, 16
      %v1044 = vrot.slane %v1042, 1
      %v1045 = vsel %vm865, %v1040, %v1044
      %v1047 = vshrl.u32 %v846, 16
      %v1049 = vshll.u32 %v846, 16
      %v1051 = vrot.slane %v1049, 1
      %v1052 = vor.u32 %v1047, %v1051
      %v1054 = vshll.u32 %v863, 16
      %v1056 = vrot.slane %v1054, 1
      %v1057 = vsel %vm865, %v1052, %v1056
      %vm1090 = vcmask 1046528
      %v1091 = vrot.slane %v831, 1
      %v1092 = vrot.slane %v848, 1
      %v1093 = vsel %vm1090, %v1091, %v1092
      %v1094 = vrot.slane %v832, 1
      %v1095 = vrot.slane %v849, 1
      %v1096 = vsel %vm1090, %v1094, %v1095
      %v1097 = vrot.slane %v833, 1
      %v1098 = vrot.slane %v850, 1
      %v1099 = vsel %vm1090, %v1097, %v1098
      %v1100 = vrot.slane %v834, 1
      %v1101 = vrot.slane %v851, 1
      %v1102 = vsel %vm1090, %v1100, %v1101
      %v1103 = vrot.slane %v835, 1
      %v1104 = vrot.slane %v852, 1
      %v1105 = vsel %vm1090, %v1103, %v1104
      %v1106 = vrot.slane %v836, 1
      %v1107 = vrot.slane %v853, 1
      %v1108 = vsel %vm1090, %v1106, %v1107
      %v1109 = vrot.slane %v837, 1
      %v1110 = vrot.slane %v854, 1
      %v1111 = vsel %vm1090, %v1109, %v1110
      %v1112 = vrot.slane %v838, 1
      %v1113 = vrot.slane %v855, 1
      %v1114 = vsel %vm1090, %v1112, %v1113
      %v1115 = vrot.slane %v839, 1
      %v1116 = vrot.slane %v856, 1
      %v1117 = vsel %vm1090, %v1115, %v1116
      %v1118 = vrot.slane %v840, 1
      %v1119 = vrot.slane %v857, 1
      %v1120 = vsel %vm1090, %v1118, %v1119
      %v1121 = vrot.slane %v841, 1
      %v1122 = vrot.slane %v858, 1
      %v1123 = vsel %vm1090, %v1121, %v1122
      %v1124 = vrot.slane %v842, 1
      %v1125 = vrot.slane %v859, 1
      %v1126 = vsel %vm1090, %v1124, %v1125
      %v1127 = vrot.slane %v843, 1
      %v1128 = vrot.slane %v860, 1
      %v1129 = vsel %vm1090, %v1127, %v1128
      %v1130 = vrot.slane %v844, 1
      %v1131 = vrot.slane %v861, 1
      %v1132 = vsel %vm1090, %v1130, %v1131
      %v1133 = vrot.slane %v845, 1
      %v1134 = vrot.slane %v862, 1
      %v1135 = vsel %vm1090, %v1133, %v1134
      %v1136 = vrot.slane %v846, 1
      %v1137 = vrot.slane %v863, 1
      %v1138 = vsel %vm1090, %v1136, %v1137
      %v1140 = vshrl.u32 %v847, 16
      %v1142 = vshll.u32 %v847, 16
      %v1144 = vrot.slane %v1142, 1
      %v1145 = vor.u32 %v1140, %v1144
      %v1147 = vshll.u32 %v864, 16
      %v1149 = vrot.slane %v1147, 1
      %v1150 = vsel %vm865, %v1145, %v1149
      %v1153 = vrot.slane %v847, 1
      %v1154 = vrot.slane %v864, 1
      %v1155 = vsel %vm1090, %v1153, %v1154
      %1156 = vrot.lane.b32.xlu0 %v877, 8
      %v1157 = vpop.permute.xlu0 %1156
      %1158 = vrot.lane.b32.xlu0 %v889, 8
      %v1159 = vpop.permute.xlu0 %1158
      %1160 = vrot.lane.b32.xlu0 %v901, 8
      %v1161 = vpop.permute.xlu0 %1160
      %1162 = vrot.lane.b32.xlu0 %v913, 8
      %v1163 = vpop.permute.xlu0 %1162
      %1164 = vrot.lane.b32.xlu0 %v925, 8
      %v1165 = vpop.permute.xlu0 %1164
      %1166 = vrot.lane.b32.xlu0 %v937, 8
      %v1167 = vpop.permute.xlu0 %1166
      %1168 = vrot.lane.b32.xlu0 %v949, 8
      %v1169 = vpop.permute.xlu0 %1168
      %1170 = vrot.lane.b32.xlu0 %v961, 8
      %v1171 = vpop.permute.xlu0 %1170
      %1172 = vrot.lane.b32.xlu0 %v973, 8
      %v1173 = vpop.permute.xlu0 %1172
      %1174 = vrot.lane.b32.xlu0 %v985, 8
      %v1175 = vpop.permute.xlu0 %1174
      %1176 = vrot.lane.b32.xlu0 %v997, 8
      %v1177 = vpop.permute.xlu0 %1176
      %1178 = vrot.lane.b32.xlu0 %v1009, 8
      %v1179 = vpop.permute.xlu0 %1178
      %1180 = vrot.lane.b32.xlu0 %v1021, 8
      %v1181 = vpop.permute.xlu0 %1180
      %1182 = vrot.lane.b32.xlu0 %v1033, 8
      %v1183 = vpop.permute.xlu0 %1182
      %1184 = vrot.lane.b32.xlu0 %v1045, 8
      %v1185 = vpop.permute.xlu0 %1184
      %1186 = vrot.lane.b32.xlu0 %v1057, 8
      %v1187 = vpop.permute.xlu0 %1186
      %1188 = vrot.lane.b32.xlu0 %v1093, 16
      %v1189 = vpop.permute.xlu0 %1188
      %1190 = vrot.lane.b32.xlu0 %v1096, 16
      %v1191 = vpop.permute.xlu0 %1190
      %1192 = vrot.lane.b32.xlu0 %v1099, 16
      %v1193 = vpop.permute.xlu0 %1192
      %1194 = vrot.lane.b32.xlu0 %v1102, 16
      %v1195 = vpop.permute.xlu0 %1194
      %1196 = vrot.lane.b32.xlu0 %v1105, 16
      %v1197 = vpop.permute.xlu0 %1196
      %1198 = vrot.lane.b32.xlu0 %v1108, 16
      %v1199 = vpop.permute.xlu0 %1198
      %1200 = vrot.lane.b32.xlu0 %v1111, 16
      %v1201 = vpop.permute.xlu0 %1200
      %1202 = vrot.lane.b32.xlu0 %v1114, 16
      %v1203 = vpop.permute.xlu0 %1202
      %1204 = vrot.lane.b32.xlu0 %v1117, 16
      %v1205 = vpop.permute.xlu0 %1204
      %1206 = vrot.lane.b32.xlu0 %v1120, 16
      %v1207 = vpop.permute.xlu0 %1206
      %1208 = vrot.lane.b32.xlu0 %v1123, 16
      %v1209 = vpop.permute.xlu0 %1208
      %1210 = vrot.lane.b32.xlu0 %v1126, 16
      %v1211 = vpop.permute.xlu0 %1210
      %1212 = vrot.lane.b32.xlu0 %v1129, 16
      %v1213 = vpop.permute.xlu0 %1212
      %1214 = vrot.lane.b32.xlu0 %v1132, 16
      %v1215 = vpop.permute.xlu0 %1214
      %1216 = vrot.lane.b32.xlu0 %v1135, 16
      %v1217 = vpop.permute.xlu0 %1216
      %1218 = vrot.lane.b32.xlu0 %v1138, 16
      %v1219 = vpop.permute.xlu0 %1218
      %1220 = vrot.lane.b32.xlu0 %v832, 24
      %v1221 = vpop.permute.xlu0 %1220
      %1222 = vrot.lane.b32.xlu0 %v833, 24
      %v1223 = vpop.permute.xlu0 %1222
      %1224 = vrot.lane.b32.xlu0 %v834, 24
      %v1225 = vpop.permute.xlu0 %1224
      %1226 = vrot.lane.b32.xlu0 %v835, 24
      %v1227 = vpop.permute.xlu0 %1226
      %1228 = vrot.lane.b32.xlu0 %v836, 24
      %v1229 = vpop.permute.xlu0 %1228
      %1230 = vrot.lane.b32.xlu0 %v837, 24
      %v1231 = vpop.permute.xlu0 %1230
      %1232 = vrot.lane.b32.xlu0 %v838, 24
      %v1233 = vpop.permute.xlu0 %1232
      %1234 = vrot.lane.b32.xlu0 %v839, 24
      %v1235 = vpop.permute.xlu0 %1234
      %1236 = vrot.lane.b32.xlu0 %v840, 24
      %v1237 = vpop.permute.xlu0 %1236
      %1238 = vrot.lane.b32.xlu0 %v841, 24
      %v1239 = vpop.permute.xlu0 %1238
      %1240 = vrot.lane.b32.xlu0 %v842, 24
      %v1241 = vpop.permute.xlu0 %1240
      %1242 = vrot.lane.b32.xlu0 %v843, 24
      %v1243 = vpop.permute.xlu0 %1242
      %1244 = vrot.lane.b32.xlu0 %v844, 24
      %v1245 = vpop.permute.xlu0 %1244
      %1246 = vrot.lane.b32.xlu0 %v845, 24
      %v1247 = vpop.permute.xlu0 %1246
      %1248 = vrot.lane.b32.xlu0 %v846, 24
      %v1249 = vpop.permute.xlu0 %1248
      %1250 = vrot.lane.b32.xlu0 %v847, 24
      %v1251 = vpop.permute.xlu0 %1250
      %1252 = vrot.lane.b32.xlu0 %v889, 32
      %v1253 = vpop.permute.xlu0 %1252
      %1254 = vrot.lane.b32.xlu0 %v901, 32
      %v1255 = vpop.permute.xlu0 %1254
      %1256 = vrot.lane.b32.xlu0 %v913, 32
      %v1257 = vpop.permute.xlu0 %1256
      %1258 = vrot.lane.b32.xlu0 %v925, 32
      %v1259 = vpop.permute.xlu0 %1258
      %1260 = vrot.lane.b32.xlu0 %v937, 32
      %v1261 = vpop.permute.xlu0 %1260
      %1262 = vrot.lane.b32.xlu0 %v949, 32
      %v1263 = vpop.permute.xlu0 %1262
      %1264 = vrot.lane.b32.xlu0 %v961, 32
      %v1265 = vpop.permute.xlu0 %1264
      %1266 = vrot.lane.b32.xlu0 %v973, 32
      %v1267 = vpop.permute.xlu0 %1266
      %1268 = vrot.lane.b32.xlu0 %v985, 32
      %v1269 = vpop.permute.xlu0 %1268
      %1270 = vrot.lane.b32.xlu0 %v997, 32
      %v1271 = vpop.permute.xlu0 %1270
      %1272 = vrot.lane.b32.xlu0 %v1009, 32
      %v1273 = vpop.permute.xlu0 %1272
      %1274 = vrot.lane.b32.xlu0 %v1021, 32
      %v1275 = vpop.permute.xlu0 %1274
      %1276 = vrot.lane.b32.xlu0 %v1033, 32
      %v1277 = vpop.permute.xlu0 %1276
      %1278 = vrot.lane.b32.xlu0 %v1045, 32
      %v1279 = vpop.permute.xlu0 %1278
      %1280 = vrot.lane.b32.xlu0 %v1057, 32
      %v1281 = vpop.permute.xlu0 %1280
      %1282 = vrot.lane.b32.xlu0 %v1150, 32
      %v1283 = vpop.permute.xlu0 %1282
      %1284 = vrot.lane.b32.xlu0 %v1096, 40
      %v1285 = vpop.permute.xlu0 %1284
      %1286 = vrot.lane.b32.xlu0 %v1099, 40
      %v1287 = vpop.permute.xlu0 %1286
      %1288 = vrot.lane.b32.xlu0 %v1102, 40
      %v1289 = vpop.permute.xlu0 %1288
      %1290 = vrot.lane.b32.xlu0 %v1105, 40
      %v1291 = vpop.permute.xlu0 %1290
      %1292 = vrot.lane.b32.xlu0 %v1108, 40
      %v1293 = vpop.permute.xlu0 %1292
      %1294 = vrot.lane.b32.xlu0 %v1111, 40
      %v1295 = vpop.permute.xlu0 %1294
      %1296 = vrot.lane.b32.xlu0 %v1114, 40
      %v1297 = vpop.permute.xlu0 %1296
      %1298 = vrot.lane.b32.xlu0 %v1117, 40
      %v1299 = vpop.permute.xlu0 %1298
      %1300 = vrot.lane.b32.xlu0 %v1120, 40
      %v1301 = vpop.permute.xlu0 %1300
      %1302 = vrot.lane.b32.xlu0 %v1123, 40
      %v1303 = vpop.permute.xlu0 %1302
      %1304 = vrot.lane.b32.xlu0 %v1126, 40
      %v1305 = vpop.permute.xlu0 %1304
      %1306 = vrot.lane.b32.xlu0 %v1129, 40
      %v1307 = vpop.permute.xlu0 %1306
      %1308 = vrot.lane.b32.xlu0 %v1132, 40
      %v1309 = vpop.permute.xlu0 %1308
      %1310 = vrot.lane.b32.xlu0 %v1135, 40
      %v1311 = vpop.permute.xlu0 %1310
      %1312 = vrot.lane.b32.xlu0 %v1138, 40
      %v1313 = vpop.permute.xlu0 %1312
      %1314 = vrot.lane.b32.xlu0 %v1155, 40
      %v1315 = vpop.permute.xlu0 %1314
      %1316 = vrot.lane.b32.xlu0 %v833, 48
      %v1317 = vpop.permute.xlu0 %1316
      %1318 = vrot.lane.b32.xlu0 %v834, 48
      %v1319 = vpop.permute.xlu0 %1318
      %1320 = vrot.lane.b32.xlu0 %v835, 48
      %v1321 = vpop.permute.xlu0 %1320
      %1322 = vrot.lane.b32.xlu0 %v836, 48
      %v1323 = vpop.permute.xlu0 %1322
      %1324 = vrot.lane.b32.xlu0 %v837, 48
      %v1325 = vpop.permute.xlu0 %1324
      %1326 = vrot.lane.b32.xlu0 %v838, 48
      %v1327 = vpop.permute.xlu0 %1326
      %1328 = vrot.lane.b32.xlu0 %v839, 48
      %v1329 = vpop.permute.xlu0 %1328
      %1330 = vrot.lane.b32.xlu0 %v840, 48
      %v1331 = vpop.permute.xlu0 %1330
      %1332 = vrot.lane.b32.xlu0 %v841, 48
      %v1333 = vpop.permute.xlu0 %1332
      %1334 = vrot.lane.b32.xlu0 %v842, 48
      %v1335 = vpop.permute.xlu0 %1334
      %1336 = vrot.lane.b32.xlu0 %v843, 48
      %v1337 = vpop.permute.xlu0 %1336
      %1338 = vrot.lane.b32.xlu0 %v844, 48
      %v1339 = vpop.permute.xlu0 %1338
      %1340 = vrot.lane.b32.xlu0 %v845, 48
      %v1341 = vpop.permute.xlu0 %1340
      %1342 = vrot.lane.b32.xlu0 %v846, 48
      %v1343 = vpop.permute.xlu0 %1342
      %1344 = vrot.lane.b32.xlu0 %v847, 48
      %v1345 = vpop.permute.xlu0 %1344
      %1346 = vrot.lane.b32.xlu0 %v831, 48
      %v1347 = vpop.permute.xlu0 %1346
      %1348 = vrot.lane.b32.xlu0 %v901, 56
      %v1349 = vpop.permute.xlu0 %1348
      %1350 = vrot.lane.b32.xlu0 %v913, 56
      %v1351 = vpop.permute.xlu0 %1350
      %1352 = vrot.lane.b32.xlu0 %v925, 56
      %v1353 = vpop.permute.xlu0 %1352
      %1354 = vrot.lane.b32.xlu0 %v937, 56
      %v1355 = vpop.permute.xlu0 %1354
      %1356 = vrot.lane.b32.xlu0 %v949, 56
      %v1357 = vpop.permute.xlu0 %1356
      %1358 = vrot.lane.b32.xlu0 %v961, 56
      %v1359 = vpop.permute.xlu0 %1358
      %1360 = vrot.lane.b32.xlu0 %v973, 56
      %v1361 = vpop.permute.xlu0 %1360
      %1362 = vrot.lane.b32.xlu0 %v985, 56
      %v1363 = vpop.permute.xlu0 %1362
      %1364 = vrot.lane.b32.xlu0 %v997, 56
      %v1365 = vpop.permute.xlu0 %1364
      %1366 = vrot.lane.b32.xlu0 %v1009, 56
      %v1367 = vpop.permute.xlu0 %1366
      %1368 = vrot.lane.b32.xlu0 %v1021, 56
      %v1369 = vpop.permute.xlu0 %1368
      %1370 = vrot.lane.b32.xlu0 %v1033, 56
      %v1371 = vpop.permute.xlu0 %1370
      %1372 = vrot.lane.b32.xlu0 %v1045, 56
      %v1373 = vpop.permute.xlu0 %1372
      %1374 = vrot.lane.b32.xlu0 %v1057, 56
      %v1375 = vpop.permute.xlu0 %1374
      %1376 = vrot.lane.b32.xlu0 %v1150, 56
      %v1377 = vpop.permute.xlu0 %1376
      %1378 = vrot.lane.b32.xlu0 %v877, 56
      %v1379 = vpop.permute.xlu0 %1378
      %1380 = vrot.lane.b32.xlu0 %v1099, 64
      %v1381 = vpop.permute.xlu0 %1380
      %1382 = vrot.lane.b32.xlu0 %v1102, 64
      %v1383 = vpop.permute.xlu0 %1382
      %1384 = vrot.lane.b32.xlu0 %v1105, 64
      %v1385 = vpop.permute.xlu0 %1384
      %1386 = vrot.lane.b32.xlu0 %v1108, 64
      %v1387 = vpop.permute.xlu0 %1386
      %1388 = vrot.lane.b32.xlu0 %v1111, 64
      %v1389 = vpop.permute.xlu0 %1388
      %1390 = vrot.lane.b32.xlu0 %v1114, 64
      %v1391 = vpop.permute.xlu0 %1390
      %1392 = vrot.lane.b32.xlu0 %v1117, 64
      %v1393 = vpop.permute.xlu0 %1392
      %1394 = vrot.lane.b32.xlu0 %v1120, 64
      %v1395 = vpop.permute.xlu0 %1394
      %1396 = vrot.lane.b32.xlu0 %v1123, 64
      %v1397 = vpop.permute.xlu0 %1396
      %1398 = vrot.lane.b32.xlu0 %v1126, 64
      %v1399 = vpop.permute.xlu0 %1398
      %1400 = vrot.lane.b32.xlu0 %v1129, 64
      %v1401 = vpop.permute.xlu0 %1400
      %1402 = vrot.lane.b32.xlu0 %v1132, 64
      %v1403 = vpop.permute.xlu0 %1402
      %1404 = vrot.lane.b32.xlu0 %v1135, 64
      %v1405 = vpop.permute.xlu0 %1404
      %1406 = vrot.lane.b32.xlu0 %v1138, 64
      %v1407 = vpop.permute.xlu0 %1406
      %1408 = vrot.lane.b32.xlu0 %v1155, 64
      %v1409 = vpop.permute.xlu0 %1408
      %1410 = vrot.lane.b32.xlu0 %v1093, 64
      %v1411 = vpop.permute.xlu0 %1410
      %vm1412 = vcmask 64512
      %v1414 = vsel %vm1412, %v831, %v1157
      %v1416 = vsel %vm1412, %v832, %v1159
      %v1418 = vsel %vm1412, %v833, %v1161
      %v1420 = vsel %vm1412, %v834, %v1163
      %v1422 = vsel %vm1412, %v835, %v1165
      %v1424 = vsel %vm1412, %v836, %v1167
      %v1426 = vsel %vm1412, %v837, %v1169
      %v1428 = vsel %vm1412, %v838, %v1171
      %v1430 = vsel %vm1412, %v839, %v1173
      %v1432 = vsel %vm1412, %v840, %v1175
      %v1434 = vsel %vm1412, %v841, %v1177
      %v1436 = vsel %vm1412, %v842, %v1179
      %v1438 = vsel %vm1412, %v843, %v1181
      %v1440 = vsel %vm1412, %v844, %v1183
      %v1442 = vsel %vm1412, %v845, %v1185
      %v1444 = vsel %vm1412, %v846, %v1187
      %vm1445 = vcmask 130048
      %v1447 = vsel %vm1445, %v1414, %v1189
      %v1449 = vsel %vm1445, %v1416, %v1191
      %v1451 = vsel %vm1445, %v1418, %v1193
      %v1453 = vsel %vm1445, %v1420, %v1195
      %v1455 = vsel %vm1445, %v1422, %v1197
      %v1457 = vsel %vm1445, %v1424, %v1199
      %v1459 = vsel %vm1445, %v1426, %v1201
      %v1461 = vsel %vm1445, %v1428, %v1203
      %v1463 = vsel %vm1445, %v1430, %v1205
      %v1465 = vsel %vm1445, %v1432, %v1207
      %v1467 = vsel %vm1445, %v1434, %v1209
      %v1469 = vsel %vm1445, %v1436, %v1211
      %v1471 = vsel %vm1445, %v1438, %v1213
      %v1473 = vsel %vm1445, %v1440, %v1215
      %v1475 = vsel %vm1445, %v1442, %v1217
      %v1477 = vsel %vm1445, %v1444, %v1219
      %vm1478 = vcmask 195584
      %v1480 = vsel %vm1478, %v1447, %v1221
      %v1482 = vsel %vm1478, %v1449, %v1223
      %v1484 = vsel %vm1478, %v1451, %v1225
      %v1486 = vsel %vm1478, %v1453, %v1227
      %v1488 = vsel %vm1478, %v1455, %v1229
      %v1490 = vsel %vm1478, %v1457, %v1231
      %v1492 = vsel %vm1478, %v1459, %v1233
      %v1494 = vsel %vm1478, %v1461, %v1235
      %v1496 = vsel %vm1478, %v1463, %v1237
      %v1498 = vsel %vm1478, %v1465, %v1239
      %v1500 = vsel %vm1478, %v1467, %v1241
      %v1502 = vsel %vm1478, %v1469, %v1243
      %v1504 = vsel %vm1478, %v1471, %v1245
      %v1506 = vsel %vm1478, %v1473, %v1247
      %v1508 = vsel %vm1478, %v1475, %v1249
      %v1510 = vsel %vm1478, %v1477, %v1251
      %vm1511 = vcmask 261120
      %v1513 = vsel %vm1511, %v1480, %v1253
      %v1515 = vsel %vm1511, %v1482, %v1255
      %v1517 = vsel %vm1511, %v1484, %v1257
      %v1519 = vsel %vm1511, %v1486, %v1259
      %v1521 = vsel %vm1511, %v1488, %v1261
      %v1523 = vsel %vm1511, %v1490, %v1263
      %v1525 = vsel %vm1511, %v1492, %v1265
      %v1527 = vsel %vm1511, %v1494, %v1267
      %v1529 = vsel %vm1511, %v1496, %v1269
      %v1531 = vsel %vm1511, %v1498, %v1271
      %v1533 = vsel %vm1511, %v1500, %v1273
      %v1535 = vsel %vm1511, %v1502, %v1275
      %v1537 = vsel %vm1511, %v1504, %v1277
      %v1539 = vsel %vm1511, %v1506, %v1279
      %v1541 = vsel %vm1511, %v1508, %v1281
      %v1543 = vsel %vm1511, %v1510, %v1283
      %vm1544 = vcmask 326656
      %v1546 = vsel %vm1544, %v1513, %v1285
      %v1548 = vsel %vm1544, %v1515, %v1287
      %v1550 = vsel %vm1544, %v1517, %v1289
      %v1552 = vsel %vm1544, %v1519, %v1291
      %v1554 = vsel %vm1544, %v1521, %v1293
      %v1556 = vsel %vm1544, %v1523, %v1295
      %v1558 = vsel %vm1544, %v1525, %v1297
      %v1560 = vsel %vm1544, %v1527, %v1299
      %v1562 = vsel %vm1544, %v1529, %v1301
      %v1564 = vsel %vm1544, %v1531, %v1303
      %v1566 = vsel %vm1544, %v1533, %v1305
      %v1568 = vsel %vm1544, %v1535, %v1307
      %v1570 = vsel %vm1544, %v1537, %v1309
      %v1572 = vsel %vm1544, %v1539, %v1311
      %v1574 = vsel %vm1544, %v1541, %v1313
      %v1576 = vsel %vm1544, %v1543, %v1315
      %vm1577 = vcmask 392192
      %v1579 = vsel %vm1577, %v1546, %v1317
      %v1581 = vsel %vm1577, %v1548, %v1319
      %v1583 = vsel %vm1577, %v1550, %v1321
      %v1585 = vsel %vm1577, %v1552, %v1323
      %v1587 = vsel %vm1577, %v1554, %v1325
      %v1589 = vsel %vm1577, %v1556, %v1327
      %v1591 = vsel %vm1577, %v1558, %v1329
      %v1593 = vsel %vm1577, %v1560, %v1331
      %v1595 = vsel %vm1577, %v1562, %v1333
      %v1597 = vsel %vm1577, %v1564, %v1335
      %v1599 = vsel %vm1577, %v1566, %v1337
      %v1601 = vsel %vm1577, %v1568, %v1339
      %v1603 = vsel %vm1577, %v1570, %v1341
      %v1605 = vsel %vm1577, %v1572, %v1343
      %v1607 = vsel %vm1577, %v1574, %v1345
      %v1609 = vsel %vm1577, %v1576, %v1347
      %vm1610 = vcmask 457728
      %v1612 = vsel %vm1610, %v1579, %v1349
      %v1614 = vsel %vm1610, %v1581, %v1351
      %v1616 = vsel %vm1610, %v1583, %v1353
      %v1618 = vsel %vm1610, %v1585, %v1355
      %v1620 = vsel %vm1610, %v1587, %v1357
      %v1622 = vsel %vm1610, %v1589, %v1359
      %v1624 = vsel %vm1610, %v1591, %v1361
      %v1626 = vsel %vm1610, %v1593, %v1363
      %v1628 = vsel %vm1610, %v1595, %v1365
      %v1630 = vsel %vm1610, %v1597, %v1367
      %v1632 = vsel %vm1610, %v1599, %v1369
      %v1634 = vsel %vm1610, %v1601, %v1371
      %v1636 = vsel %vm1610, %v1603, %v1373
      %v1638 = vsel %vm1610, %v1605, %v1375
      %v1640 = vsel %vm1610, %v1607, %v1377
      %v1642 = vsel %vm1610, %v1609, %v1379
      %vm1643 = vcmask 523264
      %v1645 = vsel %vm1643, %v1612, %v1381
      %v1647 = vsel %vm1643, %v1614, %v1383
      %v1649 = vsel %vm1643, %v1616, %v1385
      %v1651 = vsel %vm1643, %v1618, %v1387
      %v1653 = vsel %vm1643, %v1620, %v1389
      %v1655 = vsel %vm1643, %v1622, %v1391
      %v1657 = vsel %vm1643, %v1624, %v1393
      %v1659 = vsel %vm1643, %v1626, %v1395
      %v1661 = vsel %vm1643, %v1628, %v1397
      %v1663 = vsel %vm1643, %v1630, %v1399
      %v1665 = vsel %vm1643, %v1632, %v1401
      %v1667 = vsel %vm1643, %v1634, %v1403
      %v1669 = vsel %vm1643, %v1636, %v1405
      %v1671 = vsel %vm1643, %v1638, %v1407
      %v1673 = vsel %vm1643, %v1640, %v1409
      %v1675 = vsel %vm1643, %v1642, %v1411
      %v1676 = vld [vmem:[%s1] sm:$0xf]
      %v1677 = vld [vmem:[%s1 + $0x4] sm:$0xf]
      %v1678 = vld [vmem:[%s1 + $0x8] sm:$0xf]
      %v1679 = vld [vmem:[%s1 + $0xc] sm:$0xf]
      %v1680 = vld [vmem:[%s1 + $0x10] sm:$0xf]
      %v1681 = vld [vmem:[%s1 + $0x14] sm:$0xf]
      %v1682 = vld [vmem:[%s1 + $0x18] sm:$0xf]
      %v1683 = vld [vmem:[%s1 + $0x1c] sm:$0xf]
      %v1684 = vld [vmem:[%s1 + $0x20] sm:$0xf]
      %v1694 = vunpack.c.l.b16 %v1676
      %v1695 = vunpack.c.l.b16 %v1677
      %v1696 = vunpack.c.l.b16 %v1678
      %v1697 = vunpack.c.l.b16 %v1679
      %v1698 = vunpack.c.l.b16 %v1680
      %v1699 = vunpack.c.l.b16 %v1681
      %v1700 = vunpack.c.l.b16 %v1682
      %v1701 = vunpack.c.l.b16 %v1683
      %v1702 = vunpack.c.l.b16 %v1684
      %v1703 = vpack.c.b16 %v1695, %v1694
      %v1704 = vpack.c.b16 %v1697, %v1696
      %v1705 = vpack.c.b16 %v1699, %v1698
      %v1706 = vpack.c.b16 %v1701, %v1700
      %v1707 = vpack.c.b16 %v1702, %v1702
      %vm1712 = vcmask 588800
      %v1713 = vsel %vm1712, %v1645, 0
      %v1715 = vsel %vm1712, %v1647, 0
      %v1717 = vsel %vm1712, %v1649, 0
      %v1719 = vsel %vm1712, %v1651, 0
      %v1721 = vsel %vm1712, %v1653, 0
      %v1723 = vsel %vm1712, %v1655, 0
      %v1725 = vsel %vm1712, %v1657, 0
      %v1727 = vsel %vm1712, %v1659, 0
      %v1729 = vsel %vm1712, %v1661, 0
      %v1731 = vsel %vm1712, %v1663, 0
      %v1733 = vsel %vm1712, %v1665, 0
      %v1735 = vsel %vm1712, %v1667, 0
      %v1737 = vsel %vm1712, %v1669, 0
      %v1739 = vsel %vm1712, %v1671, 0
      %v1741 = vsel %vm1712, %v1673, 0
      %v1743 = vsel %vm1712, %v1675, 0
      %vm1745 = vcmask 1043456
      %v1747 = vsel %vm1745, %v1707, 0
      %1749 = vmatprep.subr.bf16.mxu0 0
      %1750 = vmatpush1.bf16.msra.mxu0 0
      %1751 = vmatprep.subr.bf16.mxu0 0
      %1752 = vmatpush1.bf16.msra.mxu0 0
      %1753 = vmatprep.subr.bf16.mxu0 0
      %1754 = vmatpush1.bf16.msra.mxu0 0
      %1755 = vmatprep.subr.bf16.mxu0 0
      %1756 = vmatpush1.bf16.msra.mxu0 %v1747
      %1757 = vmatprep.subr.bf16.mxu0 0
      %1758 = vmatpush1.bf16.msra.mxu0 %v1706
      %1759 = vmatprep.subr.bf16.mxu0 0
      %1760 = vmatpush1.bf16.msra.mxu0 %v1705
      %1761 = vmatprep.subr.bf16.mxu0 0
      %1762 = vmatpush1.bf16.msra.mxu0 %v1704
      %1763 = vmatprep.subr.bf16.mxu0 0
      %1764 = vmatpush1.bf16.msra.mxu0 %v1703
      %1765 = vmatprep.subr.bf16.mxu0 0
      %1766 = vmatpush2.bf16.msra.mxu0 0
      %1767 = vmatprep.subr.bf16.mxu0 0
      %1768 = vmatpush2.bf16.msra.mxu0 0
      %1769 = vmatprep.subr.bf16.mxu0 0
      %1770 = vmatpush2.bf16.msra.mxu0 0
      %1771 = vmatprep.subr.bf16.mxu0 0
      %1772 = vmatpush2.bf16.msra.mxu0 0
      %1773 = vmatprep.subr.bf16.mxu0 0
      %1774 = vmatpush2.bf16.msra.mxu0 0
      %1775 = vmatprep.subr.bf16.mxu0 0
      %1776 = vmatpush2.bf16.msra.mxu0 0
      %1777 = vmatprep.subr.bf16.mxu0 0
      %1778 = vmatpush2.bf16.msra.mxu0 0
      %1779 = vmatprep.subr.bf16.mxu0 0
      %1780 = vmatpush2.bf16.msra.mxu0 0
      %1781 = vmatprep.mubr.bf16.mxu0 0
      %1782 = vmatmul.mubr.bf16.gmra.mxu0 %v1713
      %v1783 = vpop.f32.mrf.mxu0
      %v1784 = vadd.f32 0.0, %v1783
      %v1785 = vpop.f32.mrf.mxu0
      %v1786 = vpop.f32.mrf.mxu0
      %v1787 = vadd.f32 0.0, %v1786
      %v1788 = vpop.f32.mrf.mxu0
      %1789 = vmatprep.mubr.bf16.mxu0 0
      %1790 = vmatmul.mubr.bf16.gmra.mxu0 %v1715
      %v1791 = vpop.f32.mrf.mxu0
      %v1792 = vadd.f32 0.0, %v1791
      %v1793 = vpop.f32.mrf.mxu0
      %v1794 = vpop.f32.mrf.mxu0
      %v1795 = vadd.f32 0.0, %v1794
      %v1796 = vpop.f32.mrf.mxu0
      %1797 = vmatprep.mubr.bf16.mxu0 0
      %1798 = vmatmul.mubr.bf16.gmra.mxu0 %v1717
      %v1799 = vpop.f32.mrf.mxu0
      %v1800 = vadd.f32 0.0, %v1799
      %v1801 = vpop.f32.mrf.mxu0
      %v1802 = vpop.f32.mrf.mxu0
      %v1803 = vadd.f32 0.0, %v1802
      %v1804 = vpop.f32.mrf.mxu0
      %1805 = vmatprep.mubr.bf16.mxu0 0
      %1806 = vmatmul.mubr.bf16.gmra.mxu0 %v1719
      %v1807 = vpop.f32.mrf.mxu0
      %v1808 = vadd.f32 0.0, %v1807
      %v1809 = vpop.f32.mrf.mxu0
      %v1810 = vpop.f32.mrf.mxu0
      %v1811 = vadd.f32 0.0, %v1810
      %v1812 = vpop.f32.mrf.mxu0
      %1813 = vmatprep.mubr.bf16.mxu0 0
      %1814 = vmatmul.mubr.bf16.gmra.mxu0 %v1721
      %v1815 = vpop.f32.mrf.mxu0
      %v1816 = vadd.f32 0.0, %v1815
      %v1817 = vpop.f32.mrf.mxu0
      %v1818 = vpop.f32.mrf.mxu0
      %v1819 = vadd.f32 0.0, %v1818
      %v1820 = vpop.f32.mrf.mxu0
      %1821 = vmatprep.mubr.bf16.mxu0 0
      %1822 = vmatmul.mubr.bf16.gmra.mxu0 %v1723
      %v1823 = vpop.f32.mrf.mxu0
      %v1824 = vadd.f32 0.0, %v1823
      %v1825 = vpop.f32.mrf.mxu0
      %v1826 = vpop.f32.mrf.mxu0
      %v1827 = vadd.f32 0.0, %v1826
      %v1828 = vpop.f32.mrf.mxu0
      %1829 = vmatprep.mubr.bf16.mxu0 0
      %1830 = vmatmul.mubr.bf16.gmra.mxu0 %v1725
      %v1831 = vpop.f32.mrf.mxu0
      %v1832 = vadd.f32 0.0, %v1831
      %v1833 = vpop.f32.mrf.mxu0
      %v1834 = vpop.f32.mrf.mxu0
      %v1835 = vadd.f32 0.0, %v1834
      %v1836 = vpop.f32.mrf.mxu0
      %1837 = vmatprep.mubr.bf16.mxu0 0
      %1838 = vmatmul.mubr.bf16.gmra.mxu0 %v1727
      %v1839 = vpop.f32.mrf.mxu0
      %v1840 = vadd.f32 0.0, %v1839
      %v1841 = vpop.f32.mrf.mxu0
      %v1842 = vpop.f32.mrf.mxu0
      %v1843 = vadd.f32 0.0, %v1842
      %v1844 = vpop.f32.mrf.mxu0
      %1845 = vmatprep.mubr.bf16.mxu0 0
      %1846 = vmatmul.mubr.bf16.gmra.mxu0 %v1729
      %v1847 = vpop.f32.mrf.mxu0
      %v1848 = vadd.f32 0.0, %v1847
      %v1849 = vpop.f32.mrf.mxu0
      %v1850 = vpop.f32.mrf.mxu0
      %v1851 = vadd.f32 0.0, %v1850
      %v1852 = vpop.f32.mrf.mxu0
      %1853 = vmatprep.mubr.bf16.mxu0 0
      %1854 = vmatmul.mubr.bf16.gmra.mxu0 %v1731
      %v1855 = vpop.f32.mrf.mxu0
      %v1856 = vadd.f32 0.0, %v1855
      %v1857 = vpop.f32.mrf.mxu0
      %v1858 = vpop.f32.mrf.mxu0
      %v1859 = vadd.f32 0.0, %v1858
      %v1860 = vpop.f32.mrf.mxu0
      %1861 = vmatprep.mubr.bf16.mxu0 0
      %1862 = vmatmul.mubr.bf16.gmra.mxu0 %v1733
      %v1863 = vpop.f32.mrf.mxu0
      %v1864 = vadd.f32 0.0, %v1863
      %v1865 = vpop.f32.mrf.mxu0
      %v1866 = vpop.f32.mrf.mxu0
      %v1867 = vadd.f32 0.0, %v1866
      %v1868 = vpop.f32.mrf.mxu0
      %1869 = vmatprep.mubr.bf16.mxu0 0
      %1870 = vmatmul.mubr.bf16.gmra.mxu0 %v1735
      %v1871 = vpop.f32.mrf.mxu0
      %v1872 = vadd.f32 0.0, %v1871
      %v1873 = vpop.f32.mrf.mxu0
      %v1874 = vpop.f32.mrf.mxu0
      %v1875 = vadd.f32 0.0, %v1874
      %v1876 = vpop.f32.mrf.mxu0
      %1877 = vmatprep.mubr.bf16.mxu0 0
      %1878 = vmatmul.mubr.bf16.gmra.mxu0 %v1737
      %v1879 = vpop.f32.mrf.mxu0
      %v1880 = vadd.f32 0.0, %v1879
      %v1881 = vpop.f32.mrf.mxu0
      %v1882 = vpop.f32.mrf.mxu0
      %v1883 = vadd.f32 0.0, %v1882
      %v1884 = vpop.f32.mrf.mxu0
      %1885 = vmatprep.mubr.bf16.mxu0 0
      %1886 = vmatmul.mubr.bf16.gmra.mxu0 %v1739
      %v1887 = vpop.f32.mrf.mxu0
      %v1888 = vadd.f32 0.0, %v1887
      %v1889 = vpop.f32.mrf.mxu0
      %v1890 = vpop.f32.mrf.mxu0
      %v1891 = vadd.f32 0.0, %v1890
      %v1892 = vpop.f32.mrf.mxu0
      %1893 = vmatprep.mubr.bf16.mxu0 0
      %1894 = vmatmul.mubr.bf16.gmra.mxu0 %v1741
      %v1895 = vpop.f32.mrf.mxu0
      %v1896 = vadd.f32 0.0, %v1895
      %v1897 = vpop.f32.mrf.mxu0
      %v1898 = vpop.f32.mrf.mxu0
      %v1899 = vadd.f32 0.0, %v1898
      %v1900 = vpop.f32.mrf.mxu0
      %1901 = vmatprep.mubr.bf16.mxu0 0
      %1902 = vmatmul.mubr.bf16.gmra.mxu0 %v1743
      %v1903 = vpop.f32.mrf.mxu0
      %v1904 = vadd.f32 0.0, %v1903
      %v1905 = vpop.f32.mrf.mxu0
      %v1906 = vpop.f32.mrf.mxu0
      %v1907 = vadd.f32 0.0, %v1906
      %v1908 = vpop.f32.mrf.mxu0
      %1909 = vdwg.mxu0
      %v1910 = vld [vmem:[%s2] sm:$0x1]
      %v1912 = vlaneseq
      %v1913 = vshrl.u32 %v1912, 7
      %v1914 = vsub.s32 0, %v1913
      %v1915 = vrot.slane %v1910, %v1914
      %v1917 = vmul.f32 %v1784, %v1915
      %v1918 = vmul.f32 %v1787, %v1915
      %v1919 = vmul.f32 %v1792, %v1915
      %v1920 = vmul.f32 %v1795, %v1915
      %v1921 = vmul.f32 %v1800, %v1915
      %v1922 = vmul.f32 %v1803, %v1915
      %v1923 = vmul.f32 %v1808, %v1915
      %v1924 = vmul.f32 %v1811, %v1915
      %v1925 = vmul.f32 %v1816, %v1915
      %v1926 = vmul.f32 %v1819, %v1915
      %v1927 = vmul.f32 %v1824, %v1915
      %v1928 = vmul.f32 %v1827, %v1915
      %v1929 = vmul.f32 %v1832, %v1915
      %v1930 = vmul.f32 %v1835, %v1915
      %v1931 = vmul.f32 %v1840, %v1915
      %v1932 = vmul.f32 %v1843, %v1915
      %v1933 = vmul.f32 %v1848, %v1915
      %v1934 = vmul.f32 %v1851, %v1915
      %v1935 = vmul.f32 %v1856, %v1915
      %v1936 = vmul.f32 %v1859, %v1915
      %v1937 = vmul.f32 %v1864, %v1915
      %v1938 = vmul.f32 %v1867, %v1915
      %v1939 = vmul.f32 %v1872, %v1915
      %v1940 = vmul.f32 %v1875, %v1915
      %v1941 = vmul.f32 %v1880, %v1915
      %v1942 = vmul.f32 %v1883, %v1915
      %v1943 = vmul.f32 %v1888, %v1915
      %v1944 = vmul.f32 %v1891, %v1915
      %v1945 = vmul.f32 %v1896, %v1915
      %v1946 = vmul.f32 %v1899, %v1915
      %v1947 = vmul.f32 %v1904, %v1915
      %v1948 = vmul.f32 %v1907, %v1915
      %v1949 = vld [vmem:[%s3] sm:$0x1]
      %v1951 = vlaneseq
      %v1952 = vshrl.u32 %v1951, 7
      %v1953 = vsub.s32 0, %v1952
      %v1954 = vrot.slane %v1949, %v1953
      %v1956 = vadd.f32 %v1917, %v1954
      %v1957 = vadd.f32 %v1918, %v1954
      %v1958 = vadd.f32 %v1919, %v1954
      %v1959 = vadd.f32 %v1920, %v1954
      %v1960 = vadd.f32 %v1921, %v1954
      %v1961 = vadd.f32 %v1922, %v1954
      %v1962 = vadd.f32 %v1923, %v1954
      %v1963 = vadd.f32 %v1924, %v1954
      %v1964 = vadd.f32 %v1925, %v1954
      %v1965 = vadd.f32 %v1926, %v1954
      %v1966 = vadd.f32 %v1927, %v1954
      %v1967 = vadd.f32 %v1928, %v1954
      %v1968 = vadd.f32 %v1929, %v1954
      %v1969 = vadd.f32 %v1930, %v1954
      %v1970 = vadd.f32 %v1931, %v1954
      %v1971 = vadd.f32 %v1932, %v1954
      %v1972 = vadd.f32 %v1933, %v1954
      %v1973 = vadd.f32 %v1934, %v1954
      %v1974 = vadd.f32 %v1935, %v1954
      %v1975 = vadd.f32 %v1936, %v1954
      %v1976 = vadd.f32 %v1937, %v1954
      %v1977 = vadd.f32 %v1938, %v1954
      %v1978 = vadd.f32 %v1939, %v1954
      %v1979 = vadd.f32 %v1940, %v1954
      %v1980 = vadd.f32 %v1941, %v1954
      %v1981 = vadd.f32 %v1942, %v1954
      %v1982 = vadd.f32 %v1943, %v1954
      %v1983 = vadd.f32 %v1944, %v1954
      %v1984 = vadd.f32 %v1945, %v1954
      %v1985 = vadd.f32 %v1946, %v1954
      %v1986 = vadd.f32 %v1947, %v1954
      %v1987 = vadd.f32 %v1948, %v1954
      %v1988 = vmax.f32 %v1956, 0.0
      %v1989 = vmax.f32 %v1957, 0.0
      %v1990 = vmax.f32 %v1958, 0.0
      %v1991 = vmax.f32 %v1959, 0.0
      %v1992 = vmax.f32 %v1960, 0.0
      %v1993 = vmax.f32 %v1961, 0.0
      %v1994 = vmax.f32 %v1962, 0.0
      %v1995 = vmax.f32 %v1963, 0.0
      %v1996 = vmax.f32 %v1964, 0.0
      %v1997 = vmax.f32 %v1965, 0.0
      %v1998 = vmax.f32 %v1966, 0.0
      %v1999 = vmax.f32 %v1967, 0.0
      %v2000 = vmax.f32 %v1968, 0.0
      %v2001 = vmax.f32 %v1969, 0.0
      %v2002 = vmax.f32 %v1970, 0.0
      %v2003 = vmax.f32 %v1971, 0.0
      %v2004 = vmax.f32 %v1972, 0.0
      %v2005 = vmax.f32 %v1973, 0.0
      %v2006 = vmax.f32 %v1974, 0.0
      %v2007 = vmax.f32 %v1975, 0.0
      %v2008 = vmax.f32 %v1976, 0.0
      %v2009 = vmax.f32 %v1977, 0.0
      %v2010 = vmax.f32 %v1978, 0.0
      %v2011 = vmax.f32 %v1979, 0.0
      %v2012 = vmax.f32 %v1980, 0.0
      %v2013 = vmax.f32 %v1981, 0.0
      %v2014 = vmax.f32 %v1982, 0.0
      %v2015 = vmax.f32 %v1983, 0.0
      %v2016 = vmax.f32 %v1984, 0.0
      %v2017 = vmax.f32 %v1985, 0.0
      %v2018 = vmax.f32 %v1986, 0.0
      %v2019 = vmax.f32 %v1987, 0.0
      %v2020 = vld [vmem:[%s4] sm:$0xf]
      %v2021 = vld [vmem:[%s4 + $0x4] sm:$0xf]
      %v2022 = vld [vmem:[%s4 + $0x8] sm:$0xf]
      %v2023 = vld [vmem:[%s4 + $0xc] sm:$0xf]
      %v2024 = vld [vmem:[%s4 + $0x10] sm:$0xf]
      %v2025 = vld [vmem:[%s4 + $0x14] sm:$0xf]
      %v2026 = vld [vmem:[%s4 + $0x18] sm:$0xf]
      %v2027 = vld [vmem:[%s4 + $0x1c] sm:$0xf]
      %v2028 = vld [vmem:[%s4 + $0x20] sm:$0xf]
      %v2038 = vunpack.c.l.b16 %v2020
      %v2039 = vunpack.c.l.b16 %v2021
      %v2040 = vunpack.c.l.b16 %v2022
      %v2041 = vunpack.c.l.b16 %v2023
      %v2042 = vunpack.c.l.b16 %v2024
      %v2043 = vunpack.c.l.b16 %v2025
      %v2044 = vunpack.c.l.b16 %v2026
      %v2045 = vunpack.c.l.b16 %v2027
      %v2046 = vunpack.c.l.b16 %v2028
      %v2047 = vpack.c.b16 %v2039, %v2038
      %v2048 = vpack.c.b16 %v2041, %v2040
      %v2049 = vpack.c.b16 %v2043, %v2042
      %v2050 = vpack.c.b16 %v2045, %v2044
      %v2051 = vpack.c.b16 %v2046, %v2046
      %v2057 = vsel %vm1745, %v2051, 0
      %2059 = vmatprep.subr.bf16.mxu0 0
      %2060 = vmatpush1.bf16.msra.mxu0 0
      %2061 = vmatprep.subr.bf16.mxu0 0
      %2062 = vmatpush1.bf16.msra.mxu0 0
      %2063 = vmatprep.subr.bf16.mxu0 0
      %2064 = vmatpush1.bf16.msra.mxu0 0
      %2065 = vmatprep.subr.bf16.mxu0 0
      %2066 = vmatpush1.bf16.msra.mxu0 %v2057
      %2067 = vmatprep.subr.bf16.mxu0 0
      %2068 = vmatpush1.bf16.msra.mxu0 %v2050
      %2069 = vmatprep.subr.bf16.mxu0 0
      %2070 = vmatpush1.bf16.msra.mxu0 %v2049
      %2071 = vmatprep.subr.bf16.mxu0 0
      %2072 = vmatpush1.bf16.msra.mxu0 %v2048
      %2073 = vmatprep.subr.bf16.mxu0 0
      %2074 = vmatpush1.bf16.msra.mxu0 %v2047
      %2075 = vmatprep.subr.bf16.mxu0 0
      %2076 = vmatpush2.bf16.msra.mxu0 0
      %2077 = vmatprep.subr.bf16.mxu0 0
      %2078 = vmatpush2.bf16.msra.mxu0 0
      %2079 = vmatprep.subr.bf16.mxu0 0
      %2080 = vmatpush2.bf16.msra.mxu0 0
      %2081 = vmatprep.subr.bf16.mxu0 0
      %2082 = vmatpush2.bf16.msra.mxu0 0
      %2083 = vmatprep.subr.bf16.mxu0 0
      %2084 = vmatpush2.bf16.msra.mxu0 0
      %2085 = vmatprep.subr.bf16.mxu0 0
      %2086 = vmatpush2.bf16.msra.mxu0 0
      %2087 = vmatprep.subr.bf16.mxu0 0
      %2088 = vmatpush2.bf16.msra.mxu0 0
      %2089 = vmatprep.subr.bf16.mxu0 0
      %2090 = vmatpush2.bf16.msra.mxu0 0
      %2091 = vmatprep.mubr.bf16.mxu0 0
      %2092 = vmatmul.mubr.bf16.gmra.mxu0 %v1713
      %v2093 = vpop.f32.mrf.mxu0
      %v2094 = vadd.f32 0.0, %v2093
      %v2095 = vpop.f32.mrf.mxu0
      %v2096 = vpop.f32.mrf.mxu0
      %v2097 = vadd.f32 0.0, %v2096
      %v2098 = vpop.f32.mrf.mxu0
      %2099 = vmatprep.mubr.bf16.mxu0 0
      %2100 = vmatmul.mubr.bf16.gmra.mxu0 %v1715
      %v2101 = vpop.f32.mrf.mxu0
      %v2102 = vadd.f32 0.0, %v2101
      %v2103 = vpop.f32.mrf.mxu0
      %v2104 = vpop.f32.mrf.mxu0
      %v2105 = vadd.f32 0.0, %v2104
      %v2106 = vpop.f32.mrf.mxu0
      %2107 = vmatprep.mubr.bf16.mxu0 0
      %2108 = vmatmul.mubr.bf16.gmra.mxu0 %v1717
      %v2109 = vpop.f32.mrf.mxu0
      %v2110 = vadd.f32 0.0, %v2109
      %v2111 = vpop.f32.mrf.mxu0
      %v2112 = vpop.f32.mrf.mxu0
      %v2113 = vadd.f32 0.0, %v2112
      %v2114 = vpop.f32.mrf.mxu0
      %2115 = vmatprep.mubr.bf16.mxu0 0
      %2116 = vmatmul.mubr.bf16.gmra.mxu0 %v1719
      %v2117 = vpop.f32.mrf.mxu0
      %v2118 = vadd.f32 0.0, %v2117
      %v2119 = vpop.f32.mrf.mxu0
      %v2120 = vpop.f32.mrf.mxu0
      %v2121 = vadd.f32 0.0, %v2120
      %v2122 = vpop.f32.mrf.mxu0
      %2123 = vmatprep.mubr.bf16.mxu0 0
      %2124 = vmatmul.mubr.bf16.gmra.mxu0 %v1721
      %v2125 = vpop.f32.mrf.mxu0
      %v2126 = vadd.f32 0.0, %v2125
      %v2127 = vpop.f32.mrf.mxu0
      %v2128 = vpop.f32.mrf.mxu0
      %v2129 = vadd.f32 0.0, %v2128
      %v2130 = vpop.f32.mrf.mxu0
      %2131 = vmatprep.mubr.bf16.mxu0 0
      %2132 = vmatmul.mubr.bf16.gmra.mxu0 %v1723
      %v2133 = vpop.f32.mrf.mxu0
      %v2134 = vadd.f32 0.0, %v2133
      %v2135 = vpop.f32.mrf.mxu0
      %v2136 = vpop.f32.mrf.mxu0
      %v2137 = vadd.f32 0.0, %v2136
      %v2138 = vpop.f32.mrf.mxu0
      %2139 = vmatprep.mubr.bf16.mxu0 0
      %2140 = vmatmul.mubr.bf16.gmra.mxu0 %v1725
      %v2141 = vpop.f32.mrf.mxu0
      %v2142 = vadd.f32 0.0, %v2141
      %v2143 = vpop.f32.mrf.mxu0
      %v2144 = vpop.f32.mrf.mxu0
      %v2145 = vadd.f32 0.0, %v2144
      %v2146 = vpop.f32.mrf.mxu0
      %2147 = vmatprep.mubr.bf16.mxu0 0
      %2148 = vmatmul.mubr.bf16.gmra.mxu0 %v1727
      %v2149 = vpop.f32.mrf.mxu0
      %v2150 = vadd.f32 0.0, %v2149
      %v2151 = vpop.f32.mrf.mxu0
      %v2152 = vpop.f32.mrf.mxu0
      %v2153 = vadd.f32 0.0, %v2152
      %v2154 = vpop.f32.mrf.mxu0
      %2155 = vmatprep.mubr.bf16.mxu0 0
      %2156 = vmatmul.mubr.bf16.gmra.mxu0 %v1729
      %v2157 = vpop.f32.mrf.mxu0
      %v2158 = vadd.f32 0.0, %v2157
      %v2159 = vpop.f32.mrf.mxu0
      %v2160 = vpop.f32.mrf.mxu0
      %v2161 = vadd.f32 0.0, %v2160
      %v2162 = vpop.f32.mrf.mxu0
      %2163 = vmatprep.mubr.bf16.mxu0 0
      %2164 = vmatmul.mubr.bf16.gmra.mxu0 %v1731
      %v2165 = vpop.f32.mrf.mxu0
      %v2166 = vadd.f32 0.0, %v2165
      %v2167 = vpop.f32.mrf.mxu0
      %v2168 = vpop.f32.mrf.mxu0
      %v2169 = vadd.f32 0.0, %v2168
      %v2170 = vpop.f32.mrf.mxu0
      %2171 = vmatprep.mubr.bf16.mxu0 0
      %2172 = vmatmul.mubr.bf16.gmra.mxu0 %v1733
      %v2173 = vpop.f32.mrf.mxu0
      %v2174 = vadd.f32 0.0, %v2173
      %v2175 = vpop.f32.mrf.mxu0
      %v2176 = vpop.f32.mrf.mxu0
      %v2177 = vadd.f32 0.0, %v2176
      %v2178 = vpop.f32.mrf.mxu0
      %2179 = vmatprep.mubr.bf16.mxu0 0
      %2180 = vmatmul.mubr.bf16.gmra.mxu0 %v1735
      %v2181 = vpop.f32.mrf.mxu0
      %v2182 = vadd.f32 0.0, %v2181
      %v2183 = vpop.f32.mrf.mxu0
      %v2184 = vpop.f32.mrf.mxu0
      %v2185 = vadd.f32 0.0, %v2184
      %v2186 = vpop.f32.mrf.mxu0
      %2187 = vmatprep.mubr.bf16.mxu0 0
      %2188 = vmatmul.mubr.bf16.gmra.mxu0 %v1737
      %v2189 = vpop.f32.mrf.mxu0
      %v2190 = vadd.f32 0.0, %v2189
      %v2191 = vpop.f32.mrf.mxu0
      %v2192 = vpop.f32.mrf.mxu0
      %v2193 = vadd.f32 0.0, %v2192
      %v2194 = vpop.f32.mrf.mxu0
      %2195 = vmatprep.mubr.bf16.mxu0 0
      %2196 = vmatmul.mubr.bf16.gmra.mxu0 %v1739
      %v2197 = vpop.f32.mrf.mxu0
      %v2198 = vadd.f32 0.0, %v2197
      %v2199 = vpop.f32.mrf.mxu0
      %v2200 = vpop.f32.mrf.mxu0
      %v2201 = vadd.f32 0.0, %v2200
      %v2202 = vpop.f32.mrf.mxu0
      %2203 = vmatprep.mubr.bf16.mxu0 0
      %2204 = vmatmul.mubr.bf16.gmra.mxu0 %v1741
      %v2205 = vpop.f32.mrf.mxu0
      %v2206 = vadd.f32 0.0, %v2205
      %v2207 = vpop.f32.mrf.mxu0
      %v2208 = vpop.f32.mrf.mxu0
      %v2209 = vadd.f32 0.0, %v2208
      %v2210 = vpop.f32.mrf.mxu0
      %2211 = vmatprep.mubr.bf16.mxu0 0
      %2212 = vmatmul.mubr.bf16.gmra.mxu0 %v1743
      %v2213 = vpop.f32.mrf.mxu0
      %v2214 = vadd.f32 0.0, %v2213
      %v2215 = vpop.f32.mrf.mxu0
      %v2216 = vpop.f32.mrf.mxu0
      %v2217 = vadd.f32 0.0, %v2216
      %v2218 = vpop.f32.mrf.mxu0
      %2219 = vdwg.mxu0
      %v2220 = vld [vmem:[%s5] sm:$0x1]
      %v2222 = vlaneseq
      %v2223 = vshrl.u32 %v2222, 7
      %v2224 = vsub.s32 0, %v2223
      %v2225 = vrot.slane %v2220, %v2224
      %v2227 = vmul.f32 %v2094, %v2225
      %v2228 = vmul.f32 %v2097, %v2225
      %v2229 = vmul.f32 %v2102, %v2225
      %v2230 = vmul.f32 %v2105, %v2225
      %v2231 = vmul.f32 %v2110, %v2225
      %v2232 = vmul.f32 %v2113, %v2225
      %v2233 = vmul.f32 %v2118, %v2225
      %v2234 = vmul.f32 %v2121, %v2225
      %v2235 = vmul.f32 %v2126, %v2225
      %v2236 = vmul.f32 %v2129, %v2225
      %v2237 = vmul.f32 %v2134, %v2225
      %v2238 = vmul.f32 %v2137, %v2225
      %v2239 = vmul.f32 %v2142, %v2225
      %v2240 = vmul.f32 %v2145, %v2225
      %v2241 = vmul.f32 %v2150, %v2225
      %v2242 = vmul.f32 %v2153, %v2225
      %v2243 = vmul.f32 %v2158, %v2225
      %v2244 = vmul.f32 %v2161, %v2225
      %v2245 = vmul.f32 %v2166, %v2225
      %v2246 = vmul.f32 %v2169, %v2225
      %v2247 = vmul.f32 %v2174, %v2225
      %v2248 = vmul.f32 %v2177, %v2225
      %v2249 = vmul.f32 %v2182, %v2225
      %v2250 = vmul.f32 %v2185, %v2225
      %v2251 = vmul.f32 %v2190, %v2225
      %v2252 = vmul.f32 %v2193, %v2225
      %v2253 = vmul.f32 %v2198, %v2225
      %v2254 = vmul.f32 %v2201, %v2225
      %v2255 = vmul.f32 %v2206, %v2225
      %v2256 = vmul.f32 %v2209, %v2225
      %v2257 = vmul.f32 %v2214, %v2225
      %v2258 = vmul.f32 %v2217, %v2225
      %v2259 = vld [vmem:[%s6] sm:$0x1]
      %v2261 = vlaneseq
      %v2262 = vshrl.u32 %v2261, 7
      %v2263 = vsub.s32 0, %v2262
      %v2264 = vrot.slane %v2259, %v2263
      %v2266 = vadd.f32 %v2227, %v2264
      %v2267 = vadd.f32 %v2228, %v2264
      %v2268 = vadd.f32 %v2229, %v2264
      %v2269 = vadd.f32 %v2230, %v2264
      %v2270 = vadd.f32 %v2231, %v2264
      %v2271 = vadd.f32 %v2232, %v2264
      %v2272 = vadd.f32 %v2233, %v2264
      %v2273 = vadd.f32 %v2234, %v2264
      %v2274 = vadd.f32 %v2235, %v2264
      %v2275 = vadd.f32 %v2236, %v2264
      %v2276 = vadd.f32 %v2237, %v2264
      %v2277 = vadd.f32 %v2238, %v2264
      %v2278 = vadd.f32 %v2239, %v2264
      %v2279 = vadd.f32 %v2240, %v2264
      %v2280 = vadd.f32 %v2241, %v2264
      %v2281 = vadd.f32 %v2242, %v2264
      %v2282 = vadd.f32 %v2243, %v2264
      %v2283 = vadd.f32 %v2244, %v2264
      %v2284 = vadd.f32 %v2245, %v2264
      %v2285 = vadd.f32 %v2246, %v2264
      %v2286 = vadd.f32 %v2247, %v2264
      %v2287 = vadd.f32 %v2248, %v2264
      %v2288 = vadd.f32 %v2249, %v2264
      %v2289 = vadd.f32 %v2250, %v2264
      %v2290 = vadd.f32 %v2251, %v2264
      %v2291 = vadd.f32 %v2252, %v2264
      %v2292 = vadd.f32 %v2253, %v2264
      %v2293 = vadd.f32 %v2254, %v2264
      %v2294 = vadd.f32 %v2255, %v2264
      %v2295 = vadd.f32 %v2256, %v2264
      %v2296 = vadd.f32 %v2257, %v2264
      %v2297 = vadd.f32 %v2258, %v2264
      %v2298 = vmax.f32 %v2266, 0.0
      %v2299 = vmax.f32 %v2267, 0.0
      %v2300 = vmax.f32 %v2268, 0.0
      %v2301 = vmax.f32 %v2269, 0.0
      %v2302 = vmax.f32 %v2270, 0.0
      %v2303 = vmax.f32 %v2271, 0.0
      %v2304 = vmax.f32 %v2272, 0.0
      %v2305 = vmax.f32 %v2273, 0.0
      %v2306 = vmax.f32 %v2274, 0.0
      %v2307 = vmax.f32 %v2275, 0.0
      %v2308 = vmax.f32 %v2276, 0.0
      %v2309 = vmax.f32 %v2277, 0.0
      %v2310 = vmax.f32 %v2278, 0.0
      %v2311 = vmax.f32 %v2279, 0.0
      %v2312 = vmax.f32 %v2280, 0.0
      %v2313 = vmax.f32 %v2281, 0.0
      %v2314 = vmax.f32 %v2282, 0.0
      %v2315 = vmax.f32 %v2283, 0.0
      %v2316 = vmax.f32 %v2284, 0.0
      %v2317 = vmax.f32 %v2285, 0.0
      %v2318 = vmax.f32 %v2286, 0.0
      %v2319 = vmax.f32 %v2287, 0.0
      %v2320 = vmax.f32 %v2288, 0.0
      %v2321 = vmax.f32 %v2289, 0.0
      %v2322 = vmax.f32 %v2290, 0.0
      %v2323 = vmax.f32 %v2291, 0.0
      %v2324 = vmax.f32 %v2292, 0.0
      %v2325 = vmax.f32 %v2293, 0.0
      %v2326 = vmax.f32 %v2294, 0.0
      %v2327 = vmax.f32 %v2295, 0.0
      %v2328 = vmax.f32 %v2296, 0.0
      %v2329 = vmax.f32 %v2297, 0.0
      %v2330 = vpack.c.bf16 %v1989, %v1988
      %v2331 = vpack.c.bf16 %v1991, %v1990
      %v2332 = vpack.c.bf16 %v1993, %v1992
      %v2333 = vpack.c.bf16 %v1995, %v1994
      %v2334 = vpack.c.bf16 %v1997, %v1996
      %v2335 = vpack.c.bf16 %v1999, %v1998
      %v2336 = vpack.c.bf16 %v2001, %v2000
      %v2337 = vpack.c.bf16 %v2003, %v2002
      %v2338 = vpack.c.bf16 %v2005, %v2004
      %v2339 = vpack.c.bf16 %v2007, %v2006
      %v2340 = vpack.c.bf16 %v2009, %v2008
      %v2341 = vpack.c.bf16 %v2011, %v2010
      %v2342 = vpack.c.bf16 %v2013, %v2012
      %v2343 = vpack.c.bf16 %v2015, %v2014
      %v2344 = vpack.c.bf16 %v2017, %v2016
      %v2345 = vpack.c.bf16 %v2019, %v2018
      %v2346 = vld [vmem:[%s7] sm:$0xf]
      %v2347 = vld [vmem:[%s7 + $0x4] sm:$0xf]
      %v2348 = vld [vmem:[%s7 + $0x8] sm:$0xf]
      %v2349 = vld [vmem:[%s7 + $0xc] sm:$0xf]
      %v2350 = vld [vmem:[%s8] sm:$0x1]
      %v2352 = vlaneseq
      %v2353 = vshrl.u32 %v2352, 7
      %v2354 = vsub.s32 0, %v2353
      %v2355 = vrot.slane %v2350, %v2354
      %v2361 = vunpack.c.l.b16 %v2346
      %v2362 = vunpack.c.l.b16 %v2347
      %v2363 = vunpack.c.l.b16 %v2348
      %v2364 = vunpack.c.l.b16 %v2349
      %v2365 = vpack.c.b16 %v2362, %v2361
      %v2366 = vpack.c.b16 %v2364, %v2363
      %v2370 = vsel %vm1511, %v2330, 0
      %v2373 = vsel %vm1511, %v2331, 0
      %v2376 = vsel %vm1511, %v2332, 0
      %v2379 = vsel %vm1511, %v2333, 0
      %v2382 = vsel %vm1511, %v2334, 0
      %v2385 = vsel %vm1511, %v2335, 0
      %v2388 = vsel %vm1511, %v2336, 0
      %v2391 = vsel %vm1511, %v2337, 0
      %v2394 = vsel %vm1511, %v2338, 0
      %v2397 = vsel %vm1511, %v2339, 0
      %v2400 = vsel %vm1511, %v2340, 0
      %v2403 = vsel %vm1511, %v2341, 0
      %v2406 = vsel %vm1511, %v2342, 0
      %v2409 = vsel %vm1511, %v2343, 0
      %v2412 = vsel %vm1511, %v2344, 0
      %v2415 = vsel %vm1511, %v2345, 0
      %2417 = vmatprep.subr.bf16.mxu0 0
      %2418 = vmatpush1.bf16.msra.mxu0 0
      %2419 = vmatprep.subr.bf16.mxu0 0
      %2420 = vmatpush1.bf16.msra.mxu0 0
      %2421 = vmatprep.subr.bf16.mxu0 0
      %2422 = vmatpush1.bf16.msra.mxu0 0
      %2423 = vmatprep.subr.bf16.mxu0 0
      %2424 = vmatpush1.bf16.msra.mxu0 0
      %2425 = vmatprep.subr.bf16.mxu0 0
      %2426 = vmatpush1.bf16.msra.mxu0 0
      %2427 = vmatprep.subr.bf16.mxu0 0
      %2428 = vmatpush1.bf16.msra.mxu0 0
      %2429 = vmatprep.subr.bf16.mxu0 0
      %2430 = vmatpush1.bf16.msra.mxu0 %v2366
      %2431 = vmatprep.subr.bf16.mxu0 0
      %2432 = vmatpush1.bf16.msra.mxu0 %v2365
      %2433 = vmatprep.subr.bf16.mxu0 0
      %2434 = vmatpush2.bf16.msra.mxu0 0
      %2435 = vmatprep.subr.bf16.mxu0 0
      %2436 = vmatpush2.bf16.msra.mxu0 0
      %2437 = vmatprep.subr.bf16.mxu0 0
      %2438 = vmatpush2.bf16.msra.mxu0 0
      %2439 = vmatprep.subr.bf16.mxu0 0
      %2440 = vmatpush2.bf16.msra.mxu0 0
      %2441 = vmatprep.subr.bf16.mxu0 0
      %2442 = vmatpush2.bf16.msra.mxu0 0
      %2443 = vmatprep.subr.bf16.mxu0 0
      %2444 = vmatpush2.bf16.msra.mxu0 0
      %2445 = vmatprep.subr.bf16.mxu0 0
      %2446 = vmatpush2.bf16.msra.mxu0 0
      %2447 = vmatprep.subr.bf16.mxu0 0
      %2448 = vmatpush2.bf16.msra.mxu0 0
      %2449 = vmatprep.mubr.bf16.mxu0 0
      %2450 = vmatmul.mubr.bf16.gmra.mxu0 %v2370
      %v2451 = vpop.f32.mrf.mxu0
      %v2452 = vadd.f32 %v2355, %v2451
      %v2453 = vpop.f32.mrf.mxu0
      %v2454 = vpop.f32.mrf.mxu0
      %v2455 = vadd.f32 %v2355, %v2454
      %v2456 = vpop.f32.mrf.mxu0
      %2457 = vmatprep.mubr.bf16.mxu0 0
      %2458 = vmatmul.mubr.bf16.gmra.mxu0 %v2373
      %v2459 = vpop.f32.mrf.mxu0
      %v2460 = vadd.f32 %v2355, %v2459
      %v2461 = vpop.f32.mrf.mxu0
      %v2462 = vpop.f32.mrf.mxu0
      %v2463 = vadd.f32 %v2355, %v2462
      %v2464 = vpop.f32.mrf.mxu0
      %2465 = vmatprep.mubr.bf16.mxu0 0
      %2466 = vmatmul.mubr.bf16.gmra.mxu0 %v2376
      %v2467 = vpop.f32.mrf.mxu0
      %v2468 = vadd.f32 %v2355, %v2467
      %v2469 = vpop.f32.mrf.mxu0
      %v2470 = vpop.f32.mrf.mxu0
      %v2471 = vadd.f32 %v2355, %v2470
      %v2472 = vpop.f32.mrf.mxu0
      %2473 = vmatprep.mubr.bf16.mxu0 0
      %2474 = vmatmul.mubr.bf16.gmra.mxu0 %v2379
      %v2475 = vpop.f32.mrf.mxu0
      %v2476 = vadd.f32 %v2355, %v2475
      %v2477 = vpop.f32.mrf.mxu0
      %v2478 = vpop.f32.mrf.mxu0
      %v2479 = vadd.f32 %v2355, %v2478
      %v2480 = vpop.f32.mrf.mxu0
      %2481 = vmatprep.mubr.bf16.mxu0 0
      %2482 = vmatmul.mubr.bf16.gmra.mxu0 %v2382
      %v2483 = vpop.f32.mrf.mxu0
      %v2484 = vadd.f32 %v2355, %v2483
      %v2485 = vpop.f32.mrf.mxu0
      %v2486 = vpop.f32.mrf.mxu0
      %v2487 = vadd.f32 %v2355, %v2486
      %v2488 = vpop.f32.mrf.mxu0
      %2489 = vmatprep.mubr.bf16.mxu0 0
      %2490 = vmatmul.mubr.bf16.gmra.mxu0 %v2385
      %v2491 = vpop.f32.mrf.mxu0
      %v2492 = vadd.f32 %v2355, %v2491
      %v2493 = vpop.f32.mrf.mxu0
      %v2494 = vpop.f32.mrf.mxu0
      %v2495 = vadd.f32 %v2355, %v2494
      %v2496 = vpop.f32.mrf.mxu0
      %2497 = vmatprep.mubr.bf16.mxu0 0
      %2498 = vmatmul.mubr.bf16.gmra.mxu0 %v2388
      %v2499 = vpop.f32.mrf.mxu0
      %v2500 = vadd.f32 %v2355, %v2499
      %v2501 = vpop.f32.mrf.mxu0
      %v2502 = vpop.f32.mrf.mxu0
      %v2503 = vadd.f32 %v2355, %v2502
      %v2504 = vpop.f32.mrf.mxu0
      %2505 = vmatprep.mubr.bf16.mxu0 0
      %2506 = vmatmul.mubr.bf16.gmra.mxu0 %v2391
      %v2507 = vpop.f32.mrf.mxu0
      %v2508 = vadd.f32 %v2355, %v2507
      %v2509 = vpop.f32.mrf.mxu0
      %v2510 = vpop.f32.mrf.mxu0
      %v2511 = vadd.f32 %v2355, %v2510
      %v2512 = vpop.f32.mrf.mxu0
      %2513 = vmatprep.mubr.bf16.mxu0 0
      %2514 = vmatmul.mubr.bf16.gmra.mxu0 %v2394
      %v2515 = vpop.f32.mrf.mxu0
      %v2516 = vadd.f32 %v2355, %v2515
      %v2517 = vpop.f32.mrf.mxu0
      %v2518 = vpop.f32.mrf.mxu0
      %v2519 = vadd.f32 %v2355, %v2518
      %v2520 = vpop.f32.mrf.mxu0
      %2521 = vmatprep.mubr.bf16.mxu0 0
      %2522 = vmatmul.mubr.bf16.gmra.mxu0 %v2397
      %v2523 = vpop.f32.mrf.mxu0
      %v2524 = vadd.f32 %v2355, %v2523
      %v2525 = vpop.f32.mrf.mxu0
      %v2526 = vpop.f32.mrf.mxu0
      %v2527 = vadd.f32 %v2355, %v2526
      %v2528 = vpop.f32.mrf.mxu0
      %2529 = vmatprep.mubr.bf16.mxu0 0
      %2530 = vmatmul.mubr.bf16.gmra.mxu0 %v2400
      %v2531 = vpop.f32.mrf.mxu0
      %v2532 = vadd.f32 %v2355, %v2531
      %v2533 = vpop.f32.mrf.mxu0
      %v2534 = vpop.f32.mrf.mxu0
      %v2535 = vadd.f32 %v2355, %v2534
      %v2536 = vpop.f32.mrf.mxu0
      %2537 = vmatprep.mubr.bf16.mxu0 0
      %2538 = vmatmul.mubr.bf16.gmra.mxu0 %v2403
      %v2539 = vpop.f32.mrf.mxu0
      %v2540 = vadd.f32 %v2355, %v2539
      %v2541 = vpop.f32.mrf.mxu0
      %v2542 = vpop.f32.mrf.mxu0
      %v2543 = vadd.f32 %v2355, %v2542
      %v2544 = vpop.f32.mrf.mxu0
      %2545 = vmatprep.mubr.bf16.mxu0 0
      %2546 = vmatmul.mubr.bf16.gmra.mxu0 %v2406
      %v2547 = vpop.f32.mrf.mxu0
      %v2548 = vadd.f32 %v2355, %v2547
      %v2549 = vpop.f32.mrf.mxu0
      %v2550 = vpop.f32.mrf.mxu0
      %v2551 = vadd.f32 %v2355, %v2550
      %v2552 = vpop.f32.mrf.mxu0
      %2553 = vmatprep.mubr.bf16.mxu0 0
      %2554 = vmatmul.mubr.bf16.gmra.mxu0 %v2409
      %v2555 = vpop.f32.mrf.mxu0
      %v2556 = vadd.f32 %v2355, %v2555
      %v2557 = vpop.f32.mrf.mxu0
      %v2558 = vpop.f32.mrf.mxu0
      %v2559 = vadd.f32 %v2355, %v2558
      %v2560 = vpop.f32.mrf.mxu0
      %2561 = vmatprep.mubr.bf16.mxu0 0
      %2562 = vmatmul.mubr.bf16.gmra.mxu0 %v2412
      %v2563 = vpop.f32.mrf.mxu0
      %v2564 = vadd.f32 %v2355, %v2563
      %v2565 = vpop.f32.mrf.mxu0
      %v2566 = vpop.f32.mrf.mxu0
      %v2567 = vadd.f32 %v2355, %v2566
      %v2568 = vpop.f32.mrf.mxu0
      %2569 = vmatprep.mubr.bf16.mxu0 0
      %2570 = vmatmul.mubr.bf16.gmra.mxu0 %v2415
      %v2571 = vpop.f32.mrf.mxu0
      %v2572 = vadd.f32 %v2355, %v2571
      %v2573 = vpop.f32.mrf.mxu0
      %v2574 = vpop.f32.mrf.mxu0
      %v2575 = vadd.f32 %v2355, %v2574
      %v2576 = vpop.f32.mrf.mxu0
      %2577 = vdwg.mxu0
      %2578 = vst [vmem:[%s561] sm:$0xff] %v2452
      %2579 = vst [vmem:[%s561 + $0x8] sm:$0xff] %v2455
      %2580 = vst [vmem:[%s561 + $0x10] sm:$0xff] %v2460
      %2581 = vst [vmem:[%s561 + $0x18] sm:$0xff] %v2463
      %2582 = vst [vmem:[%s561 + $0x20] sm:$0xff] %v2468
      %2583 = vst [vmem:[%s561 + $0x28] sm:$0xff] %v2471
      %2584 = vst [vmem:[%s561 + $0x30] sm:$0xff] %v2476
      %2585 = vst [vmem:[%s561 + $0x38] sm:$0xff] %v2479
      %2586 = vst [vmem:[%s561 + $0x40] sm:$0xff] %v2484
      %2587 = vst [vmem:[%s561 + $0x48] sm:$0xff] %v2487
      %2588 = vst [vmem:[%s561 + $0x50] sm:$0xff] %v2492
      %2589 = vst [vmem:[%s561 + $0x58] sm:$0xff] %v2495
      %2590 = vst [vmem:[%s561 + $0x60] sm:$0xff] %v2500
      %2591 = vst [vmem:[%s561 + $0x68] sm:$0xff] %v2503
      %2592 = vst [vmem:[%s561 + $0x70] sm:$0xff] %v2508
      %2593 = vst [vmem:[%s561 + $0x78] sm:$0xff] %v2511
      %2594 = vst [vmem:[%s561 + $0x80] sm:$0xff] %v2516
      %2595 = vst [vmem:[%s561 + $0x88] sm:$0xff] %v2519
      %2596 = vst [vmem:[%s561 + $0x90] sm:$0xff] %v2524
      %2597 = vst [vmem:[%s561 + $0x98] sm:$0xff] %v2527
      %2598 = vst [vmem:[%s561 + $0xa0] sm:$0xff] %v2532
      %2599 = vst [vmem:[%s561 + $0xa8] sm:$0xff] %v2535
      %2600 = vst [vmem:[%s561 + $0xb0] sm:$0xff] %v2540
      %2601 = vst [vmem:[%s561 + $0xb8] sm:$0xff] %v2543
      %2602 = vst [vmem:[%s561 + $0xc0] sm:$0xff] %v2548
      %2603 = vst [vmem:[%s561 + $0xc8] sm:$0xff] %v2551
      %2604 = vst [vmem:[%s561 + $0xd0] sm:$0xff] %v2556
      %2605 = vst [vmem:[%s561 + $0xd8] sm:$0xff] %v2559
      %2606 = vst [vmem:[%s561 + $0xe0] sm:$0xff] %v2564
      %2607 = vst [vmem:[%s561 + $0xe8] sm:$0xff] %v2567
      %2608 = vst [vmem:[%s561 + $0xf0] sm:$0xff] %v2572
      %2609 = vst [vmem:[%s561 + $0xf8] sm:$0xff] %v2575
      %v2610 = vadd.f32 %v1988, %v2298
      %v2611 = vadd.f32 %v1989, %v2299
      %v2612 = vadd.f32 %v1990, %v2300
      %v2613 = vadd.f32 %v1991, %v2301
      %v2614 = vadd.f32 %v1992, %v2302
      %v2615 = vadd.f32 %v1993, %v2303
      %v2616 = vadd.f32 %v1994, %v2304
      %v2617 = vadd.f32 %v1995, %v2305
      %v2618 = vadd.f32 %v1996, %v2306
      %v2619 = vadd.f32 %v1997, %v2307
      %v2620 = vadd.f32 %v1998, %v2308
      %v2621 = vadd.f32 %v1999, %v2309
      %v2622 = vadd.f32 %v2000, %v2310
      %v2623 = vadd.f32 %v2001, %v2311
      %v2624 = vadd.f32 %v2002, %v2312
      %v2625 = vadd.f32 %v2003, %v2313
      %v2626 = vadd.f32 %v2004, %v2314
      %v2627 = vadd.f32 %v2005, %v2315
      %v2628 = vadd.f32 %v2006, %v2316
      %v2629 = vadd.f32 %v2007, %v2317
      %v2630 = vadd.f32 %v2008, %v2318
      %v2631 = vadd.f32 %v2009, %v2319
      %v2632 = vadd.f32 %v2010, %v2320
      %v2633 = vadd.f32 %v2011, %v2321
      %v2634 = vadd.f32 %v2012, %v2322
      %v2635 = vadd.f32 %v2013, %v2323
      %v2636 = vadd.f32 %v2014, %v2324
      %v2637 = vadd.f32 %v2015, %v2325
      %v2638 = vadd.f32 %v2016, %v2326
      %v2639 = vadd.f32 %v2017, %v2327
      %v2640 = vadd.f32 %v2018, %v2328
      %v2641 = vadd.f32 %v2019, %v2329
      %v2642 = vld [vmem:[%s9] sm:$0x1]
      %v2644 = vlaneseq
      %v2645 = vshrl.u32 %v2644, 7
      %v2646 = vsub.s32 0, %v2645
      %v2647 = vrot.slane %v2642, %v2646
      %v2649 = vmul.f32 %v2610, %v2647
      %v2650 = vmul.f32 %v2611, %v2647
      %v2651 = vmul.f32 %v2612, %v2647
      %v2652 = vmul.f32 %v2613, %v2647
      %v2653 = vmul.f32 %v2614, %v2647
      %v2654 = vmul.f32 %v2615, %v2647
      %v2655 = vmul.f32 %v2616, %v2647
      %v2656 = vmul.f32 %v2617, %v2647
      %v2657 = vmul.f32 %v2618, %v2647
      %v2658 = vmul.f32 %v2619, %v2647
      %v2659 = vmul.f32 %v2620, %v2647
      %v2660 = vmul.f32 %v2621, %v2647
      %v2661 = vmul.f32 %v2622, %v2647
      %v2662 = vmul.f32 %v2623, %v2647
      %v2663 = vmul.f32 %v2624, %v2647
      %v2664 = vmul.f32 %v2625, %v2647
      %v2665 = vmul.f32 %v2626, %v2647
      %v2666 = vmul.f32 %v2627, %v2647
      %v2667 = vmul.f32 %v2628, %v2647
      %v2668 = vmul.f32 %v2629, %v2647
      %v2669 = vmul.f32 %v2630, %v2647
      %v2670 = vmul.f32 %v2631, %v2647
      %v2671 = vmul.f32 %v2632, %v2647
      %v2672 = vmul.f32 %v2633, %v2647
      %v2673 = vmul.f32 %v2634, %v2647
      %v2674 = vmul.f32 %v2635, %v2647
      %v2675 = vmul.f32 %v2636, %v2647
      %v2676 = vmul.f32 %v2637, %v2647
      %v2677 = vmul.f32 %v2638, %v2647
      %v2678 = vmul.f32 %v2639, %v2647
      %v2679 = vmul.f32 %v2640, %v2647
      %v2680 = vmul.f32 %v2641, %v2647
      %v2681 = vld [vmem:[%s10] sm:$0x1]
      %v2683 = vlaneseq
      %v2684 = vshrl.u32 %v2683, 7
      %v2685 = vsub.s32 0, %v2684
      %v2686 = vrot.slane %v2681, %v2685
      %v2688 = vadd.f32 %v2649, %v2686
      %v2689 = vadd.f32 %v2650, %v2686
      %v2690 = vadd.f32 %v2651, %v2686
      %v2691 = vadd.f32 %v2652, %v2686
      %v2692 = vadd.f32 %v2653, %v2686
      %v2693 = vadd.f32 %v2654, %v2686
      %v2694 = vadd.f32 %v2655, %v2686
      %v2695 = vadd.f32 %v2656, %v2686
      %v2696 = vadd.f32 %v2657, %v2686
      %v2697 = vadd.f32 %v2658, %v2686
      %v2698 = vadd.f32 %v2659, %v2686
      %v2699 = vadd.f32 %v2660, %v2686
      %v2700 = vadd.f32 %v2661, %v2686
      %v2701 = vadd.f32 %v2662, %v2686
      %v2702 = vadd.f32 %v2663, %v2686
      %v2703 = vadd.f32 %v2664, %v2686
      %v2704 = vadd.f32 %v2665, %v2686
      %v2705 = vadd.f32 %v2666, %v2686
      %v2706 = vadd.f32 %v2667, %v2686
      %v2707 = vadd.f32 %v2668, %v2686
      %v2708 = vadd.f32 %v2669, %v2686
      %v2709 = vadd.f32 %v2670, %v2686
      %v2710 = vadd.f32 %v2671, %v2686
      %v2711 = vadd.f32 %v2672, %v2686
      %v2712 = vadd.f32 %v2673, %v2686
      %v2713 = vadd.f32 %v2674, %v2686
      %v2714 = vadd.f32 %v2675, %v2686
      %v2715 = vadd.f32 %v2676, %v2686
      %v2716 = vadd.f32 %v2677, %v2686
      %v2717 = vadd.f32 %v2678, %v2686
      %v2718 = vadd.f32 %v2679, %v2686
      %v2719 = vadd.f32 %v2680, %v2686
      %v2720 = vmax.f32 %v2688, 0.0
      %v2721 = vmax.f32 %v2689, 0.0
      %v2722 = vmax.f32 %v2690, 0.0
      %v2723 = vmax.f32 %v2691, 0.0
      %v2724 = vmax.f32 %v2692, 0.0
      %v2725 = vmax.f32 %v2693, 0.0
      %v2726 = vmax.f32 %v2694, 0.0
      %v2727 = vmax.f32 %v2695, 0.0
      %v2728 = vmax.f32 %v2696, 0.0
      %v2729 = vmax.f32 %v2697, 0.0
      %v2730 = vmax.f32 %v2698, 0.0
      %v2731 = vmax.f32 %v2699, 0.0
      %v2732 = vmax.f32 %v2700, 0.0
      %v2733 = vmax.f32 %v2701, 0.0
      %v2734 = vmax.f32 %v2702, 0.0
      %v2735 = vmax.f32 %v2703, 0.0
      %v2736 = vmax.f32 %v2704, 0.0
      %v2737 = vmax.f32 %v2705, 0.0
      %v2738 = vmax.f32 %v2706, 0.0
      %v2739 = vmax.f32 %v2707, 0.0
      %v2740 = vmax.f32 %v2708, 0.0
      %v2741 = vmax.f32 %v2709, 0.0
      %v2742 = vmax.f32 %v2710, 0.0
      %v2743 = vmax.f32 %v2711, 0.0
      %v2744 = vmax.f32 %v2712, 0.0
      %v2745 = vmax.f32 %v2713, 0.0
      %v2746 = vmax.f32 %v2714, 0.0
      %v2747 = vmax.f32 %v2715, 0.0
      %v2748 = vmax.f32 %v2716, 0.0
      %v2749 = vmax.f32 %v2717, 0.0
      %v2750 = vmax.f32 %v2718, 0.0
      %v2751 = vmax.f32 %v2719, 0.0
      %v2752 = vpack.c.bf16 %v2721, %v2720
      %v2753 = vpack.c.bf16 %v2723, %v2722
      %v2754 = vpack.c.bf16 %v2725, %v2724
      %v2755 = vpack.c.bf16 %v2727, %v2726
      %v2756 = vpack.c.bf16 %v2729, %v2728
      %v2757 = vpack.c.bf16 %v2731, %v2730
      %v2758 = vpack.c.bf16 %v2733, %v2732
      %v2759 = vpack.c.bf16 %v2735, %v2734
      %v2760 = vpack.c.bf16 %v2737, %v2736
      %v2761 = vpack.c.bf16 %v2739, %v2738
      %v2762 = vpack.c.bf16 %v2741, %v2740
      %v2763 = vpack.c.bf16 %v2743, %v2742
      %v2764 = vpack.c.bf16 %v2745, %v2744
      %v2765 = vpack.c.bf16 %v2747, %v2746
      %v2766 = vpack.c.bf16 %v2749, %v2748
      %v2767 = vpack.c.bf16 %v2751, %v2750
      %v2769 = vshrl.u32 %v2752, 16
      %v2771 = vrot.slane %v2769, 7
      %v2772 = vshll.u32 %v2752, 16
      %v2774 = vor.u32 %v2771, %v2772
      %v2776 = vshrl.u32 %v2753, 16
      %v2778 = vrot.slane %v2776, 7
      %v2779 = vshll.u32 %v2753, 16
      %v2781 = vor.u32 %v2778, %v2779
      %v2783 = vshrl.u32 %v2754, 16
      %v2785 = vrot.slane %v2783, 7
      %v2786 = vshll.u32 %v2754, 16
      %v2788 = vor.u32 %v2785, %v2786
      %v2790 = vshrl.u32 %v2755, 16
      %v2792 = vrot.slane %v2790, 7
      %v2793 = vshll.u32 %v2755, 16
      %v2795 = vor.u32 %v2792, %v2793
      %v2797 = vshrl.u32 %v2756, 16
      %v2799 = vrot.slane %v2797, 7
      %v2800 = vshll.u32 %v2756, 16
      %v2802 = vor.u32 %v2799, %v2800
      %v2804 = vshrl.u32 %v2757, 16
      %v2806 = vrot.slane %v2804, 7
      %v2807 = vshll.u32 %v2757, 16
      %v2809 = vor.u32 %v2806, %v2807
      %v2811 = vshrl.u32 %v2758, 16
      %v2813 = vrot.slane %v2811, 7
      %v2814 = vshll.u32 %v2758, 16
      %v2816 = vor.u32 %v2813, %v2814
      %v2818 = vshrl.u32 %v2759, 16
      %v2820 = vrot.slane %v2818, 7
      %v2821 = vshll.u32 %v2759, 16
      %v2823 = vor.u32 %v2820, %v2821
      %v2825 = vshrl.u32 %v2760, 16
      %v2827 = vrot.slane %v2825, 7
      %v2828 = vshll.u32 %v2760, 16
      %v2830 = vor.u32 %v2827, %v2828
      %v2832 = vshrl.u32 %v2761, 16
      %v2834 = vrot.slane %v2832, 7
      %v2835 = vshll.u32 %v2761, 16
      %v2837 = vor.u32 %v2834, %v2835
      %v2839 = vshrl.u32 %v2762, 16
      %v2841 = vrot.slane %v2839, 7
      %v2842 = vshll.u32 %v2762, 16
      %v2844 = vor.u32 %v2841, %v2842
      %v2846 = vshrl.u32 %v2763, 16
      %v2848 = vrot.slane %v2846, 7
      %v2849 = vshll.u32 %v2763, 16
      %v2851 = vor.u32 %v2848, %v2849
      %v2853 = vshrl.u32 %v2764, 16
      %v2855 = vrot.slane %v2853, 7
      %v2856 = vshll.u32 %v2764, 16
      %v2858 = vor.u32 %v2855, %v2856
      %v2860 = vshrl.u32 %v2765, 16
      %v2862 = vrot.slane %v2860, 7
      %v2863 = vshll.u32 %v2765, 16
      %v2865 = vor.u32 %v2862, %v2863
      %v2867 = vshrl.u32 %v2766, 16
      %v2869 = vrot.slane %v2867, 7
      %v2870 = vshll.u32 %v2766, 16
      %v2872 = vor.u32 %v2869, %v2870
      %v2874 = vshrl.u32 %v2767, 16
      %v2876 = vrot.slane %v2874, 7
      %v2877 = vshll.u32 %v2767, 16
      %v2879 = vor.u32 %v2876, %v2877
      %v2912 = vsel %vm830, 0, %v2774
      %v2913 = vsel %vm830, 0, %v2781
      %v2914 = vsel %vm830, 0, %v2788
      %v2915 = vsel %vm830, 0, %v2795
      %v2916 = vsel %vm830, 0, %v2802
      %v2917 = vsel %vm830, 0, %v2809
      %v2918 = vsel %vm830, 0, %v2816
      %v2919 = vsel %vm830, 0, %v2823
      %v2920 = vsel %vm830, 0, %v2830
      %v2921 = vsel %vm830, 0, %v2837
      %v2922 = vsel %vm830, 0, %v2844
      %v2923 = vsel %vm830, 0, %v2851
      %v2924 = vsel %vm830, 0, %v2858
      %v2925 = vsel %vm830, 0, %v2865
      %v2926 = vsel %vm830, 0, %v2872
      %v2927 = vsel %vm830, 0, %v2879
      %v2928 = vsel %vm830, %v2771, 0
      %v2929 = vsel %vm830, %v2778, 0
      %v2930 = vsel %vm830, %v2785, 0
      %v2931 = vsel %vm830, %v2792, 0
      %v2932 = vsel %vm830, %v2799, 0
      %v2933 = vsel %vm830, %v2806, 0
      %v2934 = vsel %vm830, %v2813, 0
      %v2935 = vsel %vm830, %v2820, 0
      %v2936 = vsel %vm830, %v2827, 0
      %v2937 = vsel %vm830, %v2834, 0
      %v2938 = vsel %vm830, %v2841, 0
      %v2939 = vsel %vm830, %v2848, 0
      %v2940 = vsel %vm830, %v2855, 0
      %v2941 = vsel %vm830, %v2862, 0
      %v2942 = vsel %vm830, %v2869, 0
      %v2943 = vsel %vm830, %v2876, 0
      %v2945 = vshrl.u32 %v2912, 16
      %v2947 = vshll.u32 %v2912, 16
      %v2949 = vrot.slane %v2947, 1
      %v2950 = vor.u32 %v2945, %v2949
      %v2952 = vshll.u32 %v2928, 16
      %v2954 = vrot.slane %v2952, 1
      %v2955 = vsel %vm865, %v2950, %v2954
      %v2957 = vshrl.u32 %v2913, 16
      %v2959 = vshll.u32 %v2913, 16
      %v2961 = vrot.slane %v2959, 1
      %v2962 = vor.u32 %v2957, %v2961
      %v2964 = vshll.u32 %v2929, 16
      %v2966 = vrot.slane %v2964, 1
      %v2967 = vsel %vm865, %v2962, %v2966
      %v2969 = vshrl.u32 %v2914, 16
      %v2971 = vshll.u32 %v2914, 16
      %v2973 = vrot.slane %v2971, 1
      %v2974 = vor.u32 %v2969, %v2973
      %v2976 = vshll.u32 %v2930, 16
      %v2978 = vrot.slane %v2976, 1
      %v2979 = vsel %vm865, %v2974, %v2978
      %v2981 = vshrl.u32 %v2915, 16
      %v2983 = vshll.u32 %v2915, 16
      %v2985 = vrot.slane %v2983, 1
      %v2986 = vor.u32 %v2981, %v2985
      %v2988 = vshll.u32 %v2931, 16
      %v2990 = vrot.slane %v2988, 1
      %v2991 = vsel %vm865, %v2986, %v2990
      %v2993 = vshrl.u32 %v2916, 16
      %v2995 = vshll.u32 %v2916, 16
      %v2997 = vrot.slane %v2995, 1
      %v2998 = vor.u32 %v2993, %v2997
      %v3000 = vshll.u32 %v2932, 16
      %v3002 = vrot.slane %v3000, 1
      %v3003 = vsel %vm865, %v2998, %v3002
      %v3005 = vshrl.u32 %v2917, 16
      %v3007 = vshll.u32 %v2917, 16
      %v3009 = vrot.slane %v3007, 1
      %v3010 = vor.u32 %v3005, %v3009
      %v3012 = vshll.u32 %v2933, 16
      %v3014 = vrot.slane %v3012, 1
      %v3015 = vsel %vm865, %v3010, %v3014
      %v3017 = vshrl.u32 %v2918, 16
      %v3019 = vshll.u32 %v2918, 16
      %v3021 = vrot.slane %v3019, 1
      %v3022 = vor.u32 %v3017, %v3021
      %v3024 = vshll.u32 %v2934, 16
      %v3026 = vrot.slane %v3024, 1
      %v3027 = vsel %vm865, %v3022, %v3026
      %v3029 = vshrl.u32 %v2919, 16
      %v3031 = vshll.u32 %v2919, 16
      %v3033 = vrot.slane %v3031, 1
      %v3034 = vor.u32 %v3029, %v3033
      %v3036 = vshll.u32 %v2935, 16
      %v3038 = vrot.slane %v3036, 1
      %v3039 = vsel %vm865, %v3034, %v3038
      %v3041 = vshrl.u32 %v2920, 16
      %v3043 = vshll.u32 %v2920, 16
      %v3045 = vrot.slane %v3043, 1
      %v3046 = vor.u32 %v3041, %v3045
      %v3048 = vshll.u32 %v2936, 16
      %v3050 = vrot.slane %v3048, 1
      %v3051 = vsel %vm865, %v3046, %v3050
      %v3053 = vshrl.u32 %v2921, 16
      %v3055 = vshll.u32 %v2921, 16
      %v3057 = vrot.slane %v3055, 1
      %v3058 = vor.u32 %v3053, %v3057
      %v3060 = vshll.u32 %v2937, 16
      %v3062 = vrot.slane %v3060, 1
      %v3063 = vsel %vm865, %v3058, %v3062
      %v3065 = vshrl.u32 %v2922, 16
      %v3067 = vshll.u32 %v2922, 16
      %v3069 = vrot.slane %v3067, 1
      %v3070 = vor.u32 %v3065, %v3069
      %v3072 = vshll.u32 %v2938, 16
      %v3074 = vrot.slane %v3072, 1
      %v3075 = vsel %vm865, %v3070, %v3074
      %v3077 = vshrl.u32 %v2923, 16
      %v3079 = vshll.u32 %v2923, 16
      %v3081 = vrot.slane %v3079, 1
      %v3082 = vor.u32 %v3077, %v3081
      %v3084 = vshll.u32 %v2939, 16
      %v3086 = vrot.slane %v3084, 1
      %v3087 = vsel %vm865, %v3082, %v3086
      %v3089 = vshrl.u32 %v2924, 16
      %v3091 = vshll.u32 %v2924, 16
      %v3093 = vrot.slane %v3091, 1
      %v3094 = vor.u32 %v3089, %v3093
      %v3096 = vshll.u32 %v2940, 16
      %v3098 = vrot.slane %v3096, 1
      %v3099 = vsel %vm865, %v3094, %v3098
      %v3101 = vshrl.u32 %v2925, 16
      %v3103 = vshll.u32 %v2925, 16
      %v3105 = vrot.slane %v3103, 1
      %v3106 = vor.u32 %v3101, %v3105
      %v3108 = vshll.u32 %v2941, 16
      %v3110 = vrot.slane %v3108, 1
      %v3111 = vsel %vm865, %v3106, %v3110
      %v3113 = vshrl.u32 %v2926, 16
      %v3115 = vshll.u32 %v2926, 16
      %v3117 = vrot.slane %v3115, 1
      %v3118 = vor.u32 %v3113, %v3117
      %v3120 = vshll.u32 %v2942, 16
      %v3122 = vrot.slane %v3120, 1
      %v3123 = vsel %vm865, %v3118, %v3122
      %v3154 = vrot.slane %v2912, 1
      %v3155 = vrot.slane %v2928, 1
      %v3156 = vsel %vm1090, %v3154, %v3155
      %v3157 = vrot.slane %v2913, 1
      %v3158 = vrot.slane %v2929, 1
      %v3159 = vsel %vm1090, %v3157, %v3158
      %v3160 = vrot.slane %v2914, 1
      %v3161 = vrot.slane %v2930, 1
      %v3162 = vsel %vm1090, %v3160, %v3161
      %v3163 = vrot.slane %v2915, 1
      %v3164 = vrot.slane %v2931, 1
      %v3165 = vsel %vm1090, %v3163, %v3164
      %v3166 = vrot.slane %v2916, 1
      %v3167 = vrot.slane %v2932, 1
      %v3168 = vsel %vm1090, %v3166, %v3167
      %v3169 = vrot.slane %v2917, 1
      %v3170 = vrot.slane %v2933, 1
      %v3171 = vsel %vm1090, %v3169, %v3170
      %v3172 = vrot.slane %v2918, 1
      %v3173 = vrot.slane %v2934, 1
      %v3174 = vsel %vm1090, %v3172, %v3173
      %v3175 = vrot.slane %v2919, 1
      %v3176 = vrot.slane %v2935, 1
      %v3177 = vsel %vm1090, %v3175, %v3176
      %v3178 = vrot.slane %v2920, 1
      %v3179 = vrot.slane %v2936, 1
      %v3180 = vsel %vm1090, %v3178, %v3179
      %v3181 = vrot.slane %v2921, 1
      %v3182 = vrot.slane %v2937, 1
      %v3183 = vsel %vm1090, %v3181, %v3182
      %v3184 = vrot.slane %v2922, 1
      %v3185 = vrot.slane %v2938, 1
      %v3186 = vsel %vm1090, %v3184, %v3185
      %v3187 = vrot.slane %v2923, 1
      %v3188 = vrot.slane %v2939, 1
      %v3189 = vsel %vm1090, %v3187, %v3188
      %v3190 = vrot.slane %v2924, 1
      %v3191 = vrot.slane %v2940, 1
      %v3192 = vsel %vm1090, %v3190, %v3191
      %v3193 = vrot.slane %v2925, 1
      %v3194 = vrot.slane %v2941, 1
      %v3195 = vsel %vm1090, %v3193, %v3194
      %v3196 = vrot.slane %v2926, 1
      %v3197 = vrot.slane %v2942, 1
      %v3198 = vsel %vm1090, %v3196, %v3197
      %v3200 = vshrl.u32 %v2927, 16
      %v3202 = vshll.u32 %v2927, 16
      %v3204 = vrot.slane %v3202, 1
      %v3205 = vor.u32 %v3200, %v3204
      %v3207 = vshll.u32 %v2943, 16
      %v3209 = vrot.slane %v3207, 1
      %v3210 = vsel %vm865, %v3205, %v3209
      %v3213 = vrot.slane %v2927, 1
      %v3214 = vrot.slane %v2943, 1
      %v3215 = vsel %vm1090, %v3213, %v3214
      %3216 = vrot.lane.b32.xlu0 %v877, 32
      %v3217 = vpop.permute.xlu0 %3216
      %3218 = vrot.lane.b32.xlu0 %v2955, 32
      %v3219 = vpop.permute.xlu0 %3218
      %3220 = vrot.lane.b32.xlu0 %v2967, 32
      %v3221 = vpop.permute.xlu0 %3220
      %3222 = vrot.lane.b32.xlu0 %v2979, 32
      %v3223 = vpop.permute.xlu0 %3222
      %3224 = vrot.lane.b32.xlu0 %v2991, 32
      %v3225 = vpop.permute.xlu0 %3224
      %3226 = vrot.lane.b32.xlu0 %v3003, 32
      %v3227 = vpop.permute.xlu0 %3226
      %3228 = vrot.lane.b32.xlu0 %v3015, 32
      %v3229 = vpop.permute.xlu0 %3228
      %3230 = vrot.lane.b32.xlu0 %v3027, 32
      %v3231 = vpop.permute.xlu0 %3230
      %3232 = vrot.lane.b32.xlu0 %v3039, 32
      %v3233 = vpop.permute.xlu0 %3232
      %3234 = vrot.lane.b32.xlu0 %v3051, 32
      %v3235 = vpop.permute.xlu0 %3234
      %3236 = vrot.lane.b32.xlu0 %v3063, 32
      %v3237 = vpop.permute.xlu0 %3236
      %3238 = vrot.lane.b32.xlu0 %v3075, 32
      %v3239 = vpop.permute.xlu0 %3238
      %3240 = vrot.lane.b32.xlu0 %v3087, 32
      %v3241 = vpop.permute.xlu0 %3240
      %3242 = vrot.lane.b32.xlu0 %v3099, 32
      %v3243 = vpop.permute.xlu0 %3242
      %3244 = vrot.lane.b32.xlu0 %v3111, 32
      %v3245 = vpop.permute.xlu0 %3244
      %3246 = vrot.lane.b32.xlu0 %v3123, 32
      %v3247 = vpop.permute.xlu0 %3246
      %3248 = vrot.lane.b32.xlu0 %v3156, 64
      %v3249 = vpop.permute.xlu0 %3248
      %3250 = vrot.lane.b32.xlu0 %v3159, 64
      %v3251 = vpop.permute.xlu0 %3250
      %3252 = vrot.lane.b32.xlu0 %v3162, 64
      %v3253 = vpop.permute.xlu0 %3252
      %3254 = vrot.lane.b32.xlu0 %v3165, 64
      %v3255 = vpop.permute.xlu0 %3254
      %3256 = vrot.lane.b32.xlu0 %v3168, 64
      %v3257 = vpop.permute.xlu0 %3256
      %3258 = vrot.lane.b32.xlu0 %v3171, 64
      %v3259 = vpop.permute.xlu0 %3258
      %3260 = vrot.lane.b32.xlu0 %v3174, 64
      %v3261 = vpop.permute.xlu0 %3260
      %3262 = vrot.lane.b32.xlu0 %v3177, 64
      %v3263 = vpop.permute.xlu0 %3262
      %3264 = vrot.lane.b32.xlu0 %v3180, 64
      %v3265 = vpop.permute.xlu0 %3264
      %3266 = vrot.lane.b32.xlu0 %v3183, 64
      %v3267 = vpop.permute.xlu0 %3266
      %3268 = vrot.lane.b32.xlu0 %v3186, 64
      %v3269 = vpop.permute.xlu0 %3268
      %3270 = vrot.lane.b32.xlu0 %v3189, 64
      %v3271 = vpop.permute.xlu0 %3270
      %3272 = vrot.lane.b32.xlu0 %v3192, 64
      %v3273 = vpop.permute.xlu0 %3272
      %3274 = vrot.lane.b32.xlu0 %v3195, 64
      %v3275 = vpop.permute.xlu0 %3274
      %3276 = vrot.lane.b32.xlu0 %v3198, 64
      %v3277 = vpop.permute.xlu0 %3276
      %3278 = vrot.lane.b32.xlu0 %v2912, 96
      %v3279 = vpop.permute.xlu0 %3278
      %3280 = vrot.lane.b32.xlu0 %v2913, 96
      %v3281 = vpop.permute.xlu0 %3280
      %3282 = vrot.lane.b32.xlu0 %v2914, 96
      %v3283 = vpop.permute.xlu0 %3282
      %3284 = vrot.lane.b32.xlu0 %v2915, 96
      %v3285 = vpop.permute.xlu0 %3284
      %3286 = vrot.lane.b32.xlu0 %v2916, 96
      %v3287 = vpop.permute.xlu0 %3286
      %3288 = vrot.lane.b32.xlu0 %v2917, 96
      %v3289 = vpop.permute.xlu0 %3288
      %3290 = vrot.lane.b32.xlu0 %v2918, 96
      %v3291 = vpop.permute.xlu0 %3290
      %3292 = vrot.lane.b32.xlu0 %v2919, 96
      %v3293 = vpop.permute.xlu0 %3292
      %3294 = vrot.lane.b32.xlu0 %v2920, 96
      %v3295 = vpop.permute.xlu0 %3294
      %3296 = vrot.lane.b32.xlu0 %v2921, 96
      %v3297 = vpop.permute.xlu0 %3296
      %3298 = vrot.lane.b32.xlu0 %v2922, 96
      %v3299 = vpop.permute.xlu0 %3298
      %3300 = vrot.lane.b32.xlu0 %v2923, 96
      %v3301 = vpop.permute.xlu0 %3300
      %3302 = vrot.lane.b32.xlu0 %v2924, 96
      %v3303 = vpop.permute.xlu0 %3302
      %3304 = vrot.lane.b32.xlu0 %v2925, 96
      %v3305 = vpop.permute.xlu0 %3304
      %3306 = vrot.lane.b32.xlu0 %v2926, 96
      %v3307 = vpop.permute.xlu0 %3306
      %3308 = vrot.lane.b32.xlu0 %v2927, 96
      %v3309 = vpop.permute.xlu0 %3308
      %3310 = vrot.lane.b32.xlu0 %v3156, 32
      %v3311 = vpop.permute.xlu0 %3310
      %3312 = vrot.lane.b32.xlu0 %v3159, 32
      %v3313 = vpop.permute.xlu0 %3312
      %3314 = vrot.lane.b32.xlu0 %v3162, 32
      %v3315 = vpop.permute.xlu0 %3314
      %3316 = vrot.lane.b32.xlu0 %v3165, 32
      %v3317 = vpop.permute.xlu0 %3316
      %3318 = vrot.lane.b32.xlu0 %v3168, 32
      %v3319 = vpop.permute.xlu0 %3318
      %3320 = vrot.lane.b32.xlu0 %v3171, 32
      %v3321 = vpop.permute.xlu0 %3320
      %3322 = vrot.lane.b32.xlu0 %v3174, 32
      %v3323 = vpop.permute.xlu0 %3322
      %3324 = vrot.lane.b32.xlu0 %v3177, 32
      %v3325 = vpop.permute.xlu0 %3324
      %3326 = vrot.lane.b32.xlu0 %v3180, 32
      %v3327 = vpop.permute.xlu0 %3326
      %3328 = vrot.lane.b32.xlu0 %v3183, 32
      %v3329 = vpop.permute.xlu0 %3328
      %3330 = vrot.lane.b32.xlu0 %v3186, 32
      %v3331 = vpop.permute.xlu0 %3330
      %3332 = vrot.lane.b32.xlu0 %v3189, 32
      %v3333 = vpop.permute.xlu0 %3332
      %3334 = vrot.lane.b32.xlu0 %v3192, 32
      %v3335 = vpop.permute.xlu0 %3334
      %3336 = vrot.lane.b32.xlu0 %v3195, 32
      %v3337 = vpop.permute.xlu0 %3336
      %3338 = vrot.lane.b32.xlu0 %v3198, 32
      %v3339 = vpop.permute.xlu0 %3338
      %3340 = vrot.lane.b32.xlu0 %v3215, 32
      %v3341 = vpop.permute.xlu0 %3340
      %3342 = vrot.lane.b32.xlu0 %v2913, 64
      %v3343 = vpop.permute.xlu0 %3342
      %3344 = vrot.lane.b32.xlu0 %v2914, 64
      %v3345 = vpop.permute.xlu0 %3344
      %3346 = vrot.lane.b32.xlu0 %v2915, 64
      %v3347 = vpop.permute.xlu0 %3346
      %3348 = vrot.lane.b32.xlu0 %v2916, 64
      %v3349 = vpop.permute.xlu0 %3348
      %3350 = vrot.lane.b32.xlu0 %v2917, 64
      %v3351 = vpop.permute.xlu0 %3350
      %3352 = vrot.lane.b32.xlu0 %v2918, 64
      %v3353 = vpop.permute.xlu0 %3352
      %3354 = vrot.lane.b32.xlu0 %v2919, 64
      %v3355 = vpop.permute.xlu0 %3354
      %3356 = vrot.lane.b32.xlu0 %v2920, 64
      %v3357 = vpop.permute.xlu0 %3356
      %3358 = vrot.lane.b32.xlu0 %v2921, 64
      %v3359 = vpop.permute.xlu0 %3358
      %3360 = vrot.lane.b32.xlu0 %v2922, 64
      %v3361 = vpop.permute.xlu0 %3360
      %3362 = vrot.lane.b32.xlu0 %v2923, 64
      %v3363 = vpop.permute.xlu0 %3362
      %3364 = vrot.lane.b32.xlu0 %v2924, 64
      %v3365 = vpop.permute.xlu0 %3364
      %3366 = vrot.lane.b32.xlu0 %v2925, 64
      %v3367 = vpop.permute.xlu0 %3366
      %3368 = vrot.lane.b32.xlu0 %v2926, 64
      %v3369 = vpop.permute.xlu0 %3368
      %3370 = vrot.lane.b32.xlu0 %v2927, 64
      %v3371 = vpop.permute.xlu0 %3370
      %3372 = vrot.lane.b32.xlu0 %v831, 64
      %v3373 = vpop.permute.xlu0 %3372
      %3374 = vrot.lane.b32.xlu0 %v2967, 96
      %v3375 = vpop.permute.xlu0 %3374
      %3376 = vrot.lane.b32.xlu0 %v2979, 96
      %v3377 = vpop.permute.xlu0 %3376
      %3378 = vrot.lane.b32.xlu0 %v2991, 96
      %v3379 = vpop.permute.xlu0 %3378
      %3380 = vrot.lane.b32.xlu0 %v3003, 96
      %v3381 = vpop.permute.xlu0 %3380
      %3382 = vrot.lane.b32.xlu0 %v3015, 96
      %v3383 = vpop.permute.xlu0 %3382
      %3384 = vrot.lane.b32.xlu0 %v3027, 96
      %v3385 = vpop.permute.xlu0 %3384
      %3386 = vrot.lane.b32.xlu0 %v3039, 96
      %v3387 = vpop.permute.xlu0 %3386
      %3388 = vrot.lane.b32.xlu0 %v3051, 96
      %v3389 = vpop.permute.xlu0 %3388
      %3390 = vrot.lane.b32.xlu0 %v3063, 96
      %v3391 = vpop.permute.xlu0 %3390
      %3392 = vrot.lane.b32.xlu0 %v3075, 96
      %v3393 = vpop.permute.xlu0 %3392
      %3394 = vrot.lane.b32.xlu0 %v3087, 96
      %v3395 = vpop.permute.xlu0 %3394
      %3396 = vrot.lane.b32.xlu0 %v3099, 96
      %v3397 = vpop.permute.xlu0 %3396
      %3398 = vrot.lane.b32.xlu0 %v3111, 96
      %v3399 = vpop.permute.xlu0 %3398
      %3400 = vrot.lane.b32.xlu0 %v3123, 96
      %v3401 = vpop.permute.xlu0 %3400
      %3402 = vrot.lane.b32.xlu0 %v3210, 96
      %v3403 = vpop.permute.xlu0 %3402
      %3404 = vrot.lane.b32.xlu0 %v877, 96
      %v3405 = vpop.permute.xlu0 %3404
      %v3407 = vsel %vm1511, %v831, %v3217
      %v3409 = vsel %vm1511, %v2912, %v3219
      %v3411 = vsel %vm1511, %v2913, %v3221
      %v3413 = vsel %vm1511, %v2914, %v3223
      %v3415 = vsel %vm1511, %v2915, %v3225
      %v3417 = vsel %vm1511, %v2916, %v3227
      %v3419 = vsel %vm1511, %v2917, %v3229
      %v3421 = vsel %vm1511, %v2918, %v3231
      %v3423 = vsel %vm1511, %v2919, %v3233
      %v3425 = vsel %vm1511, %v2920, %v3235
      %v3427 = vsel %vm1511, %v2921, %v3237
      %v3429 = vsel %vm1511, %v2922, %v3239
      %v3431 = vsel %vm1511, %v2923, %v3241
      %v3433 = vsel %vm1511, %v2924, %v3243
      %v3435 = vsel %vm1511, %v2925, %v3245
      %v3437 = vsel %vm1511, %v2926, %v3247
      %v3438 = vsel %vm1643, %v3407, %v1411
      %v3440 = vsel %vm1643, %v3409, %v3249
      %v3442 = vsel %vm1643, %v3411, %v3251
      %v3444 = vsel %vm1643, %v3413, %v3253
      %v3446 = vsel %vm1643, %v3415, %v3255
      %v3448 = vsel %vm1643, %v3417, %v3257
      %v3450 = vsel %vm1643, %v3419, %v3259
      %v3452 = vsel %vm1643, %v3421, %v3261
      %v3454 = vsel %vm1643, %v3423, %v3263
      %v3456 = vsel %vm1643, %v3425, %v3265
      %v3458 = vsel %vm1643, %v3427, %v3267
      %v3460 = vsel %vm1643, %v3429, %v3269
      %v3462 = vsel %vm1643, %v3431, %v3271
      %v3464 = vsel %vm1643, %v3433, %v3273
      %v3466 = vsel %vm1643, %v3435, %v3275
      %v3468 = vsel %vm1643, %v3437, %v3277
      %vm3469 = vcmask 785408
      %v3471 = vsel %vm3469, %v3438, %v3279
      %v3474 = vsel %vm3469, %v3440, %v3281
      %v3477 = vsel %vm3469, %v3442, %v3283
      %v3480 = vsel %vm3469, %v3444, %v3285
      %v3483 = vsel %vm3469, %v3446, %v3287
      %v3486 = vsel %vm3469, %v3448, %v3289
      %v3489 = vsel %vm3469, %v3450, %v3291
      %v3492 = vsel %vm3469, %v3452, %v3293
      %v3495 = vsel %vm3469, %v3454, %v3295
      %v3498 = vsel %vm3469, %v3456, %v3297
      %v3501 = vsel %vm3469, %v3458, %v3299
      %v3504 = vsel %vm3469, %v3460, %v3301
      %v3507 = vsel %vm3469, %v3462, %v3303
      %v3510 = vsel %vm3469, %v3464, %v3305
      %v3513 = vsel %vm3469, %v3466, %v3307
      %v3516 = vsel %vm3469, %v3468, %v3309
      %v3520 = vsel %vm1511, %v2955, %v3311
      %v3523 = vsel %vm1511, %v2967, %v3313
      %v3526 = vsel %vm1511, %v2979, %v3315
      %v3529 = vsel %vm1511, %v2991, %v3317
      %v3532 = vsel %vm1511, %v3003, %v3319
      %v3535 = vsel %vm1511, %v3015, %v3321
      %v3538 = vsel %vm1511, %v3027, %v3323
      %v3541 = vsel %vm1511, %v3039, %v3325
      %v3544 = vsel %vm1511, %v3051, %v3327
      %v3547 = vsel %vm1511, %v3063, %v3329
      %v3550 = vsel %vm1511, %v3075, %v3331
      %v3553 = vsel %vm1511, %v3087, %v3333
      %v3556 = vsel %vm1511, %v3099, %v3335
      %v3559 = vsel %vm1511, %v3111, %v3337
      %v3562 = vsel %vm1511, %v3123, %v3339
      %v3565 = vsel %vm1511, %v3210, %v3341
      %v3567 = vsel %vm1643, %v3520, %v3343
      %v3569 = vsel %vm1643, %v3523, %v3345
      %v3571 = vsel %vm1643, %v3526, %v3347
      %v3573 = vsel %vm1643, %v3529, %v3349
      %v3575 = vsel %vm1643, %v3532, %v3351
      %v3577 = vsel %vm1643, %v3535, %v3353
      %v3579 = vsel %vm1643, %v3538, %v3355
      %v3581 = vsel %vm1643, %v3541, %v3357
      %v3583 = vsel %vm1643, %v3544, %v3359
      %v3585 = vsel %vm1643, %v3547, %v3361
      %v3587 = vsel %vm1643, %v3550, %v3363
      %v3589 = vsel %vm1643, %v3553, %v3365
      %v3591 = vsel %vm1643, %v3556, %v3367
      %v3593 = vsel %vm1643, %v3559, %v3369
      %v3595 = vsel %vm1643, %v3562, %v3371
      %v3597 = vsel %vm1643, %v3565, %v3373
      %v3599 = vsel %vm3469, %v3567, %v3375
      %v3602 = vsel %vm3469, %v3569, %v3377
      %v3605 = vsel %vm3469, %v3571, %v3379
      %v3608 = vsel %vm3469, %v3573, %v3381
      %v3611 = vsel %vm3469, %v3575, %v3383
      %v3614 = vsel %vm3469, %v3577, %v3385
      %v3617 = vsel %vm3469, %v3579, %v3387
      %v3620 = vsel %vm3469, %v3581, %v3389
      %v3623 = vsel %vm3469, %v3583, %v3391
      %v3626 = vsel %vm3469, %v3585, %v3393
      %v3629 = vsel %vm3469, %v3587, %v3395
      %v3632 = vsel %vm3469, %v3589, %v3397
      %v3635 = vsel %vm3469, %v3591, %v3399
      %v3638 = vsel %vm3469, %v3593, %v3401
      %v3641 = vsel %vm3469, %v3595, %v3403
      %v3644 = vsel %vm3469, %v3597, %v3405
      %v3646 = vld [vmem:[%s11] sm:$0xf]
      %v3647 = vld [vmem:[%s11 + $0x4] sm:$0xf]
      %v3648 = vld [vmem:[%s11 + $0x8] sm:$0xf]
      %v3649 = vld [vmem:[%s11 + $0xc] sm:$0xf]
      %v3650 = vld [vmem:[%s11 + $0x10] sm:$0xf]
      %v3651 = vld [vmem:[%s11 + $0x14] sm:$0xf]
      %v3652 = vld [vmem:[%s11 + $0x18] sm:$0xf]
      %v3653 = vld [vmem:[%s11 + $0x1c] sm:$0xf]
      %v3654 = vld [vmem:[%s11 + $0x20] sm:$0xf]
      %v3655 = vld [vmem:[%s11 + $0x24] sm:$0xf]
      %v3656 = vld [vmem:[%s11 + $0x28] sm:$0xf]
      %v3657 = vld [vmem:[%s11 + $0x2c] sm:$0xf]
      %v3658 = vld [vmem:[%s11 + $0x30] sm:$0xf]
      %v3659 = vld [vmem:[%s11 + $0x34] sm:$0xf]
      %v3660 = vld [vmem:[%s11 + $0x38] sm:$0xf]
      %v3661 = vld [vmem:[%s11 + $0x3c] sm:$0xf]
      %v3662 = vld [vmem:[%s11 + $0x40] sm:$0xf]
      %v3663 = vld [vmem:[%s11 + $0x44] sm:$0xf]
      %v3664 = vld [vmem:[%s11 + $0x48] sm:$0xf]
      %v3665 = vld [vmem:[%s11 + $0x4c] sm:$0xf]
      %v3666 = vld [vmem:[%s11 + $0x50] sm:$0xf]
      %v3667 = vld [vmem:[%s11 + $0x54] sm:$0xf]
      %v3668 = vld [vmem:[%s11 + $0x58] sm:$0xf]
      %v3669 = vld [vmem:[%s11 + $0x5c] sm:$0xf]
      %v3670 = vld [vmem:[%s11 + $0x60] sm:$0xf]
      %v3671 = vld [vmem:[%s11 + $0x64] sm:$0xf]
      %v3672 = vld [vmem:[%s11 + $0x68] sm:$0xf]
      %v3673 = vld [vmem:[%s11 + $0x6c] sm:$0xf]
      %v3674 = vld [vmem:[%s11 + $0x70] sm:$0xf]
      %v3675 = vld [vmem:[%s11 + $0x74] sm:$0xf]
      %v3676 = vld [vmem:[%s11 + $0x78] sm:$0xf]
      %v3677 = vld [vmem:[%s11 + $0x7c] sm:$0xf]
      %v3678 = vld [vmem:[%s11 + $0x80] sm:$0xf]
      %v3679 = vld [vmem:[%s11 + $0x84] sm:$0xf]
      %v3680 = vld [vmem:[%s11 + $0x88] sm:$0xf]
      %v3681 = vld [vmem:[%s11 + $0x8c] sm:$0xf]
      %v3718 = vunpack.c.l.b16 %v3646
      %v3719 = vunpack.c.l.b16 %v3647
      %v3720 = vunpack.c.l.b16 %v3648
      %v3721 = vunpack.c.l.b16 %v3649
      %v3722 = vunpack.c.l.b16 %v3650
      %v3723 = vunpack.c.l.b16 %v3651
      %v3724 = vunpack.c.l.b16 %v3652
      %v3725 = vunpack.c.l.b16 %v3653
      %v3726 = vunpack.c.l.b16 %v3654
      %v3727 = vunpack.c.l.b16 %v3655
      %v3728 = vunpack.c.l.b16 %v3656
      %v3729 = vunpack.c.l.b16 %v3657
      %v3730 = vunpack.c.l.b16 %v3658
      %v3731 = vunpack.c.l.b16 %v3659
      %v3732 = vunpack.c.l.b16 %v3660
      %v3733 = vunpack.c.l.b16 %v3661
      %v3734 = vunpack.c.l.b16 %v3662
      %v3735 = vunpack.c.l.b16 %v3663
      %v3736 = vunpack.c.l.b16 %v3664
      %v3737 = vunpack.c.l.b16 %v3665
      %v3738 = vunpack.c.l.b16 %v3666
      %v3739 = vunpack.c.l.b16 %v3667
      %v3740 = vunpack.c.l.b16 %v3668
      %v3741 = vunpack.c.l.b16 %v3669
      %v3742 = vunpack.c.l.b16 %v3670
      %v3743 = vunpack.c.l.b16 %v3671
      %v3744 = vunpack.c.l.b16 %v3672
      %v3745 = vunpack.c.l.b16 %v3673
      %v3746 = vunpack.c.l.b16 %v3674
      %v3747 = vunpack.c.l.b16 %v3675
      %v3748 = vunpack.c.l.b16 %v3676
      %v3749 = vunpack.c.l.b16 %v3677
      %v3750 = vunpack.c.l.b16 %v3678
      %v3751 = vunpack.c.l.b16 %v3679
      %v3752 = vunpack.c.l.b16 %v3680
      %v3753 = vunpack.c.l.b16 %v3681
      %v3754 = vpack.c.b16 %v3719, %v3718
      %v3755 = vpack.c.b16 %v3721, %v3720
      %v3756 = vpack.c.b16 %v3723, %v3722
      %v3757 = vpack.c.b16 %v3725, %v3724
      %v3758 = vpack.c.b16 %v3727, %v3726
      %v3759 = vpack.c.b16 %v3729, %v3728
      %v3760 = vpack.c.b16 %v3731, %v3730
      %v3761 = vpack.c.b16 %v3733, %v3732
      %v3762 = vpack.c.b16 %v3735, %v3734
      %v3763 = vpack.c.b16 %v3737, %v3736
      %v3764 = vpack.c.b16 %v3739, %v3738
      %v3765 = vpack.c.b16 %v3741, %v3740
      %v3766 = vpack.c.b16 %v3743, %v3742
      %v3767 = vpack.c.b16 %v3745, %v3744
      %v3768 = vpack.c.b16 %v3747, %v3746
      %v3769 = vpack.c.b16 %v3749, %v3748
      %v3770 = vpack.c.b16 %v3751, %v3750
      %v3771 = vpack.c.b16 %v3753, %v3752
      %v3791 = vsel %vm1511, %v3159, 0
      %v3794 = vsel %vm1511, %v3162, 0
      %v3797 = vsel %vm1511, %v3165, 0
      %v3800 = vsel %vm1511, %v3168, 0
      %v3803 = vsel %vm1511, %v3171, 0
      %v3806 = vsel %vm1511, %v3174, 0
      %v3809 = vsel %vm1511, %v3177, 0
      %v3812 = vsel %vm1511, %v3180, 0
      %v3815 = vsel %vm1511, %v3183, 0
      %v3818 = vsel %vm1511, %v3186, 0
      %v3821 = vsel %vm1511, %v3189, 0
      %v3824 = vsel %vm1511, %v3192, 0
      %v3827 = vsel %vm1511, %v3195, 0
      %v3830 = vsel %vm1511, %v3198, 0
      %v3833 = vsel %vm1511, %v3215, 0
      %v3836 = vsel %vm1511, %v1093, 0
      %3838 = vmatprep.subr.bf16.mxu0 0
      %3839 = vmatpush1.bf16.msra.mxu0 %v3761
      %3840 = vmatprep.subr.bf16.mxu0 0
      %3841 = vmatpush1.bf16.msra.mxu0 %v3760
      %3842 = vmatprep.subr.bf16.mxu0 0
      %3843 = vmatpush1.bf16.msra.mxu0 %v3759
      %3844 = vmatprep.subr.bf16.mxu0 0
      %3845 = vmatpush1.bf16.msra.mxu0 %v3758
      %3846 = vmatprep.subr.bf16.mxu0 0
      %3847 = vmatpush1.bf16.msra.mxu0 %v3757
      %3848 = vmatprep.subr.bf16.mxu0 0
      %3849 = vmatpush1.bf16.msra.mxu0 %v3756
      %3850 = vmatprep.subr.bf16.mxu0 0
      %3851 = vmatpush1.bf16.msra.mxu0 %v3755
      %3852 = vmatprep.subr.bf16.mxu0 0
      %3853 = vmatpush1.bf16.msra.mxu0 %v3754
      %3854 = vmatprep.subr.bf16.mxu0 0
      %3855 = vmatpush2.bf16.msra.mxu0 %v3769
      %3856 = vmatprep.subr.bf16.mxu0 0
      %3857 = vmatpush2.bf16.msra.mxu0 %v3768
      %3858 = vmatprep.subr.bf16.mxu0 0
      %3859 = vmatpush2.bf16.msra.mxu0 %v3767
      %3860 = vmatprep.subr.bf16.mxu0 0
      %3861 = vmatpush2.bf16.msra.mxu0 %v3766
      %3862 = vmatprep.subr.bf16.mxu0 0
      %3863 = vmatpush2.bf16.msra.mxu0 %v3765
      %3864 = vmatprep.subr.bf16.mxu0 0
      %3865 = vmatpush2.bf16.msra.mxu0 %v3764
      %3866 = vmatprep.subr.bf16.mxu0 0
      %3867 = vmatpush2.bf16.msra.mxu0 %v3763
      %3868 = vmatprep.subr.bf16.mxu0 0
      %3869 = vmatpush2.bf16.msra.mxu0 %v3762
      %3870 = vmatprep.mubr.bf16.mxu0 %v3599
      %3871 = vmatmul.mubr.bf16.gmra.mxu0 %v3471
      %v3872 = vpop.f32.mrf.mxu0
      %v3873 = vadd.f32 0.0, %v3872
      %v3874 = vpop.f32.mrf.mxu0
      %v3875 = vpop.f32.mrf.mxu0
      %v3876 = vadd.f32 0.0, %v3875
      %v3877 = vpop.f32.mrf.mxu0
      %3878 = vmatprep.mubr.bf16.mxu0 %v3602
      %3879 = vmatmul.mubr.bf16.gmra.mxu0 %v3474
      %v3880 = vpop.f32.mrf.mxu0
      %v3881 = vadd.f32 0.0, %v3880
      %v3882 = vpop.f32.mrf.mxu0
      %v3883 = vpop.f32.mrf.mxu0
      %v3884 = vadd.f32 0.0, %v3883
      %v3885 = vpop.f32.mrf.mxu0
      %3886 = vmatprep.mubr.bf16.mxu0 %v3605
      %3887 = vmatmul.mubr.bf16.gmra.mxu0 %v3477
      %v3888 = vpop.f32.mrf.mxu0
      %v3889 = vadd.f32 0.0, %v3888
      %v3890 = vpop.f32.mrf.mxu0
      %v3891 = vpop.f32.mrf.mxu0
      %v3892 = vadd.f32 0.0, %v3891
      %v3893 = vpop.f32.mrf.mxu0
      %3894 = vmatprep.mubr.bf16.mxu0 %v3608
      %3895 = vmatmul.mubr.bf16.gmra.mxu0 %v3480
      %v3896 = vpop.f32.mrf.mxu0
      %v3897 = vadd.f32 0.0, %v3896
      %v3898 = vpop.f32.mrf.mxu0
      %v3899 = vpop.f32.mrf.mxu0
      %v3900 = vadd.f32 0.0, %v3899
      %v3901 = vpop.f32.mrf.mxu0
      %3902 = vmatprep.mubr.bf16.mxu0 %v3611
      %3903 = vmatmul.mubr.bf16.gmra.mxu0 %v3483
      %v3904 = vpop.f32.mrf.mxu0
      %v3905 = vadd.f32 0.0, %v3904
      %v3906 = vpop.f32.mrf.mxu0
      %v3907 = vpop.f32.mrf.mxu0
      %v3908 = vadd.f32 0.0, %v3907
      %v3909 = vpop.f32.mrf.mxu0
      %3910 = vmatprep.mubr.bf16.mxu0 %v3614
      %3911 = vmatmul.mubr.bf16.gmra.mxu0 %v3486
      %v3912 = vpop.f32.mrf.mxu0
      %v3913 = vadd.f32 0.0, %v3912
      %v3914 = vpop.f32.mrf.mxu0
      %v3915 = vpop.f32.mrf.mxu0
      %v3916 = vadd.f32 0.0, %v3915
      %v3917 = vpop.f32.mrf.mxu0
      %3918 = vmatprep.mubr.bf16.mxu0 %v3617
      %3919 = vmatmul.mubr.bf16.gmra.mxu0 %v3489
      %v3920 = vpop.f32.mrf.mxu0
      %v3921 = vadd.f32 0.0, %v3920
      %v3922 = vpop.f32.mrf.mxu0
      %v3923 = vpop.f32.mrf.mxu0
      %v3924 = vadd.f32 0.0, %v3923
      %v3925 = vpop.f32.mrf.mxu0
      %3926 = vmatprep.mubr.bf16.mxu0 %v3620
      %3927 = vmatmul.mubr.bf16.gmra.mxu0 %v3492
      %v3928 = vpop.f32.mrf.mxu0
      %v3929 = vadd.f32 0.0, %v3928
      %v3930 = vpop.f32.mrf.mxu0
      %v3931 = vpop.f32.mrf.mxu0
      %v3932 = vadd.f32 0.0, %v3931
      %v3933 = vpop.f32.mrf.mxu0
      %3934 = vmatprep.mubr.bf16.mxu0 %v3623
      %3935 = vmatmul.mubr.bf16.gmra.mxu0 %v3495
      %v3936 = vpop.f32.mrf.mxu0
      %v3937 = vadd.f32 0.0, %v3936
      %v3938 = vpop.f32.mrf.mxu0
      %v3939 = vpop.f32.mrf.mxu0
      %v3940 = vadd.f32 0.0, %v3939
      %v3941 = vpop.f32.mrf.mxu0
      %3942 = vmatprep.mubr.bf16.mxu0 %v3626
      %3943 = vmatmul.mubr.bf16.gmra.mxu0 %v3498
      %v3944 = vpop.f32.mrf.mxu0
      %v3945 = vadd.f32 0.0, %v3944
      %v3946 = vpop.f32.mrf.mxu0
      %v3947 = vpop.f32.mrf.mxu0
      %v3948 = vadd.f32 0.0, %v3947
      %v3949 = vpop.f32.mrf.mxu0
      %3950 = vmatprep.mubr.bf16.mxu0 %v3629
      %3951 = vmatmul.mubr.bf16.gmra.mxu0 %v3501
      %v3952 = vpop.f32.mrf.mxu0
      %v3953 = vadd.f32 0.0, %v3952
      %v3954 = vpop.f32.mrf.mxu0
      %v3955 = vpop.f32.mrf.mxu0
      %v3956 = vadd.f32 0.0, %v3955
      %v3957 = vpop.f32.mrf.mxu0
      %3958 = vmatprep.mubr.bf16.mxu0 %v3632
      %3959 = vmatmul.mubr.bf16.gmra.mxu0 %v3504
      %v3960 = vpop.f32.mrf.mxu0
      %v3961 = vadd.f32 0.0, %v3960
      %v3962 = vpop.f32.mrf.mxu0
      %v3963 = vpop.f32.mrf.mxu0
      %v3964 = vadd.f32 0.0, %v3963
      %v3965 = vpop.f32.mrf.mxu0
      %3966 = vmatprep.mubr.bf16.mxu0 %v3635
      %3967 = vmatmul.mubr.bf16.gmra.mxu0 %v3507
      %v3968 = vpop.f32.mrf.mxu0
      %v3969 = vadd.f32 0.0, %v3968
      %v3970 = vpop.f32.mrf.mxu0
      %v3971 = vpop.f32.mrf.mxu0
      %v3972 = vadd.f32 0.0, %v3971
      %v3973 = vpop.f32.mrf.mxu0
      %3974 = vmatprep.mubr.bf16.mxu0 %v3638
      %3975 = vmatmul.mubr.bf16.gmra.mxu0 %v3510
      %v3976 = vpop.f32.mrf.mxu0
      %v3977 = vadd.f32 0.0, %v3976
      %v3978 = vpop.f32.mrf.mxu0
      %v3979 = vpop.f32.mrf.mxu0
      %v3980 = vadd.f32 0.0, %v3979
      %v3981 = vpop.f32.mrf.mxu0
      %3982 = vmatprep.mubr.bf16.mxu0 %v3641
      %3983 = vmatmul.mubr.bf16.gmra.mxu0 %v3513
      %v3984 = vpop.f32.mrf.mxu0
      %v3985 = vadd.f32 0.0, %v3984
      %v3986 = vpop.f32.mrf.mxu0
      %v3987 = vpop.f32.mrf.mxu0
      %v3988 = vadd.f32 0.0, %v3987
      %v3989 = vpop.f32.mrf.mxu0
      %3990 = vmatprep.mubr.bf16.mxu0 %v3644
      %3991 = vmatmul.mubr.bf16.gmra.mxu0 %v3516
      %v3992 = vpop.f32.mrf.mxu0
      %v3993 = vadd.f32 0.0, %v3992
      %v3994 = vpop.f32.mrf.mxu0
      %v3995 = vpop.f32.mrf.mxu0
      %v3996 = vadd.f32 0.0, %v3995
      %v3997 = vpop.f32.mrf.mxu0
      %3998 = vdwg.mxu0
      %3999 = vmatprep.subr.bf16.mxu0 0
      %4000 = vmatpush1.bf16.msra.mxu0 0
      %4001 = vmatprep.subr.bf16.mxu0 0
      %4002 = vmatpush1.bf16.msra.mxu0 0
      %4003 = vmatprep.subr.bf16.mxu0 0
      %4004 = vmatpush1.bf16.msra.mxu0 0
      %4005 = vmatprep.subr.bf16.mxu0 0
      %4006 = vmatpush1.bf16.msra.mxu0 0
      %4007 = vmatprep.subr.bf16.mxu0 0
      %4008 = vmatpush1.bf16.msra.mxu0 0
      %4009 = vmatprep.subr.bf16.mxu0 0
      %4010 = vmatpush1.bf16.msra.mxu0 0
      %4011 = vmatprep.subr.bf16.mxu0 0
      %4012 = vmatpush1.bf16.msra.mxu0 %v3771
      %4013 = vmatprep.subr.bf16.mxu0 0
      %4014 = vmatpush1.bf16.msra.mxu0 %v3770
      %4015 = vmatprep.subr.bf16.mxu0 0
      %4016 = vmatpush2.bf16.msra.mxu0 0
      %4017 = vmatprep.subr.bf16.mxu0 0
      %4018 = vmatpush2.bf16.msra.mxu0 0
      %4019 = vmatprep.subr.bf16.mxu0 0
      %4020 = vmatpush2.bf16.msra.mxu0 0
      %4021 = vmatprep.subr.bf16.mxu0 0
      %4022 = vmatpush2.bf16.msra.mxu0 0
      %4023 = vmatprep.subr.bf16.mxu0 0
      %4024 = vmatpush2.bf16.msra.mxu0 0
      %4025 = vmatprep.subr.bf16.mxu0 0
      %4026 = vmatpush2.bf16.msra.mxu0 0
      %4027 = vmatprep.subr.bf16.mxu0 0
      %4028 = vmatpush2.bf16.msra.mxu0 0
      %4029 = vmatprep.subr.bf16.mxu0 0
      %4030 = vmatpush2.bf16.msra.mxu0 0
      %4031 = vmatprep.mubr.bf16.mxu0 0
      %4032 = vmatmul.mubr.bf16.gmra.mxu0 %v3791
      %v4033 = vpop.f32.mrf.mxu0
      %v4034 = vadd.f32 %v3873, %v4033
      %v4035 = vpop.f32.mrf.mxu0
      %v4036 = vpop.f32.mrf.mxu0
      %v4037 = vadd.f32 %v3876, %v4036
      %v4038 = vpop.f32.mrf.mxu0
      %4039 = vmatprep.mubr.bf16.mxu0 0
      %4040 = vmatmul.mubr.bf16.gmra.mxu0 %v3794
      %v4041 = vpop.f32.mrf.mxu0
      %v4042 = vadd.f32 %v3881, %v4041
      %v4043 = vpop.f32.mrf.mxu0
      %v4044 = vpop.f32.mrf.mxu0
      %v4045 = vadd.f32 %v3884, %v4044
      %v4046 = vpop.f32.mrf.mxu0
      %4047 = vmatprep.mubr.bf16.mxu0 0
      %4048 = vmatmul.mubr.bf16.gmra.mxu0 %v3797
      %v4049 = vpop.f32.mrf.mxu0
      %v4050 = vadd.f32 %v3889, %v4049
      %v4051 = vpop.f32.mrf.mxu0
      %v4052 = vpop.f32.mrf.mxu0
      %v4053 = vadd.f32 %v3892, %v4052
      %v4054 = vpop.f32.mrf.mxu0
      %4055 = vmatprep.mubr.bf16.mxu0 0
      %4056 = vmatmul.mubr.bf16.gmra.mxu0 %v3800
      %v4057 = vpop.f32.mrf.mxu0
      %v4058 = vadd.f32 %v3897, %v4057
      %v4059 = vpop.f32.mrf.mxu0
      %v4060 = vpop.f32.mrf.mxu0
      %v4061 = vadd.f32 %v3900, %v4060
      %v4062 = vpop.f32.mrf.mxu0
      %4063 = vmatprep.mubr.bf16.mxu0 0
      %4064 = vmatmul.mubr.bf16.gmra.mxu0 %v3803
      %v4065 = vpop.f32.mrf.mxu0
      %v4066 = vadd.f32 %v3905, %v4065
      %v4067 = vpop.f32.mrf.mxu0
      %v4068 = vpop.f32.mrf.mxu0
      %v4069 = vadd.f32 %v3908, %v4068
      %v4070 = vpop.f32.mrf.mxu0
      %4071 = vmatprep.mubr.bf16.mxu0 0
      %4072 = vmatmul.mubr.bf16.gmra.mxu0 %v3806
      %v4073 = vpop.f32.mrf.mxu0
      %v4074 = vadd.f32 %v3913, %v4073
      %v4075 = vpop.f32.mrf.mxu0
      %v4076 = vpop.f32.mrf.mxu0
      %v4077 = vadd.f32 %v3916, %v4076
      %v4078 = vpop.f32.mrf.mxu0
      %4079 = vmatprep.mubr.bf16.mxu0 0
      %4080 = vmatmul.mubr.bf16.gmra.mxu0 %v3809
      %v4081 = vpop.f32.mrf.mxu0
      %v4082 = vadd.f32 %v3921, %v4081
      %v4083 = vpop.f32.mrf.mxu0
      %v4084 = vpop.f32.mrf.mxu0
      %v4085 = vadd.f32 %v3924, %v4084
      %v4086 = vpop.f32.mrf.mxu0
      %4087 = vmatprep.mubr.bf16.mxu0 0
      %4088 = vmatmul.mubr.bf16.gmra.mxu0 %v3812
      %v4089 = vpop.f32.mrf.mxu0
      %v4090 = vadd.f32 %v3929, %v4089
      %v4091 = vpop.f32.mrf.mxu0
      %v4092 = vpop.f32.mrf.mxu0
      %v4093 = vadd.f32 %v3932, %v4092
      %v4094 = vpop.f32.mrf.mxu0
      %4095 = vmatprep.mubr.bf16.mxu0 0
      %4096 = vmatmul.mubr.bf16.gmra.mxu0 %v3815
      %v4097 = vpop.f32.mrf.mxu0
      %v4098 = vadd.f32 %v3937, %v4097
      %v4099 = vpop.f32.mrf.mxu0
      %v4100 = vpop.f32.mrf.mxu0
      %v4101 = vadd.f32 %v3940, %v4100
      %v4102 = vpop.f32.mrf.mxu0
      %4103 = vmatprep.mubr.bf16.mxu0 0
      %4104 = vmatmul.mubr.bf16.gmra.mxu0 %v3818
      %v4105 = vpop.f32.mrf.mxu0
      %v4106 = vadd.f32 %v3945, %v4105
      %v4107 = vpop.f32.mrf.mxu0
      %v4108 = vpop.f32.mrf.mxu0
      %v4109 = vadd.f32 %v3948, %v4108
      %v4110 = vpop.f32.mrf.mxu0
      %4111 = vmatprep.mubr.bf16.mxu0 0
      %4112 = vmatmul.mubr.bf16.gmra.mxu0 %v3821
      %v4113 = vpop.f32.mrf.mxu0
      %v4114 = vadd.f32 %v3953, %v4113
      %v4115 = vpop.f32.mrf.mxu0
      %v4116 = vpop.f32.mrf.mxu0
      %v4117 = vadd.f32 %v3956, %v4116
      %v4118 = vpop.f32.mrf.mxu0
      %4119 = vmatprep.mubr.bf16.mxu0 0
      %4120 = vmatmul.mubr.bf16.gmra.mxu0 %v3824
      %v4121 = vpop.f32.mrf.mxu0
      %v4122 = vadd.f32 %v3961, %v4121
      %v4123 = vpop.f32.mrf.mxu0
      %v4124 = vpop.f32.mrf.mxu0
      %v4125 = vadd.f32 %v3964, %v4124
      %v4126 = vpop.f32.mrf.mxu0
      %4127 = vmatprep.mubr.bf16.mxu0 0
      %4128 = vmatmul.mubr.bf16.gmra.mxu0 %v3827
      %v4129 = vpop.f32.mrf.mxu0
      %v4130 = vadd.f32 %v3969, %v4129
      %v4131 = vpop.f32.mrf.mxu0
      %v4132 = vpop.f32.mrf.mxu0
      %v4133 = vadd.f32 %v3972, %v4132
      %v4134 = vpop.f32.mrf.mxu0
      %4135 = vmatprep.mubr.bf16.mxu0 0
      %4136 = vmatmul.mubr.bf16.gmra.mxu0 %v3830
      %v4137 = vpop.f32.mrf.mxu0
      %v4138 = vadd.f32 %v3977, %v4137
      %v4139 = vpop.f32.mrf.mxu0
      %v4140 = vpop.f32.mrf.mxu0
      %v4141 = vadd.f32 %v3980, %v4140
      %v4142 = vpop.f32.mrf.mxu0
      %4143 = vmatprep.mubr.bf16.mxu0 0
      %4144 = vmatmul.mubr.bf16.gmra.mxu0 %v3833
      %v4145 = vpop.f32.mrf.mxu0
      %v4146 = vadd.f32 %v3985, %v4145
      %v4147 = vpop.f32.mrf.mxu0
      %v4148 = vpop.f32.mrf.mxu0
      %v4149 = vadd.f32 %v3988, %v4148
      %v4150 = vpop.f32.mrf.mxu0
      %4151 = vmatprep.mubr.bf16.mxu0 0
      %4152 = vmatmul.mubr.bf16.gmra.mxu0 %v3836
      %v4153 = vpop.f32.mrf.mxu0
      %v4154 = vadd.f32 %v3993, %v4153
      %v4155 = vpop.f32.mrf.mxu0
      %v4156 = vpop.f32.mrf.mxu0
      %v4157 = vadd.f32 %v3996, %v4156
      %v4158 = vpop.f32.mrf.mxu0
      %4159 = vdwg.mxu0
      %v4160 = vld [vmem:[%s12] sm:$0x1]
      %v4162 = vlaneseq
      %v4163 = vshrl.u32 %v4162, 7
      %v4164 = vsub.s32 0, %v4163
      %v4165 = vrot.slane %v4160, %v4164
      %v4167 = vmul.f32 %v4034, %v4165
      %v4168 = vmul.f32 %v4037, %v4165
      %v4169 = vmul.f32 %v4042, %v4165
      %v4170 = vmul.f32 %v4045, %v4165
      %v4171 = vmul.f32 %v4050, %v4165
      %v4172 = vmul.f32 %v4053, %v4165
      %v4173 = vmul.f32 %v4058, %v4165
      %v4174 = vmul.f32 %v4061, %v4165
      %v4175 = vmul.f32 %v4066, %v4165
      %v4176 = vmul.f32 %v4069, %v4165
      %v4177 = vmul.f32 %v4074, %v4165
      %v4178 = vmul.f32 %v4077, %v4165
      %v4179 = vmul.f32 %v4082, %v4165
      %v4180 = vmul.f32 %v4085, %v4165
      %v4181 = vmul.f32 %v4090, %v4165
      %v4182 = vmul.f32 %v4093, %v4165
      %v4183 = vmul.f32 %v4098, %v4165
      %v4184 = vmul.f32 %v4101, %v4165
      %v4185 = vmul.f32 %v4106, %v4165
      %v4186 = vmul.f32 %v4109, %v4165
      %v4187 = vmul.f32 %v4114, %v4165
      %v4188 = vmul.f32 %v4117, %v4165
      %v4189 = vmul.f32 %v4122, %v4165
      %v4190 = vmul.f32 %v4125, %v4165
      %v4191 = vmul.f32 %v4130, %v4165
      %v4192 = vmul.f32 %v4133, %v4165
      %v4193 = vmul.f32 %v4138, %v4165
      %v4194 = vmul.f32 %v4141, %v4165
      %v4195 = vmul.f32 %v4146, %v4165
      %v4196 = vmul.f32 %v4149, %v4165
      %v4197 = vmul.f32 %v4154, %v4165
      %v4198 = vmul.f32 %v4157, %v4165
      %v4199 = vld [vmem:[%s13] sm:$0x1]
      %v4201 = vlaneseq
      %v4202 = vshrl.u32 %v4201, 7
      %v4203 = vsub.s32 0, %v4202
      %v4204 = vrot.slane %v4199, %v4203
      %v4206 = vadd.f32 %v4167, %v4204
      %v4207 = vadd.f32 %v4168, %v4204
      %v4208 = vadd.f32 %v4169, %v4204
      %v4209 = vadd.f32 %v4170, %v4204
      %v4210 = vadd.f32 %v4171, %v4204
      %v4211 = vadd.f32 %v4172, %v4204
      %v4212 = vadd.f32 %v4173, %v4204
      %v4213 = vadd.f32 %v4174, %v4204
      %v4214 = vadd.f32 %v4175, %v4204
      %v4215 = vadd.f32 %v4176, %v4204
      %v4216 = vadd.f32 %v4177, %v4204
      %v4217 = vadd.f32 %v4178, %v4204
      %v4218 = vadd.f32 %v4179, %v4204
      %v4219 = vadd.f32 %v4180, %v4204
      %v4220 = vadd.f32 %v4181, %v4204
      %v4221 = vadd.f32 %v4182, %v4204
      %v4222 = vadd.f32 %v4183, %v4204
      %v4223 = vadd.f32 %v4184, %v4204
      %v4224 = vadd.f32 %v4185, %v4204
      %v4225 = vadd.f32 %v4186, %v4204
      %v4226 = vadd.f32 %v4187, %v4204
      %v4227 = vadd.f32 %v4188, %v4204
      %v4228 = vadd.f32 %v4189, %v4204
      %v4229 = vadd.f32 %v4190, %v4204
      %v4230 = vadd.f32 %v4191, %v4204
      %v4231 = vadd.f32 %v4192, %v4204
      %v4232 = vadd.f32 %v4193, %v4204
      %v4233 = vadd.f32 %v4194, %v4204
      %v4234 = vadd.f32 %v4195, %v4204
      %v4235 = vadd.f32 %v4196, %v4204
      %v4236 = vadd.f32 %v4197, %v4204
      %v4237 = vadd.f32 %v4198, %v4204
      %v4238 = vmax.f32 %v4206, 0.0
      %v4239 = vmax.f32 %v4207, 0.0
      %v4240 = vmax.f32 %v4208, 0.0
      %v4241 = vmax.f32 %v4209, 0.0
      %v4242 = vmax.f32 %v4210, 0.0
      %v4243 = vmax.f32 %v4211, 0.0
      %v4244 = vmax.f32 %v4212, 0.0
      %v4245 = vmax.f32 %v4213, 0.0
      %v4246 = vmax.f32 %v4214, 0.0
      %v4247 = vmax.f32 %v4215, 0.0
      %v4248 = vmax.f32 %v4216, 0.0
      %v4249 = vmax.f32 %v4217, 0.0
      %v4250 = vmax.f32 %v4218, 0.0
      %v4251 = vmax.f32 %v4219, 0.0
      %v4252 = vmax.f32 %v4220, 0.0
      %v4253 = vmax.f32 %v4221, 0.0
      %v4254 = vmax.f32 %v4222, 0.0
      %v4255 = vmax.f32 %v4223, 0.0
      %v4256 = vmax.f32 %v4224, 0.0
      %v4257 = vmax.f32 %v4225, 0.0
      %v4258 = vmax.f32 %v4226, 0.0
      %v4259 = vmax.f32 %v4227, 0.0
      %v4260 = vmax.f32 %v4228, 0.0
      %v4261 = vmax.f32 %v4229, 0.0
      %v4262 = vmax.f32 %v4230, 0.0
      %v4263 = vmax.f32 %v4231, 0.0
      %v4264 = vmax.f32 %v4232, 0.0
      %v4265 = vmax.f32 %v4233, 0.0
      %v4266 = vmax.f32 %v4234, 0.0
      %v4267 = vmax.f32 %v4235, 0.0
      %v4268 = vmax.f32 %v4236, 0.0
      %v4269 = vmax.f32 %v4237, 0.0
      %v4270 = vpack.c.bf16 %v4239, %v4238
      %v4271 = vpack.c.bf16 %v4241, %v4240
      %v4272 = vpack.c.bf16 %v4243, %v4242
      %v4273 = vpack.c.bf16 %v4245, %v4244
      %v4274 = vpack.c.bf16 %v4247, %v4246
      %v4275 = vpack.c.bf16 %v4249, %v4248
      %v4276 = vpack.c.bf16 %v4251, %v4250
      %v4277 = vpack.c.bf16 %v4253, %v4252
      %v4278 = vpack.c.bf16 %v4255, %v4254
      %v4279 = vpack.c.bf16 %v4257, %v4256
      %v4280 = vpack.c.bf16 %v4259, %v4258
      %v4281 = vpack.c.bf16 %v4261, %v4260
      %v4282 = vpack.c.bf16 %v4263, %v4262
      %v4283 = vpack.c.bf16 %v4265, %v4264
      %v4284 = vpack.c.bf16 %v4267, %v4266
      %v4285 = vpack.c.bf16 %v4269, %v4268
      %v4286 = vld [vmem:[%s14] sm:$0xf]
      %v4287 = vld [vmem:[%s14 + $0x4] sm:$0xf]
      %v4288 = vld [vmem:[%s14 + $0x8] sm:$0xf]
      %v4289 = vld [vmem:[%s14 + $0xc] sm:$0xf]
      %v4290 = vld [vmem:[%s15] sm:$0x1]
      %v4292 = vlaneseq
      %v4293 = vshrl.u32 %v4292, 7
      %v4294 = vsub.s32 0, %v4293
      %v4295 = vrot.slane %v4290, %v4294
      %v4301 = vunpack.c.l.b16 %v4286
      %v4302 = vunpack.c.l.b16 %v4287
      %v4303 = vunpack.c.l.b16 %v4288
      %v4304 = vunpack.c.l.b16 %v4289
      %v4305 = vpack.c.b16 %v4302, %v4301
      %v4306 = vpack.c.b16 %v4304, %v4303
      %v4310 = vsel %vm1511, %v4270, 0
      %v4313 = vsel %vm1511, %v4271, 0
      %v4316 = vsel %vm1511, %v4272, 0
      %v4319 = vsel %vm1511, %v4273, 0
      %v4322 = vsel %vm1511, %v4274, 0
      %v4325 = vsel %vm1511, %v4275, 0
      %v4328 = vsel %vm1511, %v4276, 0
      %v4331 = vsel %vm1511, %v4277, 0
      %v4334 = vsel %vm1511, %v4278, 0
      %v4337 = vsel %vm1511, %v4279, 0
      %v4340 = vsel %vm1511, %v4280, 0
      %v4343 = vsel %vm1511, %v4281, 0
      %v4346 = vsel %vm1511, %v4282, 0
      %v4349 = vsel %vm1511, %v4283, 0
      %v4352 = vsel %vm1511, %v4284, 0
      %v4355 = vsel %vm1511, %v4285, 0
      %4357 = vmatprep.subr.bf16.mxu0 0
      %4358 = vmatpush1.bf16.msra.mxu0 0
      %4359 = vmatprep.subr.bf16.mxu0 0
      %4360 = vmatpush1.bf16.msra.mxu0 0
      %4361 = vmatprep.subr.bf16.mxu0 0
      %4362 = vmatpush1.bf16.msra.mxu0 0
      %4363 = vmatprep.subr.bf16.mxu0 0
      %4364 = vmatpush1.bf16.msra.mxu0 0
      %4365 = vmatprep.subr.bf16.mxu0 0
      %4366 = vmatpush1.bf16.msra.mxu0 0
      %4367 = vmatprep.subr.bf16.mxu0 0
      %4368 = vmatpush1.bf16.msra.mxu0 0
      %4369 = vmatprep.subr.bf16.mxu0 0
      %4370 = vmatpush1.bf16.msra.mxu0 %v4306
      %4371 = vmatprep.subr.bf16.mxu0 0
      %4372 = vmatpush1.bf16.msra.mxu0 %v4305
      %4373 = vmatprep.subr.bf16.mxu0 0
      %4374 = vmatpush2.bf16.msra.mxu0 0
      %4375 = vmatprep.subr.bf16.mxu0 0
      %4376 = vmatpush2.bf16.msra.mxu0 0
      %4377 = vmatprep.subr.bf16.mxu0 0
      %4378 = vmatpush2.bf16.msra.mxu0 0
      %4379 = vmatprep.subr.bf16.mxu0 0
      %4380 = vmatpush2.bf16.msra.mxu0 0
      %4381 = vmatprep.subr.bf16.mxu0 0
      %4382 = vmatpush2.bf16.msra.mxu0 0
      %4383 = vmatprep.subr.bf16.mxu0 0
      %4384 = vmatpush2.bf16.msra.mxu0 0
      %4385 = vmatprep.subr.bf16.mxu0 0
      %4386 = vmatpush2.bf16.msra.mxu0 0
      %4387 = vmatprep.subr.bf16.mxu0 0
      %4388 = vmatpush2.bf16.msra.mxu0 0
      %4389 = vmatprep.mubr.bf16.mxu0 0
      %4390 = vmatmul.mubr.bf16.gmra.mxu0 %v4310
      %v4391 = vpop.f32.mrf.mxu0
      %v4392 = vadd.f32 %v4295, %v4391
      %v4393 = vpop.f32.mrf.mxu0
      %v4394 = vpop.f32.mrf.mxu0
      %v4395 = vadd.f32 %v4295, %v4394
      %v4396 = vpop.f32.mrf.mxu0
      %4397 = vmatprep.mubr.bf16.mxu0 0
      %4398 = vmatmul.mubr.bf16.gmra.mxu0 %v4313
      %v4399 = vpop.f32.mrf.mxu0
      %v4400 = vadd.f32 %v4295, %v4399
      %v4401 = vpop.f32.mrf.mxu0
      %v4402 = vpop.f32.mrf.mxu0
      %v4403 = vadd.f32 %v4295, %v4402
      %v4404 = vpop.f32.mrf.mxu0
      %4405 = vmatprep.mubr.bf16.mxu0 0
      %4406 = vmatmul.mubr.bf16.gmra.mxu0 %v4316
      %v4407 = vpop.f32.mrf.mxu0
      %v4408 = vadd.f32 %v4295, %v4407
      %v4409 = vpop.f32.mrf.mxu0
      %v4410 = vpop.f32.mrf.mxu0
      %v4411 = vadd.f32 %v4295, %v4410
      %v4412 = vpop.f32.mrf.mxu0
      %4413 = vmatprep.mubr.bf16.mxu0 0
      %4414 = vmatmul.mubr.bf16.gmra.mxu0 %v4319
      %v4415 = vpop.f32.mrf.mxu0
      %v4416 = vadd.f32 %v4295, %v4415
      %v4417 = vpop.f32.mrf.mxu0
      %v4418 = vpop.f32.mrf.mxu0
      %v4419 = vadd.f32 %v4295, %v4418
      %v4420 = vpop.f32.mrf.mxu0
      %4421 = vmatprep.mubr.bf16.mxu0 0
      %4422 = vmatmul.mubr.bf16.gmra.mxu0 %v4322
      %v4423 = vpop.f32.mrf.mxu0
      %v4424 = vadd.f32 %v4295, %v4423
      %v4425 = vpop.f32.mrf.mxu0
      %v4426 = vpop.f32.mrf.mxu0
      %v4427 = vadd.f32 %v4295, %v4426
      %v4428 = vpop.f32.mrf.mxu0
      %4429 = vmatprep.mubr.bf16.mxu0 0
      %4430 = vmatmul.mubr.bf16.gmra.mxu0 %v4325
      %v4431 = vpop.f32.mrf.mxu0
      %v4432 = vadd.f32 %v4295, %v4431
      %v4433 = vpop.f32.mrf.mxu0
      %v4434 = vpop.f32.mrf.mxu0
      %v4435 = vadd.f32 %v4295, %v4434
      %v4436 = vpop.f32.mrf.mxu0
      %4437 = vmatprep.mubr.bf16.mxu0 0
      %4438 = vmatmul.mubr.bf16.gmra.mxu0 %v4328
      %v4439 = vpop.f32.mrf.mxu0
      %v4440 = vadd.f32 %v4295, %v4439
      %v4441 = vpop.f32.mrf.mxu0
      %v4442 = vpop.f32.mrf.mxu0
      %v4443 = vadd.f32 %v4295, %v4442
      %v4444 = vpop.f32.mrf.mxu0
      %4445 = vmatprep.mubr.bf16.mxu0 0
      %4446 = vmatmul.mubr.bf16.gmra.mxu0 %v4331
      %v4447 = vpop.f32.mrf.mxu0
      %v4448 = vadd.f32 %v4295, %v4447
      %v4449 = vpop.f32.mrf.mxu0
      %v4450 = vpop.f32.mrf.mxu0
      %v4451 = vadd.f32 %v4295, %v4450
      %v4452 = vpop.f32.mrf.mxu0
      %4453 = vmatprep.mubr.bf16.mxu0 0
      %4454 = vmatmul.mubr.bf16.gmra.mxu0 %v4334
      %v4455 = vpop.f32.mrf.mxu0
      %v4456 = vadd.f32 %v4295, %v4455
      %v4457 = vpop.f32.mrf.mxu0
      %v4458 = vpop.f32.mrf.mxu0
      %v4459 = vadd.f32 %v4295, %v4458
      %v4460 = vpop.f32.mrf.mxu0
      %4461 = vmatprep.mubr.bf16.mxu0 0
      %4462 = vmatmul.mubr.bf16.gmra.mxu0 %v4337
      %v4463 = vpop.f32.mrf.mxu0
      %v4464 = vadd.f32 %v4295, %v4463
      %v4465 = vpop.f32.mrf.mxu0
      %v4466 = vpop.f32.mrf.mxu0
      %v4467 = vadd.f32 %v4295, %v4466
      %v4468 = vpop.f32.mrf.mxu0
      %4469 = vmatprep.mubr.bf16.mxu0 0
      %4470 = vmatmul.mubr.bf16.gmra.mxu0 %v4340
      %v4471 = vpop.f32.mrf.mxu0
      %v4472 = vadd.f32 %v4295, %v4471
      %v4473 = vpop.f32.mrf.mxu0
      %v4474 = vpop.f32.mrf.mxu0
      %v4475 = vadd.f32 %v4295, %v4474
      %v4476 = vpop.f32.mrf.mxu0
      %4477 = vmatprep.mubr.bf16.mxu0 0
      %4478 = vmatmul.mubr.bf16.gmra.mxu0 %v4343
      %v4479 = vpop.f32.mrf.mxu0
      %v4480 = vadd.f32 %v4295, %v4479
      %v4481 = vpop.f32.mrf.mxu0
      %v4482 = vpop.f32.mrf.mxu0
      %v4483 = vadd.f32 %v4295, %v4482
      %v4484 = vpop.f32.mrf.mxu0
      %4485 = vmatprep.mubr.bf16.mxu0 0
      %4486 = vmatmul.mubr.bf16.gmra.mxu0 %v4346
      %v4487 = vpop.f32.mrf.mxu0
      %v4488 = vadd.f32 %v4295, %v4487
      %v4489 = vpop.f32.mrf.mxu0
      %v4490 = vpop.f32.mrf.mxu0
      %v4491 = vadd.f32 %v4295, %v4490
      %v4492 = vpop.f32.mrf.mxu0
      %4493 = vmatprep.mubr.bf16.mxu0 0
      %4494 = vmatmul.mubr.bf16.gmra.mxu0 %v4349
      %v4495 = vpop.f32.mrf.mxu0
      %v4496 = vadd.f32 %v4295, %v4495
      %v4497 = vpop.f32.mrf.mxu0
      %v4498 = vpop.f32.mrf.mxu0
      %v4499 = vadd.f32 %v4295, %v4498
      %v4500 = vpop.f32.mrf.mxu0
      %4501 = vmatprep.mubr.bf16.mxu0 0
      %4502 = vmatmul.mubr.bf16.gmra.mxu0 %v4352
      %v4503 = vpop.f32.mrf.mxu0
      %v4504 = vadd.f32 %v4295, %v4503
      %v4505 = vpop.f32.mrf.mxu0
      %v4506 = vpop.f32.mrf.mxu0
      %v4507 = vadd.f32 %v4295, %v4506
      %v4508 = vpop.f32.mrf.mxu0
      %4509 = vmatprep.mubr.bf16.mxu0 0
      %4510 = vmatmul.mubr.bf16.gmra.mxu0 %v4355
      %v4511 = vpop.f32.mrf.mxu0
      %v4512 = vadd.f32 %v4295, %v4511
      %v4513 = vpop.f32.mrf.mxu0
      %v4514 = vpop.f32.mrf.mxu0
      %v4515 = vadd.f32 %v4295, %v4514
      %v4516 = vpop.f32.mrf.mxu0
      %4517 = vdwg.mxu0
      %4518 = vst [vmem:[%s556] sm:$0xff] %v4392
      %4519 = vst [vmem:[%s556 + $0x8] sm:$0xff] %v4395
      %4520 = vst [vmem:[%s556 + $0x10] sm:$0xff] %v4400
      %4521 = vst [vmem:[%s556 + $0x18] sm:$0xff] %v4403
      %4522 = vst [vmem:[%s556 + $0x20] sm:$0xff] %v4408
      %4523 = vst [vmem:[%s556 + $0x28] sm:$0xff] %v4411
      %4524 = vst [vmem:[%s556 + $0x30] sm:$0xff] %v4416
      %4525 = vst [vmem:[%s556 + $0x38] sm:$0xff] %v4419
      %4526 = vst [vmem:[%s556 + $0x40] sm:$0xff] %v4424
      %4527 = vst [vmem:[%s556 + $0x48] sm:$0xff] %v4427
      %4528 = vst [vmem:[%s556 + $0x50] sm:$0xff] %v4432
      %4529 = vst [vmem:[%s556 + $0x58] sm:$0xff] %v4435
      %4530 = vst [vmem:[%s556 + $0x60] sm:$0xff] %v4440
      %4531 = vst [vmem:[%s556 + $0x68] sm:$0xff] %v4443
      %4532 = vst [vmem:[%s556 + $0x70] sm:$0xff] %v4448
      %4533 = vst [vmem:[%s556 + $0x78] sm:$0xff] %v4451
      %4534 = vst [vmem:[%s556 + $0x80] sm:$0xff] %v4456
      %4535 = vst [vmem:[%s556 + $0x88] sm:$0xff] %v4459
      %4536 = vst [vmem:[%s556 + $0x90] sm:$0xff] %v4464
      %4537 = vst [vmem:[%s556 + $0x98] sm:$0xff] %v4467
      %4538 = vst [vmem:[%s556 + $0xa0] sm:$0xff] %v4472
      %4539 = vst [vmem:[%s556 + $0xa8] sm:$0xff] %v4475
      %4540 = vst [vmem:[%s556 + $0xb0] sm:$0xff] %v4480
      %4541 = vst [vmem:[%s556 + $0xb8] sm:$0xff] %v4483
      %4542 = vst [vmem:[%s556 + $0xc0] sm:$0xff] %v4488
      %4543 = vst [vmem:[%s556 + $0xc8] sm:$0xff] %v4491
      %4544 = vst [vmem:[%s556 + $0xd0] sm:$0xff] %v4496
      %4545 = vst [vmem:[%s556 + $0xd8] sm:$0xff] %v4499
      %4546 = vst [vmem:[%s556 + $0xe0] sm:$0xff] %v4504
      %4547 = vst [vmem:[%s556 + $0xe8] sm:$0xff] %v4507
      %4548 = vst [vmem:[%s556 + $0xf0] sm:$0xff] %v4512
      %4549 = vst [vmem:[%s556 + $0xf8] sm:$0xff] %v4515
      %p4550 = scmp.lt.s32.totalorder %s29, 1
      %s4551 = scalar_select %p4550, %s29, 1
      %s4552 = smul.addr %s4551, 32
      %s4553 = smul.addr %s4552, 8
      %s4554 = scalar_lea.vmem %s16, %s4553
      %p4555 = scmp.lt.s32.totalorder %s29, 1
      %s4556 = scalar_select %p4555, %s29, 1
      %s4557 = smul.addr %s4556, 32
      %s4558 = smul.addr %s4557, 8
      %s4559 = scalar_lea.vmem %s17, %s4558
      // Predicated region
      $region85: #{pixel_classification_forward.1} parent=83 // pred_check
        %p4560 = pneg %p388
      $region86: #{pixel_classification_forward.1} parent=83 // pred_check_branch
        %4562 = sbr.rel (%p4560) target = $region88
      $region87: #{pixel_classification_forward.1} parent=83 // pred_region
        _
      $region88: #{pixel_classification_forward.1} parent=83 // pred_fallthru
        _
      // Predicated region
      $region89: #{pixel_classification_forward.1} parent=83 // pred_check
        %p4563 = pneg %p414
      $region90: #{pixel_classification_forward.1} parent=83 // pred_check_branch
        %4565 = sbr.rel (%p4563) target = $region92
      $region91: #{pixel_classification_forward.1} parent=83 // pred_region
        _
      $region92: #{pixel_classification_forward.1} parent=83 // pred_fallthru
        _
    $region84: #{pixel_classification_forward.1} parent=5 // pred_fallthru
      _
    %p4566 = scmp.le.s32.totalorder 2, %s24
    // Predicated region
    $region93: #{pixel_classification_forward.1} parent=5 // pred_check
      %p4567 = pneg %p4566
    $region94: #{pixel_classification_forward.1} parent=5 // pred_check_branch
      %4569 = sbr.rel (%p4567) target = $region96
    $region95: #{pixel_classification_forward.1} parent=5 // pred_region
      %s4570 = ssub.s32 %s24, 2
      // Predicated region
      $region97: #{pixel_classification_forward.1} parent=95 // pred_check
        %p4571 = pneg %p394
      $region98: #{pixel_classification_forward.1} parent=95 // pred_check_branch
        %4573 = sbr.rel (%p4571) target = $region100
      $region99: #{pixel_classification_forward.1} parent=95 // pred_region
        %p4574 = scmp.lt.s32.totalorder %s30, 1
        %s4575 = scalar_select %p4574, %s30, 1
        %s4576 = smul.addr %s4575, 32
        %s4577 = smul.addr %s4576, 8
        %s4578 = scalar_lea.vmem %s16, %s4577
      $region100: #{pixel_classification_forward.1} parent=95 // pred_fallthru
        _
      // Predicated region
      $region101: #{pixel_classification_forward.1} parent=95 // pred_check
        %p4579 = pneg %p420
      $region102: #{pixel_classification_forward.1} parent=95 // pred_check_branch
        %4581 = sbr.rel (%p4579) target = $region104
      $region103: #{pixel_classification_forward.1} parent=95 // pred_region
        %p4582 = scmp.lt.s32.totalorder %s30, 1
        %s4583 = scalar_select %p4582, %s30, 1
        %s4584 = smul.addr %s4583, 32
        %s4585 = smul.addr %s4584, 8
        %s4586 = scalar_lea.vmem %s17, %s4585
      $region104: #{pixel_classification_forward.1} parent=95 // pred_fallthru
        _
    $region96: #{pixel_classification_forward.1} parent=5 // pred_fallthru
      _
  $region6: #{pixel_classification_forward.1} parent=0 // loop_footer
    %s28 = sadd.s32 1, %s24
  $region7: #{pixel_classification_forward.1} parent=0 // loop_footer_branch
    %23 = sbr.rel target = $region3
  $region8: #{pixel_classification_forward.1} parent=0 // loop_exit
    _

</llo_original>
